<compile_context>
chip_gen: v5e
topology: v5e:2x2
jax: 0.10.0
libtpu: 0.0.40
codegen_flags: <defaults>
</compile_context>

<pallas_src>
import functools
import math

import jax
import jax.numpy as jnp
from jax.experimental import pallas as pl
from jax.experimental.pallas import tpu as pltpu


# ----------------------------- in-kernel helpers -----------------------------

def _multi_head_attention(x, kv, wq, bq, wk, bk, wv, bv, wo, bo, mask,
                          num_heads, scale):
    """x:(Tq,D) f32, kv:(Tk,D) f32; w*: bf16 (D,D) contraction-ready; b*: f32 (1,D)."""
    bf = jnp.bfloat16
    # Full-width projections (MXU-friendly K=N=D), f32 accumulation.
    q = jnp.dot(x.astype(bf), wq, preferred_element_type=jnp.float32) + bq
    k = jnp.dot(kv.astype(bf), wk, preferred_element_type=jnp.float32) + bk
    v = jnp.dot(kv.astype(bf), wv, preferred_element_type=jnp.float32) + bv

    D = q.shape[-1]
    dh = D // num_heads
    ctx_parts = []
    for h in range(num_heads):                      # static loop; only the small
        qh = q[:, h * dh:(h + 1) * dh]              # score matmuls are per-head
        kh = k[:, h * dh:(h + 1) * dh]
        vh = v[:, h * dh:(h + 1) * dh]
        # s = qh @ kh^T  (contract last dims; f32 element-wise math, v5e-safe)
        s = jax.lax.dot_general(qh, kh, (((1,), (1,)), ((), ())),
                                preferred_element_type=jnp.float32) * scale
        if mask is not None:
            s = s + mask
        s = s - jnp.max(s, axis=-1, keepdims=True)
        p = jnp.exp(s)
        denom = jnp.sum(p, axis=-1, keepdims=True)
        p = p * pl.reciprocal(denom, approx=True)   # EUP slot, frees the VPU divide
        ctx_parts.append(jnp.dot(p, vh, preferred_element_type=jnp.float32))
    ctx = jnp.concatenate(ctx_parts, axis=-1)       # (Tq, D) concatenated heads
    # Single full-width output projection.
    return jnp.dot(ctx.astype(bf), wo, preferred_element_type=jnp.float32) + bo


def _add_layernorm(x, y, g, b, eps):
    z = x + y
    mu = jnp.mean(z, axis=-1, keepdims=True)
    var = jnp.mean((z - mu) ** 2, axis=-1, keepdims=True)
    return (z - mu) * jax.lax.rsqrt(var + eps) * g + b


# ----------------------------- fused decoder-layer kernel -----------------------------

def _decoder_layer_kernel(x_ref, mem_ref, *rest, num_heads, scale, eps,
                          has_tgt_mask, has_mem_mask):
    idx = 0
    tmask_ref = None
    mmask_ref = None
    if has_tgt_mask:
        tmask_ref = rest[idx]; idx += 1
    if has_mem_mask:
        mmask_ref = rest[idx]; idx += 1
    (sa_wq, sa_bq, sa_wk, sa_bk, sa_wv, sa_bv, sa_wo, sa_bo,
     ln1_g, ln1_b,
     ca_wq, ca_bq, ca_wk, ca_bk, ca_wv, ca_bv, ca_wo, ca_bo,
     ln2_g, ln2_b,
     w1, b1, w2, b2,
     ln3_g, ln3_b,
     o_ref) = rest[idx:]

    bf = jnp.bfloat16
    x = x_ref[0].astype(jnp.float32)          # (Tq, D)
    mem = mem_ref[0].astype(jnp.float32)      # (Tk, D)
    tmask = tmask_ref[...] if has_tgt_mask else None
    mmask = mmask_ref[...] if has_mem_mask else None

    # --- self-attention + add & norm1 ---
    sa = _multi_head_attention(
        x, x,
        sa_wq[...], sa_bq[...], sa_wk[...], sa_bk[...],
        sa_wv[...], sa_bv[...], sa_wo[...], sa_bo[...],
        tmask, num_heads, scale)
    x = _add_layernorm(x, sa, ln1_g[...], ln1_b[...], eps)

    # --- cross-attention + add & norm2 ---
    ca = _multi_head_attention(
        x, mem,
        ca_wq[...], ca_bq[...], ca_wk[...], ca_bk[...],
        ca_wv[...], ca_bv[...], ca_wo[...], ca_bo[...],
        mmask, num_heads, scale)
    x = _add_layernorm(x, ca, ln2_g[...], ln2_b[...], eps)

    # --- feed-forward (ReLU) + add & norm3 ---
    h = jnp.dot(x.astype(bf), w1[...], preferred_element_type=jnp.float32) + b1[...]
    h = jnp.maximum(h, 0.0)
    ff = jnp.dot(h.astype(bf), w2[...], preferred_element_type=jnp.float32) + b2[...]
    x = _add_layernorm(x, ff, ln3_g[...], ln3_b[...], eps)

    o_ref[0] = x.astype(o_ref.dtype)


def _linear_kernel(x_ref, w_ref, b_ref, o_ref):
    """y = x @ W + b, W pre-transposed (D, V_tile), bf16 MXU inputs, f32 accumulate."""
    x = x_ref[0].astype(jnp.bfloat16)
    y = jnp.dot(x, w_ref[...], preferred_element_type=jnp.float32) + b_ref[...]
    o_ref[0] = y.astype(o_ref.dtype)


# ----------------------------- BlockSpec helpers -----------------------------

def _bt_spec(shape):
    """Block over the leading batch dim, rest full."""
    nd = len(shape)
    return pl.BlockSpec((1,) + tuple(shape[1:]),
                        lambda b, *_: (b,) + (0,) * (nd - 1))


def _full_spec(shape):
    """Whole array resident (weights / masks), independent of grid position."""
    nd = len(shape)
    return pl.BlockSpec(tuple(shape), lambda *_: (0,) * nd)


_VMEM_LIMIT = 64 * 1024 * 1024  # explicit cap (safe on v5e/v6e/v7x)


# ----------------------------- pallas_call wrappers -----------------------------

def decoder_layer(x, memory, lp, tgt_mask, memory_mask, num_heads, eps=1e-5):
    B, Tq, D = x.shape
    Tk = memory.shape[1]
    F = lp["ffn"]["w1"].shape[1]
    scale = 1.0 / math.sqrt(D // num_heads)
    has_tm = tgt_mask is not None
    has_mm = memory_mask is not None

    sa, ca, fp = lp["self_attn"], lp["cross_attn"], lp["ffn"]
    weights = [
        sa["wq"], sa["bq"], sa["wk"], sa["bk"], sa["wv"], sa["bv"], sa["wo"], sa["bo"],
        lp["ln1"]["g"], lp["ln1"]["b"],
        ca["wq"], ca["bq"], ca["wk"], ca["bk"], ca["wv"], ca["bv"], ca["wo"], ca["bo"],
        lp["ln2"]["g"], lp["ln2"]["b"],
        fp["w1"], fp["b1"], fp["w2"], fp["b2"],
        lp["ln3"]["g"], lp["ln3"]["b"],
    ]

    args = [x, memory]
    in_specs = [_bt_spec(x.shape), _bt_spec(memory.shape)]
    if has_tm:
        args.append(tgt_mask)
        in_specs.append(_full_spec(tgt_mask.shape))
    if has_mm:
        args.append(memory_mask)
        in_specs.append(_full_spec(memory_mask.shape))
    args += weights
    in_specs += [_full_spec(w.shape) for w in weights]

    # Advisory cost estimate (matmul flops; 2 flops per MAC already folded in).
    per_b = (8 * Tq * D * D + 4 * Tq * Tq * D            # self-attn proj + scores/pv
             + 4 * Tq * D * D + 4 * Tk * D * D            # cross-attn projections
             + 4 * Tq * Tk * D                            # cross scores/pv
             + 4 * Tq * D * F)                            # FFN
    flops = B * per_b
    trans = B * num_heads * (Tq * Tq + Tq * Tk) + 3 * B * Tq
    bytes_accessed = (sum(int(a.size) * a.dtype.itemsize for a in args)
                      + int(x.size) * 4)

    kernel = functools.partial(
        _decoder_layer_kernel, num_heads=num_heads, scale=scale, eps=eps,
        has_tgt_mask=has_tm, has_mem_mask=has_mm)

    return pl.pallas_call(
        kernel,
        grid=(B,),
        in_specs=in_specs,
        out_specs=_bt_spec((B, Tq, D)),
        out_shape=jax.ShapeDtypeStruct((B, Tq, D), jnp.float32),
        compiler_params=pltpu.CompilerParams(
            dimension_semantics=("parallel",),
            vmem_limit_bytes=_VMEM_LIMIT),
        cost_estimate=pl.CostEstimate(flops=int(flops),
                                      transcendentals=int(trans),
                                      bytes_accessed=int(bytes_accessed)),
    )(*args)


def linear(x, p):
    """fc_out: tile the vocab dim when 128-aligned (lane-dense stores, v7x VMEM)."""
    B, T, D = x.shape
    V = p["w"].shape[1]
    if V % 128 == 0:
        vt = min(V, 2048)
        while V % vt != 0:
            vt -= 128
    else:
        vt = V  # toy vocab: single full-width tile (equals full array dim)
    grid = (B, V // vt)
    return pl.pallas_call(
        _linear_kernel,
        grid=grid,
        in_specs=[pl.BlockSpec((1, T, D), lambda b, j: (b, 0, 0)),
                  pl.BlockSpec((D, vt), lambda b, j: (0, j)),
                  pl.BlockSpec((1, vt), lambda b, j: (0, j))],
        out_specs=pl.BlockSpec((1, T, vt), lambda b, j: (b, 0, j)),
        out_shape=jax.ShapeDtypeStruct((B, T, V), jnp.float32),
        compiler_params=pltpu.CompilerParams(
            dimension_semantics=("parallel", "parallel"),
            vmem_limit_bytes=_VMEM_LIMIT),
    )(x, p["w"], p["b"])


# ----------------------------- Parameter init (synthetic, deterministic) -----------------------------

def _attn_params(key, D, std=0.05):
    k1, k2, k3, k4 = jax.random.split(key, 4)
    in_w = jax.random.normal(k1, (3 * D, D), jnp.float32) * std   # PyTorch in_proj_weight
    in_b = jax.random.normal(k2, (3 * D,), jnp.float32) * std     # PyTorch in_proj_bias
    out_w = jax.random.normal(k3, (D, D), jnp.float32) * std      # out_proj.weight
    out_b = jax.random.normal(k4, (D,), jnp.float32) * std        # out_proj.bias
    bf = jnp.bfloat16
    return dict(
        # pre-transposed, contraction-ready (K, N); bf16 for the MXU
        wq=in_w[:D].T.astype(bf), wk=in_w[D:2 * D].T.astype(bf), wv=in_w[2 * D:].T.astype(bf),
        bq=in_b[:D].reshape(1, D), bk=in_b[D:2 * D].reshape(1, D), bv=in_b[2 * D:].reshape(1, D),
        wo=out_w.T.astype(bf), bo=out_b.reshape(1, D),
    )


def init_params(key, d_model, num_heads, num_layers, dim_ff, vocab, std=0.05):
    del num_heads  # head split happens in-kernel on full-width projections
    bf = jnp.bfloat16
    layers = []
    keys = jax.random.split(key, num_layers + 1)
    for li in range(num_layers):
        ks = jax.random.split(keys[li], 8)
        layers.append(dict(
            self_attn=_attn_params(ks[0], d_model, std),
            cross_attn=_attn_params(ks[1], d_model, std),
            ffn=dict(
                w1=(jax.random.normal(ks[2], (dim_ff, d_model), jnp.float32) * std).T.astype(bf),
                b1=jax.random.normal(ks[3], (1, dim_ff), jnp.float32) * std,
                w2=(jax.random.normal(ks[4], (d_model, dim_ff), jnp.float32) * std).T.astype(bf),
                b2=jax.random.normal(ks[5], (1, d_model), jnp.float32) * std,
            ),
            ln1=dict(g=jnp.ones((1, d_model), jnp.float32), b=jnp.zeros((1, d_model), jnp.float32)),
            ln2=dict(g=jnp.ones((1, d_model), jnp.float32), b=jnp.zeros((1, d_model), jnp.float32)),
            ln3=dict(g=jnp.ones((1, d_model), jnp.float32), b=jnp.zeros((1, d_model), jnp.float32)),
        ))
    kf1, kf2 = jax.random.split(keys[-1], 2)
    fc_out = dict(
        w=(jax.random.normal(kf1, (vocab, d_model), jnp.float32) * std).T.astype(bf),  # (D, V)
        b=jax.random.normal(kf2, (1, vocab), jnp.float32) * std,
    )
    return dict(layers=layers, fc_out=fc_out)


# ----------------------------- Forward pass -----------------------------

def transformer_decoder_with_context(tgt_bert_embeds, memory, params,
                                     tgt_mask, memory_mask, num_heads):
    """Mirrors nn.TransformerDecoder (post-norm, batch_first) + final Linear."""
    x = tgt_bert_embeds
    for lp in params["layers"]:
        x = decoder_layer(x, memory, lp, tgt_mask, memory_mask, num_heads)
    return linear(x, params["fc_out"])


# ----------------------------- Main -----------------------------

if __name__ == "__main__":
    # Small shapes consistent with the module's forward: [B, T, D]
    B, T_DEC, T_ENC = 2, 8, 16
    D_MODEL, NUM_HEADS, NUM_LAYERS, DIM_FF, VOCAB = 32, 4, 3, 64, 100

    key = jax.random.PRNGKey(0)
    k_params, k_tgt, k_mem = jax.random.split(key, 3)

    params = init_params(k_params, D_MODEL, NUM_HEADS, NUM_LAYERS, DIM_FF, VOCAB)
    tgt_bert_embeds = jax.random.normal(k_tgt, (B, T_DEC, D_MODEL), jnp.float32)
    memory = jax.random.normal(k_mem, (B, T_ENC, D_MODEL), jnp.float32)

    # Causal additive float tgt_mask (torch.generate_square_subsequent_mask semantics);
    # memory_mask=None exercises the mask-skip path in cross-attention.
    rows = jnp.arange(T_DEC)[:, None]
    cols = jnp.arange(T_DEC)[None, :]
    tgt_mask = jnp.where(rows >= cols, 0.0, -1e9).astype(jnp.float32)
    memory_mask = None

    out = transformer_decoder_with_context(
        tgt_bert_embeds, memory, params, tgt_mask, memory_mask, NUM_HEADS)
    out = jax.block_until_ready(out)

    assert out.shape == (B, T_DEC, VOCAB), out.shape
    assert bool(jnp.all(jnp.isfinite(out)))
    print("KERNEL_OK")
</pallas_src>

<mosaic_0001>
module attributes {stable_mosaic.version = 11 : i64} {
  func.func @_decoder_layer_kernel(%arg0: i32, %arg1: memref<1x8x32xf32, #tpu.memory_space<vmem>>, %arg2: memref<1x16x32xf32, #tpu.memory_space<vmem>>, %arg3: memref<8x8xf32, #tpu.memory_space<vmem>>, %arg4: memref<32x32xbf16, #tpu.memory_space<vmem>>, %arg5: memref<1x32xf32, #tpu.memory_space<vmem>>, %arg6: memref<32x32xbf16, #tpu.memory_space<vmem>>, %arg7: memref<1x32xf32, #tpu.memory_space<vmem>>, %arg8: memref<32x32xbf16, #tpu.memory_space<vmem>>, %arg9: memref<1x32xf32, #tpu.memory_space<vmem>>, %arg10: memref<32x32xbf16, #tpu.memory_space<vmem>>, %arg11: memref<1x32xf32, #tpu.memory_space<vmem>>, %arg12: memref<1x32xf32, #tpu.memory_space<vmem>>, %arg13: memref<1x32xf32, #tpu.memory_space<vmem>>, %arg14: memref<32x32xbf16, #tpu.memory_space<vmem>>, %arg15: memref<1x32xf32, #tpu.memory_space<vmem>>, %arg16: memref<32x32xbf16, #tpu.memory_space<vmem>>, %arg17: memref<1x32xf32, #tpu.memory_space<vmem>>, %arg18: memref<32x32xbf16, #tpu.memory_space<vmem>>, %arg19: memref<1x32xf32, #tpu.memory_space<vmem>>, %arg20: memref<32x32xbf16, #tpu.memory_space<vmem>>, %arg21: memref<1x32xf32, #tpu.memory_space<vmem>>, %arg22: memref<1x32xf32, #tpu.memory_space<vmem>>, %arg23: memref<1x32xf32, #tpu.memory_space<vmem>>, %arg24: memref<32x64xbf16, #tpu.memory_space<vmem>>, %arg25: memref<1x64xf32, #tpu.memory_space<vmem>>, %arg26: memref<64x32xbf16, #tpu.memory_space<vmem>>, %arg27: memref<1x32xf32, #tpu.memory_space<vmem>>, %arg28: memref<1x32xf32, #tpu.memory_space<vmem>>, %arg29: memref<1x32xf32, #tpu.memory_space<vmem>>, %arg30: memref<1x8x32xf32, #tpu.memory_space<vmem>>) attributes {dimension_semantics = [#tpu.dimension_semantics<parallel>], iteration_bounds = array<i64: 2>, scalar_prefetch = 0 : i64, scratch_operands = 0 : i64, tpu.core_type = #tpu.core_type<tc>, window_params = [{transform_indices = @transform_0, window_bounds = array<i64: 1, 8, 32>}, {transform_indices = @transform_1, window_bounds = array<i64: 1, 16, 32>}, {pipeline_mode = #tpu.pipeline_mode<synchronous>, transform_indices = @transform_2, window_bounds = array<i64: 8, 8>}, {pipeline_mode = #tpu.pipeline_mode<synchronous>, transform_indices = @transform_3, window_bounds = array<i64: 32, 32>}, {pipeline_mode = #tpu.pipeline_mode<synchronous>, transform_indices = @transform_4, window_bounds = array<i64: 1, 32>}, {pipeline_mode = #tpu.pipeline_mode<synchronous>, transform_indices = @transform_5, window_bounds = array<i64: 32, 32>}, {pipeline_mode = #tpu.pipeline_mode<synchronous>, transform_indices = @transform_6, window_bounds = array<i64: 1, 32>}, {pipeline_mode = #tpu.pipeline_mode<synchronous>, transform_indices = @transform_7, window_bounds = array<i64: 32, 32>}, {pipeline_mode = #tpu.pipeline_mode<synchronous>, transform_indices = @transform_8, window_bounds = array<i64: 1, 32>}, {pipeline_mode = #tpu.pipeline_mode<synchronous>, transform_indices = @transform_9, window_bounds = array<i64: 32, 32>}, {pipeline_mode = #tpu.pipeline_mode<synchronous>, transform_indices = @transform_10, window_bounds = array<i64: 1, 32>}, {pipeline_mode = #tpu.pipeline_mode<synchronous>, transform_indices = @transform_11, window_bounds = array<i64: 1, 32>}, {pipeline_mode = #tpu.pipeline_mode<synchronous>, transform_indices = @transform_12, window_bounds = array<i64: 1, 32>}, {pipeline_mode = #tpu.pipeline_mode<synchronous>, transform_indices = @transform_13, window_bounds = array<i64: 32, 32>}, {pipeline_mode = #tpu.pipeline_mode<synchronous>, transform_indices = @transform_14, window_bounds = array<i64: 1, 32>}, {pipeline_mode = #tpu.pipeline_mode<synchronous>, transform_indices = @transform_15, window_bounds = array<i64: 32, 32>}, {pipeline_mode = #tpu.pipeline_mode<synchronous>, transform_indices = @transform_16, window_bounds = array<i64: 1, 32>}, {pipeline_mode = #tpu.pipeline_mode<synchronous>, transform_indices = @transform_17, window_bounds = array<i64: 32, 32>}, {pipeline_mode = #tpu.pipeline_mode<synchronous>, transform_indices = @transform_18, window_bounds = array<i64: 1, 32>}, {pipeline_mode = #tpu.pipeline_mode<synchronous>, transform_indices = @transform_19, window_bounds = array<i64: 32, 32>}, {pipeline_mode = #tpu.pipeline_mode<synchronous>, transform_indices = @transform_20, window_bounds = array<i64: 1, 32>}, {pipeline_mode = #tpu.pipeline_mode<synchronous>, transform_indices = @transform_21, window_bounds = array<i64: 1, 32>}, {pipeline_mode = #tpu.pipeline_mode<synchronous>, transform_indices = @transform_22, window_bounds = array<i64: 1, 32>}, {pipeline_mode = #tpu.pipeline_mode<synchronous>, transform_indices = @transform_23, window_bounds = array<i64: 32, 64>}, {pipeline_mode = #tpu.pipeline_mode<synchronous>, transform_indices = @transform_24, window_bounds = array<i64: 1, 64>}, {pipeline_mode = #tpu.pipeline_mode<synchronous>, transform_indices = @transform_25, window_bounds = array<i64: 64, 32>}, {pipeline_mode = #tpu.pipeline_mode<synchronous>, transform_indices = @transform_26, window_bounds = array<i64: 1, 32>}, {pipeline_mode = #tpu.pipeline_mode<synchronous>, transform_indices = @transform_27, window_bounds = array<i64: 1, 32>}, {pipeline_mode = #tpu.pipeline_mode<synchronous>, transform_indices = @transform_28, window_bounds = array<i64: 1, 32>}, {transform_indices = @transform_29, window_bounds = array<i64: 1, 8, 32>}]} {
    %c0 = arith.constant 0 : index
    %c0_0 = arith.constant 0 : index
    %c0_1 = arith.constant 0 : index
    %0 = vector.load %arg1[%c0, %c0_0, %c0_1] : memref<1x8x32xf32, #tpu.memory_space<vmem>>, vector<1x8x32xf32>
    %1 = vector.shape_cast %0 : vector<1x8x32xf32> to vector<8x32xf32>
    %c0_2 = arith.constant 0 : index
    %c0_3 = arith.constant 0 : index
    %c0_4 = arith.constant 0 : index
    %2 = vector.load %arg2[%c0_2, %c0_3, %c0_4] : memref<1x16x32xf32, #tpu.memory_space<vmem>>, vector<1x16x32xf32>
    %3 = vector.shape_cast %2 : vector<1x16x32xf32> to vector<16x32xf32>
    %c0_5 = arith.constant 0 : index
    %c0_6 = arith.constant 0 : index
    %4 = vector.load %arg3[%c0_5, %c0_6] : memref<8x8xf32, #tpu.memory_space<vmem>>, vector<8x8xf32>
    %c0_7 = arith.constant 0 : index
    %c0_8 = arith.constant 0 : index
    %5 = vector.load %arg4[%c0_7, %c0_8] : memref<32x32xbf16, #tpu.memory_space<vmem>>, vector<32x32xbf16>
    %c0_9 = arith.constant 0 : index
    %c0_10 = arith.constant 0 : index
    %6 = vector.load %arg5[%c0_9, %c0_10] : memref<1x32xf32, #tpu.memory_space<vmem>>, vector<1x32xf32>
    %c0_11 = arith.constant 0 : index
    %c0_12 = arith.constant 0 : index
    %7 = vector.load %arg6[%c0_11, %c0_12] : memref<32x32xbf16, #tpu.memory_space<vmem>>, vector<32x32xbf16>
    %c0_13 = arith.constant 0 : index
    %c0_14 = arith.constant 0 : index
    %8 = vector.load %arg7[%c0_13, %c0_14] : memref<1x32xf32, #tpu.memory_space<vmem>>, vector<1x32xf32>
    %c0_15 = arith.constant 0 : index
    %c0_16 = arith.constant 0 : index
    %9 = vector.load %arg8[%c0_15, %c0_16] : memref<32x32xbf16, #tpu.memory_space<vmem>>, vector<32x32xbf16>
    %c0_17 = arith.constant 0 : index
    %c0_18 = arith.constant 0 : index
    %10 = vector.load %arg9[%c0_17, %c0_18] : memref<1x32xf32, #tpu.memory_space<vmem>>, vector<1x32xf32>
    %c0_19 = arith.constant 0 : index
    %c0_20 = arith.constant 0 : index
    %11 = vector.load %arg10[%c0_19, %c0_20] : memref<32x32xbf16, #tpu.memory_space<vmem>>, vector<32x32xbf16>
    %c0_21 = arith.constant 0 : index
    %c0_22 = arith.constant 0 : index
    %12 = vector.load %arg11[%c0_21, %c0_22] : memref<1x32xf32, #tpu.memory_space<vmem>>, vector<1x32xf32>
    %13 = arith.truncf %1 : vector<8x32xf32> to vector<8x32xbf16>
    %cst = arith.constant dense<0.000000e+00> : vector<8x32xf32>
    %14 = tpu.matmul %13, %5, %cst {dimension_numbers = #tpu.dot_dimension_numbers<[1], [0], [0], [1], [0, 0, 1, 1], [], []>} : vector<8x32xbf16>, vector<32x32xbf16>, vector<8x32xf32> -> vector<8x32xf32>
    %15 = vector.broadcast %6 : vector<1x32xf32> to vector<8x32xf32>
    %16 = arith.addf %14, %15 : vector<8x32xf32>
    %17 = arith.truncf %1 : vector<8x32xf32> to vector<8x32xbf16>
    %cst_23 = arith.constant dense<0.000000e+00> : vector<8x32xf32>
    %18 = tpu.matmul %17, %7, %cst_23 {dimension_numbers = #tpu.dot_dimension_numbers<[1], [0], [0], [1], [0, 0, 1, 1], [], []>} : vector<8x32xbf16>, vector<32x32xbf16>, vector<8x32xf32> -> vector<8x32xf32>
    %19 = vector.broadcast %8 : vector<1x32xf32> to vector<8x32xf32>
    %20 = arith.addf %18, %19 : vector<8x32xf32>
    %21 = arith.truncf %1 : vector<8x32xf32> to vector<8x32xbf16>
    %cst_24 = arith.constant dense<0.000000e+00> : vector<8x32xf32>
    %22 = tpu.matmul %21, %9, %cst_24 {dimension_numbers = #tpu.dot_dimension_numbers<[1], [0], [0], [1], [0, 0, 1, 1], [], []>} : vector<8x32xbf16>, vector<32x32xbf16>, vector<8x32xf32> -> vector<8x32xf32>
    %23 = vector.broadcast %10 : vector<1x32xf32> to vector<8x32xf32>
    %24 = arith.addf %22, %23 : vector<8x32xf32>
    %25 = vector.extract_strided_slice %16 {offsets = [0, 0], sizes = [8, 8], strides = [1, 1]} : vector<8x32xf32> to vector<8x8xf32>
    %26 = vector.extract_strided_slice %20 {offsets = [0, 0], sizes = [8, 8], strides = [1, 1]} : vector<8x32xf32> to vector<8x8xf32>
    %27 = vector.extract_strided_slice %24 {offsets = [0, 0], sizes = [8, 8], strides = [1, 1]} : vector<8x32xf32> to vector<8x8xf32>
    %cst_25 = arith.constant dense<0.000000e+00> : vector<8x8xf32>
    %28 = tpu.matmul %25, %26, %cst_25 {dimension_numbers = #tpu.dot_dimension_numbers<[1], [1], [0], [0], [0, 0, 1, 0], [], []>} : vector<8x8xf32>, vector<8x8xf32>, vector<8x8xf32> -> vector<8x8xf32>
    %cst_26 = arith.constant 0.353553385 : f32
    %29 = vector.broadcast %cst_26 : f32 to vector<8x8xf32>
    %30 = arith.mulf %28, %29 : vector<8x8xf32>
    %31 = arith.addf %30, %4 : vector<8x8xf32>
    %cst_27 = arith.constant dense<0xFF800000> : vector<8xf32>
    %32 = vector.multi_reduction <maximumf>, %31, %cst_27 [1] : vector<8x8xf32> to vector<8xf32>
    %33 = vector.shape_cast %32 : vector<8xf32> to vector<8x1xf32>
    %34 = vector.broadcast %33 : vector<8x1xf32> to vector<8x8xf32>
    %35 = arith.subf %31, %34 : vector<8x8xf32>
    %36 = math.exp %35 : vector<8x8xf32>
    %cst_28 = arith.constant dense<0.000000e+00> : vector<8xf32>
    %37 = vector.multi_reduction <add>, %36, %cst_28 [1] : vector<8x8xf32> to vector<8xf32>
    %38 = vector.shape_cast %37 : vector<8xf32> to vector<8x1xf32>
    %39 = tpu.reciprocal %38 {approx = true} : vector<8x1xf32> -> vector<8x1xf32>
    %40 = vector.broadcast %39 : vector<8x1xf32> to vector<8x8xf32>
    %41 = arith.mulf %36, %40 : vector<8x8xf32>
    %cst_29 = arith.constant dense<0.000000e+00> : vector<8x8xf32>
    %42 = tpu.matmul %41, %27, %cst_29 {dimension_numbers = #tpu.dot_dimension_numbers<[1], [0], [0], [1], [0, 0, 1, 1], [], []>} : vector<8x8xf32>, vector<8x8xf32>, vector<8x8xf32> -> vector<8x8xf32>
    %43 = vector.extract_strided_slice %16 {offsets = [0, 8], sizes = [8, 8], strides = [1, 1]} : vector<8x32xf32> to vector<8x8xf32>
    %44 = vector.extract_strided_slice %20 {offsets = [0, 8], sizes = [8, 8], strides = [1, 1]} : vector<8x32xf32> to vector<8x8xf32>
    %45 = vector.extract_strided_slice %24 {offsets = [0, 8], sizes = [8, 8], strides = [1, 1]} : vector<8x32xf32> to vector<8x8xf32>
    %cst_30 = arith.constant dense<0.000000e+00> : vector<8x8xf32>
    %46 = tpu.matmul %43, %44, %cst_30 {dimension_numbers = #tpu.dot_dimension_numbers<[1], [1], [0], [0], [0, 0, 1, 0], [], []>} : vector<8x8xf32>, vector<8x8xf32>, vector<8x8xf32> -> vector<8x8xf32>
    %cst_31 = arith.constant 0.353553385 : f32
    %47 = vector.broadcast %cst_31 : f32 to vector<8x8xf32>
    %48 = arith.mulf %46, %47 : vector<8x8xf32>
    %49 = arith.addf %48, %4 : vector<8x8xf32>
    %cst_32 = arith.constant dense<0xFF800000> : vector<8xf32>
    %50 = vector.multi_reduction <maximumf>, %49, %cst_32 [1] : vector<8x8xf32> to vector<8xf32>
    %51 = vector.shape_cast %50 : vector<8xf32> to vector<8x1xf32>
    %52 = vector.broadcast %51 : vector<8x1xf32> to vector<8x8xf32>
    %53 = arith.subf %49, %52 : vector<8x8xf32>
    %54 = math.exp %53 : vector<8x8xf32>
    %cst_33 = arith.constant dense<0.000000e+00> : vector<8xf32>
    %55 = vector.multi_reduction <add>, %54, %cst_33 [1] : vector<8x8xf32> to vector<8xf32>
    %56 = vector.shape_cast %55 : vector<8xf32> to vector<8x1xf32>
    %57 = tpu.reciprocal %56 {approx = true} : vector<8x1xf32> -> vector<8x1xf32>
    %58 = vector.broadcast %57 : vector<8x1xf32> to vector<8x8xf32>
    %59 = arith.mulf %54, %58 : vector<8x8xf32>
    %cst_34 = arith.constant dense<0.000000e+00> : vector<8x8xf32>
    %60 = tpu.matmul %59, %45, %cst_34 {dimension_numbers = #tpu.dot_dimension_numbers<[1], [0], [0], [1], [0, 0, 1, 1], [], []>} : vector<8x8xf32>, vector<8x8xf32>, vector<8x8xf32> -> vector<8x8xf32>
    %61 = vector.extract_strided_slice %16 {offsets = [0, 16], sizes = [8, 8], strides = [1, 1]} : vector<8x32xf32> to vector<8x8xf32>
    %62 = vector.extract_strided_slice %20 {offsets = [0, 16], sizes = [8, 8], strides = [1, 1]} : vector<8x32xf32> to vector<8x8xf32>
    %63 = vector.extract_strided_slice %24 {offsets = [0, 16], sizes = [8, 8], strides = [1, 1]} : vector<8x32xf32> to vector<8x8xf32>
    %cst_35 = arith.constant dense<0.000000e+00> : vector<8x8xf32>
    %64 = tpu.matmul %61, %62, %cst_35 {dimension_numbers = #tpu.dot_dimension_numbers<[1], [1], [0], [0], [0, 0, 1, 0], [], []>} : vector<8x8xf32>, vector<8x8xf32>, vector<8x8xf32> -> vector<8x8xf32>
    %cst_36 = arith.constant 0.353553385 : f32
    %65 = vector.broadcast %cst_36 : f32 to vector<8x8xf32>
    %66 = arith.mulf %64, %65 : vector<8x8xf32>
    %67 = arith.addf %66, %4 : vector<8x8xf32>
    %cst_37 = arith.constant dense<0xFF800000> : vector<8xf32>
    %68 = vector.multi_reduction <maximumf>, %67, %cst_37 [1] : vector<8x8xf32> to vector<8xf32>
    %69 = vector.shape_cast %68 : vector<8xf32> to vector<8x1xf32>
    %70 = vector.broadcast %69 : vector<8x1xf32> to vector<8x8xf32>
    %71 = arith.subf %67, %70 : vector<8x8xf32>
    %72 = math.exp %71 : vector<8x8xf32>
    %cst_38 = arith.constant dense<0.000000e+00> : vector<8xf32>
    %73 = vector.multi_reduction <add>, %72, %cst_38 [1] : vector<8x8xf32> to vector<8xf32>
    %74 = vector.shape_cast %73 : vector<8xf32> to vector<8x1xf32>
    %75 = tpu.reciprocal %74 {approx = true} : vector<8x1xf32> -> vector<8x1xf32>
    %76 = vector.broadcast %75 : vector<8x1xf32> to vector<8x8xf32>
    %77 = arith.mulf %72, %76 : vector<8x8xf32>
    %cst_39 = arith.constant dense<0.000000e+00> : vector<8x8xf32>
    %78 = tpu.matmul %77, %63, %cst_39 {dimension_numbers = #tpu.dot_dimension_numbers<[1], [0], [0], [1], [0, 0, 1, 1], [], []>} : vector<8x8xf32>, vector<8x8xf32>, vector<8x8xf32> -> vector<8x8xf32>
    %79 = vector.extract_strided_slice %16 {offsets = [0, 24], sizes = [8, 8], strides = [1, 1]} : vector<8x32xf32> to vector<8x8xf32>
    %80 = vector.extract_strided_slice %20 {offsets = [0, 24], sizes = [8, 8], strides = [1, 1]} : vector<8x32xf32> to vector<8x8xf32>
    %81 = vector.extract_strided_slice %24 {offsets = [0, 24], sizes = [8, 8], strides = [1, 1]} : vector<8x32xf32> to vector<8x8xf32>
    %cst_40 = arith.constant dense<0.000000e+00> : vector<8x8xf32>
    %82 = tpu.matmul %79, %80, %cst_40 {dimension_numbers = #tpu.dot_dimension_numbers<[1], [1], [0], [0], [0, 0, 1, 0], [], []>} : vector<8x8xf32>, vector<8x8xf32>, vector<8x8xf32> -> vector<8x8xf32>
    %cst_41 = arith.constant 0.353553385 : f32
    %83 = vector.broadcast %cst_41 : f32 to vector<8x8xf32>
    %84 = arith.mulf %82, %83 : vector<8x8xf32>
    %85 = arith.addf %84, %4 : vector<8x8xf32>
    %cst_42 = arith.constant dense<0xFF800000> : vector<8xf32>
    %86 = vector.multi_reduction <maximumf>, %85, %cst_42 [1] : vector<8x8xf32> to vector<8xf32>
    %87 = vector.shape_cast %86 : vector<8xf32> to vector<8x1xf32>
    %88 = vector.broadcast %87 : vector<8x1xf32> to vector<8x8xf32>
    %89 = arith.subf %85, %88 : vector<8x8xf32>
    %90 = math.exp %89 : vector<8x8xf32>
    %cst_43 = arith.constant dense<0.000000e+00> : vector<8xf32>
    %91 = vector.multi_reduction <add>, %90, %cst_43 [1] : vector<8x8xf32> to vector<8xf32>
    %92 = vector.shape_cast %91 : vector<8xf32> to vector<8x1xf32>
    %93 = tpu.reciprocal %92 {approx = true} : vector<8x1xf32> -> vector<8x1xf32>
    %94 = vector.broadcast %93 : vector<8x1xf32> to vector<8x8xf32>
    %95 = arith.mulf %90, %94 : vector<8x8xf32>
    %cst_44 = arith.constant dense<0.000000e+00> : vector<8x8xf32>
    %96 = tpu.matmul %95, %81, %cst_44 {dimension_numbers = #tpu.dot_dimension_numbers<[1], [0], [0], [1], [0, 0, 1, 1], [], []>} : vector<8x8xf32>, vector<8x8xf32>, vector<8x8xf32> -> vector<8x8xf32>
    %97 = tpu.concatenate %42, %60, %78, %96 in 1 : vector<8x8xf32>, vector<8x8xf32>, vector<8x8xf32>, vector<8x8xf32> -> vector<8x32xf32>
    %98 = arith.truncf %97 : vector<8x32xf32> to vector<8x32xbf16>
    %cst_45 = arith.constant dense<0.000000e+00> : vector<8x32xf32>
    %99 = tpu.matmul %98, %11, %cst_45 {dimension_numbers = #tpu.dot_dimension_numbers<[1], [0], [0], [1], [0, 0, 1, 1], [], []>} : vector<8x32xbf16>, vector<32x32xbf16>, vector<8x32xf32> -> vector<8x32xf32>
    %100 = vector.broadcast %12 : vector<1x32xf32> to vector<8x32xf32>
    %101 = arith.addf %99, %100 : vector<8x32xf32>
    %c0_46 = arith.constant 0 : index
    %c0_47 = arith.constant 0 : index
    %102 = vector.load %arg12[%c0_46, %c0_47] : memref<1x32xf32, #tpu.memory_space<vmem>>, vector<1x32xf32>
    %c0_48 = arith.constant 0 : index
    %c0_49 = arith.constant 0 : index
    %103 = vector.load %arg13[%c0_48, %c0_49] : memref<1x32xf32, #tpu.memory_space<vmem>>, vector<1x32xf32>
    %104 = arith.addf %1, %101 : vector<8x32xf32>
    %cst_50 = arith.constant dense<0.000000e+00> : vector<8xf32>
    %105 = vector.multi_reduction <add>, %104, %cst_50 [1] : vector<8x32xf32> to vector<8xf32>
    %106 = vector.shape_cast %105 : vector<8xf32> to vector<8x1xf32>
    %cst_51 = arith.constant 3.200000e+01 : f32
    %107 = vector.broadcast %cst_51 : f32 to vector<8x1xf32>
    %108 = arith.divf %106, %107 : vector<8x1xf32>
    %109 = vector.broadcast %108 : vector<8x1xf32> to vector<8x32xf32>
    %110 = arith.subf %104, %109 : vector<8x32xf32>
    %111 = arith.mulf %110, %110 : vector<8x32xf32>
    %cst_52 = arith.constant dense<0.000000e+00> : vector<8xf32>
    %112 = vector.multi_reduction <add>, %111, %cst_52 [1] : vector<8x32xf32> to vector<8xf32>
    %113 = vector.shape_cast %112 : vector<8xf32> to vector<8x1xf32>
    %cst_53 = arith.constant 3.200000e+01 : f32
    %114 = vector.broadcast %cst_53 : f32 to vector<8x1xf32>
    %115 = arith.divf %113, %114 : vector<8x1xf32>
    %116 = vector.broadcast %108 : vector<8x1xf32> to vector<8x32xf32>
    %117 = arith.subf %104, %116 : vector<8x32xf32>
    %cst_54 = arith.constant 9.99999974E-6 : f32
    %118 = vector.broadcast %cst_54 : f32 to vector<8x1xf32>
    %119 = arith.addf %115, %118 : vector<8x1xf32>
    %120 = math.rsqrt %119 : vector<8x1xf32>
    %121 = vector.broadcast %120 : vector<8x1xf32> to vector<8x32xf32>
    %122 = arith.mulf %117, %121 : vector<8x32xf32>
    %123 = vector.broadcast %102 : vector<1x32xf32> to vector<8x32xf32>
    %124 = arith.mulf %122, %123 : vector<8x32xf32>
    %125 = vector.broadcast %103 : vector<1x32xf32> to vector<8x32xf32>
    %126 = arith.addf %124, %125 : vector<8x32xf32>
    %c0_55 = arith.constant 0 : index
    %c0_56 = arith.constant 0 : index
    %127 = vector.load %arg14[%c0_55, %c0_56] : memref<32x32xbf16, #tpu.memory_space<vmem>>, vector<32x32xbf16>
    %c0_57 = arith.constant 0 : index
    %c0_58 = arith.constant 0 : index
    %128 = vector.load %arg15[%c0_57, %c0_58] : memref<1x32xf32, #tpu.memory_space<vmem>>, vector<1x32xf32>
    %c0_59 = arith.constant 0 : index
    %c0_60 = arith.constant 0 : index
    %129 = vector.load %arg16[%c0_59, %c0_60] : memref<32x32xbf16, #tpu.memory_space<vmem>>, vector<32x32xbf16>
    %c0_61 = arith.constant 0 : index
    %c0_62 = arith.constant 0 : index
    %130 = vector.load %arg17[%c0_61, %c0_62] : memref<1x32xf32, #tpu.memory_space<vmem>>, vector<1x32xf32>
    %c0_63 = arith.constant 0 : index
    %c0_64 = arith.constant 0 : index
    %131 = vector.load %arg18[%c0_63, %c0_64] : memref<32x32xbf16, #tpu.memory_space<vmem>>, vector<32x32xbf16>
    %c0_65 = arith.constant 0 : index
    %c0_66 = arith.constant 0 : index
    %132 = vector.load %arg19[%c0_65, %c0_66] : memref<1x32xf32, #tpu.memory_space<vmem>>, vector<1x32xf32>
    %c0_67 = arith.constant 0 : index
    %c0_68 = arith.constant 0 : index
    %133 = vector.load %arg20[%c0_67, %c0_68] : memref<32x32xbf16, #tpu.memory_space<vmem>>, vector<32x32xbf16>
    %c0_69 = arith.constant 0 : index
    %c0_70 = arith.constant 0 : index
    %134 = vector.load %arg21[%c0_69, %c0_70] : memref<1x32xf32, #tpu.memory_space<vmem>>, vector<1x32xf32>
    %135 = arith.truncf %126 : vector<8x32xf32> to vector<8x32xbf16>
    %cst_71 = arith.constant dense<0.000000e+00> : vector<8x32xf32>
    %136 = tpu.matmul %135, %127, %cst_71 {dimension_numbers = #tpu.dot_dimension_numbers<[1], [0], [0], [1], [0, 0, 1, 1], [], []>} : vector<8x32xbf16>, vector<32x32xbf16>, vector<8x32xf32> -> vector<8x32xf32>
    %137 = vector.broadcast %128 : vector<1x32xf32> to vector<8x32xf32>
    %138 = arith.addf %136, %137 : vector<8x32xf32>
    %139 = arith.truncf %3 : vector<16x32xf32> to vector<16x32xbf16>
    %cst_72 = arith.constant dense<0.000000e+00> : vector<16x32xf32>
    %140 = tpu.matmul %139, %129, %cst_72 {dimension_numbers = #tpu.dot_dimension_numbers<[1], [0], [0], [1], [0, 0, 1, 1], [], []>} : vector<16x32xbf16>, vector<32x32xbf16>, vector<16x32xf32> -> vector<16x32xf32>
    %141 = vector.broadcast %130 : vector<1x32xf32> to vector<16x32xf32>
    %142 = arith.addf %140, %141 : vector<16x32xf32>
    %143 = arith.truncf %3 : vector<16x32xf32> to vector<16x32xbf16>
    %cst_73 = arith.constant dense<0.000000e+00> : vector<16x32xf32>
    %144 = tpu.matmul %143, %131, %cst_73 {dimension_numbers = #tpu.dot_dimension_numbers<[1], [0], [0], [1], [0, 0, 1, 1], [], []>} : vector<16x32xbf16>, vector<32x32xbf16>, vector<16x32xf32> -> vector<16x32xf32>
    %145 = vector.broadcast %132 : vector<1x32xf32> to vector<16x32xf32>
    %146 = arith.addf %144, %145 : vector<16x32xf32>
    %147 = vector.extract_strided_slice %138 {offsets = [0, 0], sizes = [8, 8], strides = [1, 1]} : vector<8x32xf32> to vector<8x8xf32>
    %148 = vector.extract_strided_slice %142 {offsets = [0, 0], sizes = [16, 8], strides = [1, 1]} : vector<16x32xf32> to vector<16x8xf32>
    %149 = vector.extract_strided_slice %146 {offsets = [0, 0], sizes = [16, 8], strides = [1, 1]} : vector<16x32xf32> to vector<16x8xf32>
    %cst_74 = arith.constant dense<0.000000e+00> : vector<8x16xf32>
    %150 = tpu.matmul %147, %148, %cst_74 {dimension_numbers = #tpu.dot_dimension_numbers<[1], [1], [0], [0], [0, 0, 1, 0], [], []>} : vector<8x8xf32>, vector<16x8xf32>, vector<8x16xf32> -> vector<8x16xf32>
    %cst_75 = arith.constant 0.353553385 : f32
    %151 = vector.broadcast %cst_75 : f32 to vector<8x16xf32>
    %152 = arith.mulf %150, %151 : vector<8x16xf32>
    %cst_76 = arith.constant dense<0xFF800000> : vector<8xf32>
    %153 = vector.multi_reduction <maximumf>, %152, %cst_76 [1] : vector<8x16xf32> to vector<8xf32>
    %154 = vector.shape_cast %153 : vector<8xf32> to vector<8x1xf32>
    %155 = vector.broadcast %154 : vector<8x1xf32> to vector<8x16xf32>
    %156 = arith.subf %152, %155 : vector<8x16xf32>
    %157 = math.exp %156 : vector<8x16xf32>
    %cst_77 = arith.constant dense<0.000000e+00> : vector<8xf32>
    %158 = vector.multi_reduction <add>, %157, %cst_77 [1] : vector<8x16xf32> to vector<8xf32>
    %159 = vector.shape_cast %158 : vector<8xf32> to vector<8x1xf32>
    %160 = tpu.reciprocal %159 {approx = true} : vector<8x1xf32> -> vector<8x1xf32>
    %161 = vector.broadcast %160 : vector<8x1xf32> to vector<8x16xf32>
    %162 = arith.mulf %157, %161 : vector<8x16xf32>
    %cst_78 = arith.constant dense<0.000000e+00> : vector<8x8xf32>
    %163 = tpu.matmul %162, %149, %cst_78 {dimension_numbers = #tpu.dot_dimension_numbers<[1], [0], [0], [1], [0, 0, 1, 1], [], []>} : vector<8x16xf32>, vector<16x8xf32>, vector<8x8xf32> -> vector<8x8xf32>
    %164 = vector.extract_strided_slice %138 {offsets = [0, 8], sizes = [8, 8], strides = [1, 1]} : vector<8x32xf32> to vector<8x8xf32>
    %165 = vector.extract_strided_slice %142 {offsets = [0, 8], sizes = [16, 8], strides = [1, 1]} : vector<16x32xf32> to vector<16x8xf32>
    %166 = vector.extract_strided_slice %146 {offsets = [0, 8], sizes = [16, 8], strides = [1, 1]} : vector<16x32xf32> to vector<16x8xf32>
    %cst_79 = arith.constant dense<0.000000e+00> : vector<8x16xf32>
    %167 = tpu.matmul %164, %165, %cst_79 {dimension_numbers = #tpu.dot_dimension_numbers<[1], [1], [0], [0], [0, 0, 1, 0], [], []>} : vector<8x8xf32>, vector<16x8xf32>, vector<8x16xf32> -> vector<8x16xf32>
    %cst_80 = arith.constant 0.353553385 : f32
    %168 = vector.broadcast %cst_80 : f32 to vector<8x16xf32>
    %169 = arith.mulf %167, %168 : vector<8x16xf32>
    %cst_81 = arith.constant dense<0xFF800000> : vector<8xf32>
    %170 = vector.multi_reduction <maximumf>, %169, %cst_81 [1] : vector<8x16xf32> to vector<8xf32>
    %171 = vector.shape_cast %170 : vector<8xf32> to vector<8x1xf32>
    %172 = vector.broadcast %171 : vector<8x1xf32> to vector<8x16xf32>
    %173 = arith.subf %169, %172 : vector<8x16xf32>
    %174 = math.exp %173 : vector<8x16xf32>
    %cst_82 = arith.constant dense<0.000000e+00> : vector<8xf32>
    %175 = vector.multi_reduction <add>, %174, %cst_82 [1] : vector<8x16xf32> to vector<8xf32>
    %176 = vector.shape_cast %175 : vector<8xf32> to vector<8x1xf32>
    %177 = tpu.reciprocal %176 {approx = true} : vector<8x1xf32> -> vector<8x1xf32>
    %178 = vector.broadcast %177 : vector<8x1xf32> to vector<8x16xf32>
    %179 = arith.mulf %174, %178 : vector<8x16xf32>
    %cst_83 = arith.constant dense<0.000000e+00> : vector<8x8xf32>
    %180 = tpu.matmul %179, %166, %cst_83 {dimension_numbers = #tpu.dot_dimension_numbers<[1], [0], [0], [1], [0, 0, 1, 1], [], []>} : vector<8x16xf32>, vector<16x8xf32>, vector<8x8xf32> -> vector<8x8xf32>
    %181 = vector.extract_strided_slice %138 {offsets = [0, 16], sizes = [8, 8], strides = [1, 1]} : vector<8x32xf32> to vector<8x8xf32>
    %182 = vector.extract_strided_slice %142 {offsets = [0, 16], sizes = [16, 8], strides = [1, 1]} : vector<16x32xf32> to vector<16x8xf32>
    %183 = vector.extract_strided_slice %146 {offsets = [0, 16], sizes = [16, 8], strides = [1, 1]} : vector<16x32xf32> to vector<16x8xf32>
    %cst_84 = arith.constant dense<0.000000e+00> : vector<8x16xf32>
    %184 = tpu.matmul %181, %182, %cst_84 {dimension_numbers = #tpu.dot_dimension_numbers<[1], [1], [0], [0], [0, 0, 1, 0], [], []>} : vector<8x8xf32>, vector<16x8xf32>, vector<8x16xf32> -> vector<8x16xf32>
    %cst_85 = arith.constant 0.353553385 : f32
    %185 = vector.broadcast %cst_85 : f32 to vector<8x16xf32>
    %186 = arith.mulf %184, %185 : vector<8x16xf32>
    %cst_86 = arith.constant dense<0xFF800000> : vector<8xf32>
    %187 = vector.multi_reduction <maximumf>, %186, %cst_86 [1] : vector<8x16xf32> to vector<8xf32>
    %188 = vector.shape_cast %187 : vector<8xf32> to vector<8x1xf32>
    %189 = vector.broadcast %188 : vector<8x1xf32> to vector<8x16xf32>
    %190 = arith.subf %186, %189 : vector<8x16xf32>
    %191 = math.exp %190 : vector<8x16xf32>
    %cst_87 = arith.constant dense<0.000000e+00> : vector<8xf32>
    %192 = vector.multi_reduction <add>, %191, %cst_87 [1] : vector<8x16xf32> to vector<8xf32>
    %193 = vector.shape_cast %192 : vector<8xf32> to vector<8x1xf32>
    %194 = tpu.reciprocal %193 {approx = true} : vector<8x1xf32> -> vector<8x1xf32>
    %195 = vector.broadcast %194 : vector<8x1xf32> to vector<8x16xf32>
    %196 = arith.mulf %191, %195 : vector<8x16xf32>
    %cst_88 = arith.constant dense<0.000000e+00> : vector<8x8xf32>
    %197 = tpu.matmul %196, %183, %cst_88 {dimension_numbers = #tpu.dot_dimension_numbers<[1], [0], [0], [1], [0, 0, 1, 1], [], []>} : vector<8x16xf32>, vector<16x8xf32>, vector<8x8xf32> -> vector<8x8xf32>
    %198 = vector.extract_strided_slice %138 {offsets = [0, 24], sizes = [8, 8], strides = [1, 1]} : vector<8x32xf32> to vector<8x8xf32>
    %199 = vector.extract_strided_slice %142 {offsets = [0, 24], sizes = [16, 8], strides = [1, 1]} : vector<16x32xf32> to vector<16x8xf32>
    %200 = vector.extract_strided_slice %146 {offsets = [0, 24], sizes = [16, 8], strides = [1, 1]} : vector<16x32xf32> to vector<16x8xf32>
    %cst_89 = arith.constant dense<0.000000e+00> : vector<8x16xf32>
    %201 = tpu.matmul %198, %199, %cst_89 {dimension_numbers = #tpu.dot_dimension_numbers<[1], [1], [0], [0], [0, 0, 1, 0], [], []>} : vector<8x8xf32>, vector<16x8xf32>, vector<8x16xf32> -> vector<8x16xf32>
    %cst_90 = arith.constant 0.353553385 : f32
    %202 = vector.broadcast %cst_90 : f32 to vector<8x16xf32>
    %203 = arith.mulf %201, %202 : vector<8x16xf32>
    %cst_91 = arith.constant dense<0xFF800000> : vector<8xf32>
    %204 = vector.multi_reduction <maximumf>, %203, %cst_91 [1] : vector<8x16xf32> to vector<8xf32>
    %205 = vector.shape_cast %204 : vector<8xf32> to vector<8x1xf32>
    %206 = vector.broadcast %205 : vector<8x1xf32> to vector<8x16xf32>
    %207 = arith.subf %203, %206 : vector<8x16xf32>
    %208 = math.exp %207 : vector<8x16xf32>
    %cst_92 = arith.constant dense<0.000000e+00> : vector<8xf32>
    %209 = vector.multi_reduction <add>, %208, %cst_92 [1] : vector<8x16xf32> to vector<8xf32>
    %210 = vector.shape_cast %209 : vector<8xf32> to vector<8x1xf32>
    %211 = tpu.reciprocal %210 {approx = true} : vector<8x1xf32> -> vector<8x1xf32>
    %212 = vector.broadcast %211 : vector<8x1xf32> to vector<8x16xf32>
    %213 = arith.mulf %208, %212 : vector<8x16xf32>
    %cst_93 = arith.constant dense<0.000000e+00> : vector<8x8xf32>
    %214 = tpu.matmul %213, %200, %cst_93 {dimension_numbers = #tpu.dot_dimension_numbers<[1], [0], [0], [1], [0, 0, 1, 1], [], []>} : vector<8x16xf32>, vector<16x8xf32>, vector<8x8xf32> -> vector<8x8xf32>
    %215 = tpu.concatenate %163, %180, %197, %214 in 1 : vector<8x8xf32>, vector<8x8xf32>, vector<8x8xf32>, vector<8x8xf32> -> vector<8x32xf32>
    %216 = arith.truncf %215 : vector<8x32xf32> to vector<8x32xbf16>
    %cst_94 = arith.constant dense<0.000000e+00> : vector<8x32xf32>
    %217 = tpu.matmul %216, %133, %cst_94 {dimension_numbers = #tpu.dot_dimension_numbers<[1], [0], [0], [1], [0, 0, 1, 1], [], []>} : vector<8x32xbf16>, vector<32x32xbf16>, vector<8x32xf32> -> vector<8x32xf32>
    %218 = vector.broadcast %134 : vector<1x32xf32> to vector<8x32xf32>
    %219 = arith.addf %217, %218 : vector<8x32xf32>
    %c0_95 = arith.constant 0 : index
    %c0_96 = arith.constant 0 : index
    %220 = vector.load %arg22[%c0_95, %c0_96] : memref<1x32xf32, #tpu.memory_space<vmem>>, vector<1x32xf32>
    %c0_97 = arith.constant 0 : index
    %c0_98 = arith.constant 0 : index
    %221 = vector.load %arg23[%c0_97, %c0_98] : memref<1x32xf32, #tpu.memory_space<vmem>>, vector<1x32xf32>
    %222 = arith.addf %126, %219 : vector<8x32xf32>
    %cst_99 = arith.constant dense<0.000000e+00> : vector<8xf32>
    %223 = vector.multi_reduction <add>, %222, %cst_99 [1] : vector<8x32xf32> to vector<8xf32>
    %224 = vector.shape_cast %223 : vector<8xf32> to vector<8x1xf32>
    %cst_100 = arith.constant 3.200000e+01 : f32
    %225 = vector.broadcast %cst_100 : f32 to vector<8x1xf32>
    %226 = arith.divf %224, %225 : vector<8x1xf32>
    %227 = vector.broadcast %226 : vector<8x1xf32> to vector<8x32xf32>
    %228 = arith.subf %222, %227 : vector<8x32xf32>
    %229 = arith.mulf %228, %228 : vector<8x32xf32>
    %cst_101 = arith.constant dense<0.000000e+00> : vector<8xf32>
    %230 = vector.multi_reduction <add>, %229, %cst_101 [1] : vector<8x32xf32> to vector<8xf32>
    %231 = vector.shape_cast %230 : vector<8xf32> to vector<8x1xf32>
    %cst_102 = arith.constant 3.200000e+01 : f32
    %232 = vector.broadcast %cst_102 : f32 to vector<8x1xf32>
    %233 = arith.divf %231, %232 : vector<8x1xf32>
    %234 = vector.broadcast %226 : vector<8x1xf32> to vector<8x32xf32>
    %235 = arith.subf %222, %234 : vector<8x32xf32>
    %cst_103 = arith.constant 9.99999974E-6 : f32
    %236 = vector.broadcast %cst_103 : f32 to vector<8x1xf32>
    %237 = arith.addf %233, %236 : vector<8x1xf32>
    %238 = math.rsqrt %237 : vector<8x1xf32>
    %239 = vector.broadcast %238 : vector<8x1xf32> to vector<8x32xf32>
    %240 = arith.mulf %235, %239 : vector<8x32xf32>
    %241 = vector.broadcast %220 : vector<1x32xf32> to vector<8x32xf32>
    %242 = arith.mulf %240, %241 : vector<8x32xf32>
    %243 = vector.broadcast %221 : vector<1x32xf32> to vector<8x32xf32>
    %244 = arith.addf %242, %243 : vector<8x32xf32>
    %245 = arith.truncf %244 : vector<8x32xf32> to vector<8x32xbf16>
    %c0_104 = arith.constant 0 : index
    %c0_105 = arith.constant 0 : index
    %246 = vector.load %arg24[%c0_104, %c0_105] : memref<32x64xbf16, #tpu.memory_space<vmem>>, vector<32x64xbf16>
    %cst_106 = arith.constant dense<0.000000e+00> : vector<8x64xf32>
    %247 = tpu.matmul %245, %246, %cst_106 {dimension_numbers = #tpu.dot_dimension_numbers<[1], [0], [0], [1], [0, 0, 1, 1], [], []>} : vector<8x32xbf16>, vector<32x64xbf16>, vector<8x64xf32> -> vector<8x64xf32>
    %c0_107 = arith.constant 0 : index
    %c0_108 = arith.constant 0 : index
    %248 = vector.load %arg25[%c0_107, %c0_108] : memref<1x64xf32, #tpu.memory_space<vmem>>, vector<1x64xf32>
    %249 = vector.broadcast %248 : vector<1x64xf32> to vector<8x64xf32>
    %250 = arith.addf %247, %249 : vector<8x64xf32>
    %cst_109 = arith.constant 0.000000e+00 : f32
    %251 = vector.broadcast %cst_109 : f32 to vector<8x64xf32>
    %252 = arith.maximumf %250, %251 : vector<8x64xf32>
    %253 = arith.truncf %252 : vector<8x64xf32> to vector<8x64xbf16>
    %c0_110 = arith.constant 0 : index
    %c0_111 = arith.constant 0 : index
    %254 = vector.load %arg26[%c0_110, %c0_111] : memref<64x32xbf16, #tpu.memory_space<vmem>>, vector<64x32xbf16>
    %cst_112 = arith.constant dense<0.000000e+00> : vector<8x32xf32>
    %255 = tpu.matmul %253, %254, %cst_112 {dimension_numbers = #tpu.dot_dimension_numbers<[1], [0], [0], [1], [0, 0, 1, 1], [], []>} : vector<8x64xbf16>, vector<64x32xbf16>, vector<8x32xf32> -> vector<8x32xf32>
    %c0_113 = arith.constant 0 : index
    %c0_114 = arith.constant 0 : index
    %256 = vector.load %arg27[%c0_113, %c0_114] : memref<1x32xf32, #tpu.memory_space<vmem>>, vector<1x32xf32>
    %257 = vector.broadcast %256 : vector<1x32xf32> to vector<8x32xf32>
    %258 = arith.addf %255, %257 : vector<8x32xf32>
    %c0_115 = arith.constant 0 : index
    %c0_116 = arith.constant 0 : index
    %259 = vector.load %arg28[%c0_115, %c0_116] : memref<1x32xf32, #tpu.memory_space<vmem>>, vector<1x32xf32>
    %c0_117 = arith.constant 0 : index
    %c0_118 = arith.constant 0 : index
    %260 = vector.load %arg29[%c0_117, %c0_118] : memref<1x32xf32, #tpu.memory_space<vmem>>, vector<1x32xf32>
    %261 = arith.addf %244, %258 : vector<8x32xf32>
    %cst_119 = arith.constant dense<0.000000e+00> : vector<8xf32>
    %262 = vector.multi_reduction <add>, %261, %cst_119 [1] : vector<8x32xf32> to vector<8xf32>
    %263 = vector.shape_cast %262 : vector<8xf32> to vector<8x1xf32>
    %cst_120 = arith.constant 3.200000e+01 : f32
    %264 = vector.broadcast %cst_120 : f32 to vector<8x1xf32>
    %265 = arith.divf %263, %264 : vector<8x1xf32>
    %266 = vector.broadcast %265 : vector<8x1xf32> to vector<8x32xf32>
    %267 = arith.subf %261, %266 : vector<8x32xf32>
    %268 = arith.mulf %267, %267 : vector<8x32xf32>
    %cst_121 = arith.constant dense<0.000000e+00> : vector<8xf32>
    %269 = vector.multi_reduction <add>, %268, %cst_121 [1] : vector<8x32xf32> to vector<8xf32>
    %270 = vector.shape_cast %269 : vector<8xf32> to vector<8x1xf32>
    %cst_122 = arith.constant 3.200000e+01 : f32
    %271 = vector.broadcast %cst_122 : f32 to vector<8x1xf32>
    %272 = arith.divf %270, %271 : vector<8x1xf32>
    %273 = vector.broadcast %265 : vector<8x1xf32> to vector<8x32xf32>
    %274 = arith.subf %261, %273 : vector<8x32xf32>
    %cst_123 = arith.constant 9.99999974E-6 : f32
    %275 = vector.broadcast %cst_123 : f32 to vector<8x1xf32>
    %276 = arith.addf %272, %275 : vector<8x1xf32>
    %277 = math.rsqrt %276 : vector<8x1xf32>
    %278 = vector.broadcast %277 : vector<8x1xf32> to vector<8x32xf32>
    %279 = arith.mulf %274, %278 : vector<8x32xf32>
    %280 = vector.broadcast %259 : vector<1x32xf32> to vector<8x32xf32>
    %281 = arith.mulf %279, %280 : vector<8x32xf32>
    %282 = vector.broadcast %260 : vector<1x32xf32> to vector<8x32xf32>
    %283 = arith.addf %281, %282 : vector<8x32xf32>
    %c0_124 = arith.constant 0 : index
    %c0_125 = arith.constant 0 : index
    %c0_126 = arith.constant 0 : index
    %284 = vector.load %arg30[%c0_124, %c0_125, %c0_126] : memref<1x8x32xf32, #tpu.memory_space<vmem>>, vector<1x8x32xf32>
    %285 = vector.shape_cast %284 : vector<1x8x32xf32> to vector<8x32xf32>
    %286 = vector.shape_cast %283 : vector<8x32xf32> to vector<1x8x32xf32>
    tpu.vector_store %arg30[%c0_124, %c0_125, %c0_126], %286 {strides = array<i32>} : memref<1x8x32xf32, #tpu.memory_space<vmem>>, vector<1x8x32xf32>,
    return
  }
  func.func @transform_0(%arg0: i32) -> (i32, i32, i32) {
    %c0_i32 = arith.constant 0 : i32
    %c0_i32_0 = arith.constant 0 : i32
    %c0_i32_1 = arith.constant 0 : i32
    return %arg0, %c0_i32, %c0_i32_0 : i32, i32, i32
  }
  func.func @transform_1(%arg0: i32) -> (i32, i32, i32) {
    %c0_i32 = arith.constant 0 : i32
    %c0_i32_0 = arith.constant 0 : i32
    %c0_i32_1 = arith.constant 0 : i32
    return %arg0, %c0_i32, %c0_i32_0 : i32, i32, i32
  }
  func.func @transform_2(%arg0: i32) -> (i32, i32) {
    %c0_i32 = arith.constant 0 : i32
    %c0_i32_0 = arith.constant 0 : i32
    %c0_i32_1 = arith.constant 0 : i32
    return %c0_i32, %c0_i32_0 : i32, i32
  }
  func.func @transform_3(%arg0: i32) -> (i32, i32) {
    %c0_i32 = arith.constant 0 : i32
    %c0_i32_0 = arith.constant 0 : i32
    %c0_i32_1 = arith.constant 0 : i32
    return %c0_i32, %c0_i32_0 : i32, i32
  }
  func.func @transform_4(%arg0: i32) -> (i32, i32) {
    %c0_i32 = arith.constant 0 : i32
    %c0_i32_0 = arith.constant 0 : i32
    %c0_i32_1 = arith.constant 0 : i32
    return %c0_i32, %c0_i32_0 : i32, i32
  }
  func.func @transform_5(%arg0: i32) -> (i32, i32) {
    %c0_i32 = arith.constant 0 : i32
    %c0_i32_0 = arith.constant 0 : i32
    %c0_i32_1 = arith.constant 0 : i32
    return %c0_i32, %c0_i32_0 : i32, i32
  }
  func.func @transform_6(%arg0: i32) -> (i32, i32) {
    %c0_i32 = arith.constant 0 : i32
    %c0_i32_0 = arith.constant 0 : i32
    %c0_i32_1 = arith.constant 0 : i32
    return %c0_i32, %c0_i32_0 : i32, i32
  }
  func.func @transform_7(%arg0: i32) -> (i32, i32) {
    %c0_i32 = arith.constant 0 : i32
    %c0_i32_0 = arith.constant 0 : i32
    %c0_i32_1 = arith.constant 0 : i32
    return %c0_i32, %c0_i32_0 : i32, i32
  }
  func.func @transform_8(%arg0: i32) -> (i32, i32) {
    %c0_i32 = arith.constant 0 : i32
    %c0_i32_0 = arith.constant 0 : i32
    %c0_i32_1 = arith.constant 0 : i32
    return %c0_i32, %c0_i32_0 : i32, i32
  }
  func.func @transform_9(%arg0: i32) -> (i32, i32) {
    %c0_i32 = arith.constant 0 : i32
    %c0_i32_0 = arith.constant 0 : i32
    %c0_i32_1 = arith.constant 0 : i32
    return %c0_i32, %c0_i32_0 : i32, i32
  }
  func.func @transform_10(%arg0: i32) -> (i32, i32) {
    %c0_i32 = arith.constant 0 : i32
    %c0_i32_0 = arith.constant 0 : i32
    %c0_i32_1 = arith.constant 0 : i32
    return %c0_i32, %c0_i32_0 : i32, i32
  }
  func.func @transform_11(%arg0: i32) -> (i32, i32) {
    %c0_i32 = arith.constant 0 : i32
    %c0_i32_0 = arith.constant 0 : i32
    %c0_i32_1 = arith.constant 0 : i32
    return %c0_i32, %c0_i32_0 : i32, i32
  }
  func.func @transform_12(%arg0: i32) -> (i32, i32) {
    %c0_i32 = arith.constant 0 : i32
    %c0_i32_0 = arith.constant 0 : i32
    %c0_i32_1 = arith.constant 0 : i32
    return %c0_i32, %c0_i32_0 : i32, i32
  }
  func.func @transform_13(%arg0: i32) -> (i32, i32) {
    %c0_i32 = arith.constant 0 : i32
    %c0_i32_0 = arith.constant 0 : i32
    %c0_i32_1 = arith.constant 0 : i32
    return %c0_i32, %c0_i32_0 : i32, i32
  }
  func.func @transform_14(%arg0: i32) -> (i32, i32) {
    %c0_i32 = arith.constant 0 : i32
    %c0_i32_0 = arith.constant 0 : i32
    %c0_i32_1 = arith.constant 0 : i32
    return %c0_i32, %c0_i32_0 : i32, i32
  }
  func.func @transform_15(%arg0: i32) -> (i32, i32) {
    %c0_i32 = arith.constant 0 : i32
    %c0_i32_0 = arith.constant 0 : i32
    %c0_i32_1 = arith.constant 0 : i32
    return %c0_i32, %c0_i32_0 : i32, i32
  }
  func.func @transform_16(%arg0: i32) -> (i32, i32) {
    %c0_i32 = arith.constant 0 : i32
    %c0_i32_0 = arith.constant 0 : i32
    %c0_i32_1 = arith.constant 0 : i32
    return %c0_i32, %c0_i32_0 : i32, i32
  }
  func.func @transform_17(%arg0: i32) -> (i32, i32) {
    %c0_i32 = arith.constant 0 : i32
    %c0_i32_0 = arith.constant 0 : i32
    %c0_i32_1 = arith.constant 0 : i32
    return %c0_i32, %c0_i32_0 : i32, i32
  }
  func.func @transform_18(%arg0: i32) -> (i32, i32) {
    %c0_i32 = arith.constant 0 : i32
    %c0_i32_0 = arith.constant 0 : i32
    %c0_i32_1 = arith.constant 0 : i32
    return %c0_i32, %c0_i32_0 : i32, i32
  }
  func.func @transform_19(%arg0: i32) -> (i32, i32) {
    %c0_i32 = arith.constant 0 : i32
    %c0_i32_0 = arith.constant 0 : i32
    %c0_i32_1 = arith.constant 0 : i32
    return %c0_i32, %c0_i32_0 : i32, i32
  }
  func.func @transform_20(%arg0: i32) -> (i32, i32) {
    %c0_i32 = arith.constant 0 : i32
    %c0_i32_0 = arith.constant 0 : i32
    %c0_i32_1 = arith.constant 0 : i32
    return %c0_i32, %c0_i32_0 : i32, i32
  }
  func.func @transform_21(%arg0: i32) -> (i32, i32) {
    %c0_i32 = arith.constant 0 : i32
    %c0_i32_0 = arith.constant 0 : i32
    %c0_i32_1 = arith.constant 0 : i32
    return %c0_i32, %c0_i32_0 : i32, i32
  }
  func.func @transform_22(%arg0: i32) -> (i32, i32) {
    %c0_i32 = arith.constant 0 : i32
    %c0_i32_0 = arith.constant 0 : i32
    %c0_i32_1 = arith.constant 0 : i32
    return %c0_i32, %c0_i32_0 : i32, i32
  }
  func.func @transform_23(%arg0: i32) -> (i32, i32) {
    %c0_i32 = arith.constant 0 : i32
    %c0_i32_0 = arith.constant 0 : i32
    %c0_i32_1 = arith.constant 0 : i32
    return %c0_i32, %c0_i32_0 : i32, i32
  }
  func.func @transform_24(%arg0: i32) -> (i32, i32) {
    %c0_i32 = arith.constant 0 : i32
    %c0_i32_0 = arith.constant 0 : i32
    %c0_i32_1 = arith.constant 0 : i32
    return %c0_i32, %c0_i32_0 : i32, i32
  }
  func.func @transform_25(%arg0: i32) -> (i32, i32) {
    %c0_i32 = arith.constant 0 : i32
    %c0_i32_0 = arith.constant 0 : i32
    %c0_i32_1 = arith.constant 0 : i32
    return %c0_i32, %c0_i32_0 : i32, i32
  }
  func.func @transform_26(%arg0: i32) -> (i32, i32) {
    %c0_i32 = arith.constant 0 : i32
    %c0_i32_0 = arith.constant 0 : i32
    %c0_i32_1 = arith.constant 0 : i32
    return %c0_i32, %c0_i32_0 : i32, i32
  }
  func.func @transform_27(%arg0: i32) -> (i32, i32) {
    %c0_i32 = arith.constant 0 : i32
    %c0_i32_0 = arith.constant 0 : i32
    %c0_i32_1 = arith.constant 0 : i32
    return %c0_i32, %c0_i32_0 : i32, i32
  }
  func.func @transform_28(%arg0: i32) -> (i32, i32) {
    %c0_i32 = arith.constant 0 : i32
    %c0_i32_0 = arith.constant 0 : i32
    %c0_i32_1 = arith.constant 0 : i32
    return %c0_i32, %c0_i32_0 : i32, i32
  }
  func.func @transform_29(%arg0: i32) -> (i32, i32, i32) {
    %c0_i32 = arith.constant 0 : i32
    %c0_i32_0 = arith.constant 0 : i32
    %c0_i32_1 = arith.constant 0 : i32
    return %arg0, %c0_i32, %c0_i32_0 : i32, i32, i32
  }
}

</mosaic_0001>

<llo_original>
// kernel: tpu_custom_call.1
$region0: #{tpu_custom_call.1}
  #allocation0 [shape = 'u32[]', space=smem, size = 0x4, offset = 0x4, fixed_abs, tag = 'smem constant byte address 0x4 - core index']
  #allocation1 [shape = 'u32[72,128]{1,0:T(1,128)}', space=vmem, size = 0x9000, scoped, tag = 'internal scratch']
  %s0 = inlined_call_operand.smem [shape: u32[30], index: -1, kind: input, shape index: {}]
  %s1 = sld [smem:[%s0]]
  %s2 = scalar_lea.smem %s0, 1
  %s3 = sld [smem:[%s2]]
  %s4 = scalar_lea.smem %s0, 2
  %s5 = sld [smem:[%s4]]
  %s6 = scalar_lea.smem %s0, 3
  %s7 = sld [smem:[%s6]]
  %s8 = scalar_lea.smem %s0, 4
  %s9 = sld [smem:[%s8]]
  %s10 = scalar_lea.smem %s0, 5
  %s11 = sld [smem:[%s10]]
  %s12 = scalar_lea.smem %s0, 6
  %s13 = sld [smem:[%s12]]
  %s14 = scalar_lea.smem %s0, 7
  %s15 = sld [smem:[%s14]]
  %s16 = scalar_lea.smem %s0, 8
  %s17 = sld [smem:[%s16]]
  %s18 = scalar_lea.smem %s0, 9
  %s19 = sld [smem:[%s18]]
  %s20 = scalar_lea.smem %s0, 10
  %s21 = sld [smem:[%s20]]
  %s22 = scalar_lea.smem %s0, 11
  %s23 = sld [smem:[%s22]]
  %s24 = scalar_lea.smem %s0, 12
  %s25 = sld [smem:[%s24]]
  %s26 = scalar_lea.smem %s0, 13
  %s27 = sld [smem:[%s26]]
  %s28 = scalar_lea.smem %s0, 14
  %s29 = sld [smem:[%s28]]
  %s30 = scalar_lea.smem %s0, 15
  %s31 = sld [smem:[%s30]]
  %s32 = scalar_lea.smem %s0, 16
  %s33 = sld [smem:[%s32]]
  %s34 = scalar_lea.smem %s0, 17
  %s35 = sld [smem:[%s34]]
  %s36 = scalar_lea.smem %s0, 18
  %s37 = sld [smem:[%s36]]
  %s38 = scalar_lea.smem %s0, 19
  %s39 = sld [smem:[%s38]]
  %s40 = scalar_lea.smem %s0, 20
  %s41 = sld [smem:[%s40]]
  %s42 = scalar_lea.smem %s0, 21
  %s43 = sld [smem:[%s42]]
  %s44 = scalar_lea.smem %s0, 22
  %s45 = sld [smem:[%s44]]
  %s46 = scalar_lea.smem %s0, 23
  %s47 = sld [smem:[%s46]]
  %s48 = scalar_lea.smem %s0, 24
  %s49 = sld [smem:[%s48]]
  %s50 = scalar_lea.smem %s0, 25
  %s51 = sld [smem:[%s50]]
  %s52 = scalar_lea.smem %s0, 26
  %s53 = sld [smem:[%s52]]
  %s54 = scalar_lea.smem %s0, 27
  %s55 = sld [smem:[%s54]]
  %s56 = scalar_lea.smem %s0, 28
  %s57 = sld [smem:[%s56]]
  %s58 = scalar_lea.smem %s0, 29
  %s59 = sld [smem:[%s58]]
  %s60 = sld [smem:[#allocation0]]
  $region217: #{tpu_custom_call.1} parent=0
    _
  %s62 = ssub.s32 1, %s60
  %s63 = scalar_select 0, %s62, %s60
  $region1: #{tpu_custom_call.1} parent=0
    #allocation2 [shape = 'u8[4096]{0}', space=vmem, size = 0x1000, scoped, tag = 'input window, operand 2, single buffered']
    #allocation3 [shape = 's32[2]{0}', space=sflag, size = 0x8, scoped, tag = 'scoped memory for tpu_custom_call.1']
    #allocation4 [shape = 's32[2]{0}', space=sflag, size = 0x8, scoped, tag = 'scoped memory for tpu_custom_call.1']
    #allocation5 [shape = 'u8[8192]{0}', space=vmem, size = 0x2000, scoped, tag = 'input window, operand 3, single buffered']
    #allocation6 [shape = 's32[1]{0}', space=sflag, size = 0x4, scoped, tag = 'scoped memory for tpu_custom_call.1']
    #allocation7 [shape = 'u8[512]{0}', space=vmem, size = 0x400, scoped, tag = 'input window, operand 4, single buffered']
    #allocation8 [shape = 'u8[8192]{0}', space=vmem, size = 0x2000, scoped, tag = 'input window, operand 5, single buffered']
    #allocation9 [shape = 's32[1]{0}', space=sflag, size = 0x4, scoped, tag = 'scoped memory for tpu_custom_call.1']
    #allocation10 [shape = 'u8[512]{0}', space=vmem, size = 0x400, scoped, tag = 'input window, operand 6, single buffered']
    #allocation11 [shape = 'u8[8192]{0}', space=vmem, size = 0x2000, scoped, tag = 'input window, operand 7, single buffered']
    #allocation12 [shape = 's32[1]{0}', space=sflag, size = 0x4, scoped, tag = 'scoped memory for tpu_custom_call.1']
    #allocation13 [shape = 'u8[512]{0}', space=vmem, size = 0x400, scoped, tag = 'input window, operand 8, single buffered']
    #allocation14 [shape = 'u8[8192]{0}', space=vmem, size = 0x2000, scoped, tag = 'input window, operand 9, single buffered']
    #allocation15 [shape = 's32[1]{0}', space=sflag, size = 0x4, scoped, tag = 'scoped memory for tpu_custom_call.1']
    #allocation16 [shape = 'u8[512]{0}', space=vmem, size = 0x400, scoped, tag = 'input window, operand 10, single buffered']
    #allocation17 [shape = 'u8[512]{0}', space=vmem, size = 0x400, scoped, tag = 'input window, operand 11, single buffered']
    #allocation18 [shape = 's32[1]{0}', space=sflag, size = 0x4, scoped, tag = 'scoped memory for tpu_custom_call.1']
    #allocation19 [shape = 'u8[512]{0}', space=vmem, size = 0x400, scoped, tag = 'input window, operand 12, single buffered']
    #allocation20 [shape = 'u8[8192]{0}', space=vmem, size = 0x2000, scoped, tag = 'input window, operand 13, single buffered']
    #allocation21 [shape = 's32[1]{0}', space=sflag, size = 0x4, scoped, tag = 'scoped memory for tpu_custom_call.1']
    #allocation22 [shape = 'u8[512]{0}', space=vmem, size = 0x400, scoped, tag = 'input window, operand 14, single buffered']
    #allocation23 [shape = 'u8[8192]{0}', space=vmem, size = 0x2000, scoped, tag = 'input window, operand 15, single buffered']
    #allocation24 [shape = 's32[1]{0}', space=sflag, size = 0x4, scoped, tag = 'scoped memory for tpu_custom_call.1']
    #allocation25 [shape = 'u8[512]{0}', space=vmem, size = 0x400, scoped, tag = 'input window, operand 16, single buffered']
    #allocation26 [shape = 'u8[8192]{0}', space=vmem, size = 0x2000, scoped, tag = 'input window, operand 19, single buffered']
    #allocation27 [shape = 's32[1]{0}', space=sflag, size = 0x4, scoped, tag = 'scoped memory for tpu_custom_call.1']
    #allocation28 [shape = 'u8[8192]{0}', space=vmem, size = 0x2000, scoped, tag = 'input window, operand 23, single buffered']
    #allocation29 [shape = 'u8[8192]{0}', space=vmem, size = 0x2000, scoped, tag = 'output window, operand 0']
    %64 = vsyncpa [#allocation3], 0
    %65 = vsyncpa [#allocation6], 0
    %66 = vsyncpa [#allocation9], 0
    %67 = vsyncpa [#allocation12], 0
    %68 = vsyncpa [#allocation15], 0
    %69 = vsyncpa [#allocation18], 0
    %70 = vsyncpa [#allocation21], 0
    %71 = vsyncpa [#allocation24], 0
    %72 = vsyncpa [#allocation27], 0
    %73 = vsyncpa [#allocation4], 0
    %s74 = scalar_lea.sflag [#allocation4], 1
    %75 = vsyncpa %s74, 0
    loop: start=0, step=1, limit=4
    $region2: #{tpu_custom_call.1} parent=1 // loop_pre_header
      _
    $region3: #{tpu_custom_call.1} parent=1 // loop_header
      %s77 = sphi 0, %s81
      %p78 = scmp.ge.s32.totalorder %s77, 4
      %s87 = sphi 0, %s89
      %s90 = sphi 0, %s87
      %s91 = sphi 0, %s90
      %s107 = sphi 0, %s91
      %s113 = sphi 0, %s115
      %s116 = sphi 0, %s113
      %s117 = sphi 0, %s116
      %s133 = sphi 0, %s117
      %s137 = sphi 0, %s137
      %s139 = sphi 0, %s137
      %s140 = sphi 0, %s139
      %s154 = sphi 0, %s140
      %s158 = sphi 0, %s158
      %s160 = sphi 0, %s158
      %s161 = sphi 0, %s160
      %s175 = sphi 0, %s161
      %s179 = sphi 0, %s179
      %s181 = sphi 0, %s179
      %s182 = sphi 0, %s181
      %s196 = sphi 0, %s182
      %s200 = sphi 0, %s200
      %s202 = sphi 0, %s200
      %s203 = sphi 0, %s202
      %s217 = sphi 0, %s203
      %s221 = sphi 0, %s221
      %s223 = sphi 0, %s221
      %s224 = sphi 0, %s223
      %s238 = sphi 0, %s224
      %s242 = sphi 0, %s242
      %s244 = sphi 0, %s242
      %s245 = sphi 0, %s244
      %s259 = sphi 0, %s245
      %s263 = sphi 0, %s263
      %s265 = sphi 0, %s263
      %s266 = sphi 0, %s265
      %s280 = sphi 0, %s266
      %s284 = sphi 0, %s284
      %s286 = sphi 0, %s284
      %s287 = sphi 0, %s286
      %s301 = sphi 0, %s287
      %s305 = sphi 0, %s305
      %s307 = sphi 0, %s305
      %s308 = sphi 0, %s307
      %s322 = sphi 0, %s308
      %s326 = sphi 0, %s326
      %s328 = sphi 0, %s326
      %s329 = sphi 0, %s328
      %s343 = sphi 0, %s329
      %s347 = sphi 0, %s347
      %s349 = sphi 0, %s347
      %s350 = sphi 0, %s349
      %s364 = sphi 0, %s350
      %s368 = sphi 0, %s368
      %s370 = sphi 0, %s368
      %s371 = sphi 0, %s370
      %s385 = sphi 0, %s371
      %s389 = sphi 0, %s389
      %s391 = sphi 0, %s389
      %s392 = sphi 0, %s391
      %s406 = sphi 0, %s392
      %s410 = sphi 0, %s410
      %s412 = sphi 0, %s410
      %s413 = sphi 0, %s412
      %s427 = sphi 0, %s413
      %s431 = sphi 0, %s431
      %s433 = sphi 0, %s431
      %s434 = sphi 0, %s433
      %s448 = sphi 0, %s434
      %s452 = sphi 0, %s452
      %s454 = sphi 0, %s452
      %s455 = sphi 0, %s454
      %s469 = sphi 0, %s455
      %s473 = sphi 0, %s473
      %s475 = sphi 0, %s473
      %s476 = sphi 0, %s475
      %s490 = sphi 0, %s476
      %s494 = sphi 0, %s494
      %s496 = sphi 0, %s494
      %s497 = sphi 0, %s496
      %s511 = sphi 0, %s497
      %s515 = sphi 0, %s515
      %s517 = sphi 0, %s515
      %s518 = sphi 0, %s517
      %s532 = sphi 0, %s518
      %s536 = sphi 0, %s536
      %s538 = sphi 0, %s536
      %s539 = sphi 0, %s538
      %s553 = sphi 0, %s539
      %s557 = sphi 0, %s557
      %s559 = sphi 0, %s557
      %s560 = sphi 0, %s559
      %s574 = sphi 0, %s560
      %s578 = sphi 0, %s578
      %s580 = sphi 0, %s578
      %s581 = sphi 0, %s580
      %s595 = sphi 0, %s581
      %s599 = sphi 0, %s599
      %s601 = sphi 0, %s599
      %s602 = sphi 0, %s601
      %s616 = sphi 0, %s602
      %s620 = sphi 0, %s620
      %s622 = sphi 0, %s620
      %s623 = sphi 0, %s622
      %s637 = sphi 0, %s623
      %s641 = sphi 0, %s641
      %s643 = sphi 0, %s641
      %s644 = sphi 0, %s643
      %s658 = sphi 0, %s644
      %s662 = sphi 0, %s662
      %s664 = sphi 0, %s662
      %s665 = sphi 0, %s664
      %s679 = sphi 0, %s665
      %s683 = sphi 0, %s683
      %s685 = sphi 0, %s683
      %s686 = sphi 0, %s685
      %s700 = sphi 0, %s686
      %s706 = sphi 0, %s708
      %s709 = sphi 0, %s706
      %s710 = sphi 0, %s709
      %s726 = sphi 0, %s710
    $region4: #{tpu_custom_call.1} parent=1 // loop_header_branch
      %80 = sbr.rel (%p78) target = $region8
    $region5: #{tpu_custom_call.1} parent=1 // loop_body
      %s82 = ssub.s32 %s77, 1
      %s83 = ssub.s32 %s77, 2
      %s84 = sadd.s32 %s77, 1
      %s85 = ssub.s32 %s77, %s84
      %p86 = scmp.eq.s32.totalorder %s85, 0
      %s88 = sadd.s32 %s87, 1
      %s89 = scalar_select %p86, %s87, %s88
      %p92 = pneg %p86
      %p93 = scmp.eq.s32.totalorder %s77, 1
      %p94 = por %p92, %p93
      %p95 = scmp.ne.s32.totalorder %s87, %s90
      %p96 = scmp.eq.s32.totalorder %s77, 0
      %p97 = por %p95, %p96
      %p98 = scmp.ne.s32.totalorder %s87, %s90
      %p99 = scmp.eq.s32.totalorder %s82, 1
      %p100 = por %p98, %p99
      %p101 = scmp.ne.s32.totalorder %s90, %s91
      %p102 = scmp.eq.s32.totalorder %s82, 0
      %p103 = por %p101, %p102
      %p104 = scmp.ne.s32.totalorder %s90, %s91
      %p105 = scmp.eq.s32.totalorder %s83, 1
      %p106 = por %p104, %p105
      %p108 = scmp.ne.s32.totalorder %s91, %s107
      %p109 = scmp.eq.s32.totalorder %s83, 0
      %p110 = por %p108, %p109
      %s111 = ssub.s32 %s77, %s84
      %p112 = scmp.eq.s32.totalorder %s111, 0
      %s114 = sadd.s32 %s113, 1
      %s115 = scalar_select %p112, %s113, %s114
      %p118 = pneg %p112
      %p119 = scmp.eq.s32.totalorder %s77, 1
      %p120 = por %p118, %p119
      %p121 = scmp.ne.s32.totalorder %s113, %s116
      %p122 = scmp.eq.s32.totalorder %s77, 0
      %p123 = por %p121, %p122
      %p124 = scmp.ne.s32.totalorder %s113, %s116
      %p125 = scmp.eq.s32.totalorder %s82, 1
      %p126 = por %p124, %p125
      %p127 = scmp.ne.s32.totalorder %s116, %s117
      %p128 = scmp.eq.s32.totalorder %s82, 0
      %p129 = por %p127, %p128
      %p130 = scmp.ne.s32.totalorder %s116, %s117
      %p131 = scmp.eq.s32.totalorder %s83, 1
      %p132 = por %p130, %p131
      %p134 = scmp.ne.s32.totalorder %s117, %s133
      %p135 = scmp.eq.s32.totalorder %s83, 0
      %p136 = por %p134, %p135
      %s138 = sadd.s32 %s137, 1
      %p141 = scmp.eq.s32.totalorder %s77, 1
      %p142 = scmp.ne.s32.totalorder %s137, %s139
      %p143 = scmp.eq.s32.totalorder %s77, 0
      %p144 = por %p142, %p143
      %p145 = scmp.ne.s32.totalorder %s137, %s139
      %p146 = scmp.eq.s32.totalorder %s82, 1
      %p147 = por %p145, %p146
      %p148 = scmp.ne.s32.totalorder %s139, %s140
      %p149 = scmp.eq.s32.totalorder %s82, 0
      %p150 = por %p148, %p149
      %p151 = scmp.ne.s32.totalorder %s139, %s140
      %p152 = scmp.eq.s32.totalorder %s83, 1
      %p153 = por %p151, %p152
      %p155 = scmp.ne.s32.totalorder %s140, %s154
      %p156 = scmp.eq.s32.totalorder %s83, 0
      %p157 = por %p155, %p156
      %s159 = sadd.s32 %s158, 1
      %p162 = scmp.eq.s32.totalorder %s77, 1
      %p163 = scmp.ne.s32.totalorder %s158, %s160
      %p164 = scmp.eq.s32.totalorder %s77, 0
      %p165 = por %p163, %p164
      %p166 = scmp.ne.s32.totalorder %s158, %s160
      %p167 = scmp.eq.s32.totalorder %s82, 1
      %p168 = por %p166, %p167
      %p169 = scmp.ne.s32.totalorder %s160, %s161
      %p170 = scmp.eq.s32.totalorder %s82, 0
      %p171 = por %p169, %p170
      %p172 = scmp.ne.s32.totalorder %s160, %s161
      %p173 = scmp.eq.s32.totalorder %s83, 1
      %p174 = por %p172, %p173
      %p176 = scmp.ne.s32.totalorder %s161, %s175
      %p177 = scmp.eq.s32.totalorder %s83, 0
      %p178 = por %p176, %p177
      %s180 = sadd.s32 %s179, 1
      %p183 = scmp.eq.s32.totalorder %s77, 1
      %p184 = scmp.ne.s32.totalorder %s179, %s181
      %p185 = scmp.eq.s32.totalorder %s77, 0
      %p186 = por %p184, %p185
      %p187 = scmp.ne.s32.totalorder %s179, %s181
      %p188 = scmp.eq.s32.totalorder %s82, 1
      %p189 = por %p187, %p188
      %p190 = scmp.ne.s32.totalorder %s181, %s182
      %p191 = scmp.eq.s32.totalorder %s82, 0
      %p192 = por %p190, %p191
      %p193 = scmp.ne.s32.totalorder %s181, %s182
      %p194 = scmp.eq.s32.totalorder %s83, 1
      %p195 = por %p193, %p194
      %p197 = scmp.ne.s32.totalorder %s182, %s196
      %p198 = scmp.eq.s32.totalorder %s83, 0
      %p199 = por %p197, %p198
      %s201 = sadd.s32 %s200, 1
      %p204 = scmp.eq.s32.totalorder %s77, 1
      %p205 = scmp.ne.s32.totalorder %s200, %s202
      %p206 = scmp.eq.s32.totalorder %s77, 0
      %p207 = por %p205, %p206
      %p208 = scmp.ne.s32.totalorder %s200, %s202
      %p209 = scmp.eq.s32.totalorder %s82, 1
      %p210 = por %p208, %p209
      %p211 = scmp.ne.s32.totalorder %s202, %s203
      %p212 = scmp.eq.s32.totalorder %s82, 0
      %p213 = por %p211, %p212
      %p214 = scmp.ne.s32.totalorder %s202, %s203
      %p215 = scmp.eq.s32.totalorder %s83, 1
      %p216 = por %p214, %p215
      %p218 = scmp.ne.s32.totalorder %s203, %s217
      %p219 = scmp.eq.s32.totalorder %s83, 0
      %p220 = por %p218, %p219
      %s222 = sadd.s32 %s221, 1
      %p225 = scmp.eq.s32.totalorder %s77, 1
      %p226 = scmp.ne.s32.totalorder %s221, %s223
      %p227 = scmp.eq.s32.totalorder %s77, 0
      %p228 = por %p226, %p227
      %p229 = scmp.ne.s32.totalorder %s221, %s223
      %p230 = scmp.eq.s32.totalorder %s82, 1
      %p231 = por %p229, %p230
      %p232 = scmp.ne.s32.totalorder %s223, %s224
      %p233 = scmp.eq.s32.totalorder %s82, 0
      %p234 = por %p232, %p233
      %p235 = scmp.ne.s32.totalorder %s223, %s224
      %p236 = scmp.eq.s32.totalorder %s83, 1
      %p237 = por %p235, %p236
      %p239 = scmp.ne.s32.totalorder %s224, %s238
      %p240 = scmp.eq.s32.totalorder %s83, 0
      %p241 = por %p239, %p240
      %s243 = sadd.s32 %s242, 1
      %p246 = scmp.eq.s32.totalorder %s77, 1
      %p247 = scmp.ne.s32.totalorder %s242, %s244
      %p248 = scmp.eq.s32.totalorder %s77, 0
      %p249 = por %p247, %p248
      %p250 = scmp.ne.s32.totalorder %s242, %s244
      %p251 = scmp.eq.s32.totalorder %s82, 1
      %p252 = por %p250, %p251
      %p253 = scmp.ne.s32.totalorder %s244, %s245
      %p254 = scmp.eq.s32.totalorder %s82, 0
      %p255 = por %p253, %p254
      %p256 = scmp.ne.s32.totalorder %s244, %s245
      %p257 = scmp.eq.s32.totalorder %s83, 1
      %p258 = por %p256, %p257
      %p260 = scmp.ne.s32.totalorder %s245, %s259
      %p261 = scmp.eq.s32.totalorder %s83, 0
      %p262 = por %p260, %p261
      %s264 = sadd.s32 %s263, 1
      %p267 = scmp.eq.s32.totalorder %s77, 1
      %p268 = scmp.ne.s32.totalorder %s263, %s265
      %p269 = scmp.eq.s32.totalorder %s77, 0
      %p270 = por %p268, %p269
      %p271 = scmp.ne.s32.totalorder %s263, %s265
      %p272 = scmp.eq.s32.totalorder %s82, 1
      %p273 = por %p271, %p272
      %p274 = scmp.ne.s32.totalorder %s265, %s266
      %p275 = scmp.eq.s32.totalorder %s82, 0
      %p276 = por %p274, %p275
      %p277 = scmp.ne.s32.totalorder %s265, %s266
      %p278 = scmp.eq.s32.totalorder %s83, 1
      %p279 = por %p277, %p278
      %p281 = scmp.ne.s32.totalorder %s266, %s280
      %p282 = scmp.eq.s32.totalorder %s83, 0
      %p283 = por %p281, %p282
      %s285 = sadd.s32 %s284, 1
      %p288 = scmp.eq.s32.totalorder %s77, 1
      %p289 = scmp.ne.s32.totalorder %s284, %s286
      %p290 = scmp.eq.s32.totalorder %s77, 0
      %p291 = por %p289, %p290
      %p292 = scmp.ne.s32.totalorder %s284, %s286
      %p293 = scmp.eq.s32.totalorder %s82, 1
      %p294 = por %p292, %p293
      %p295 = scmp.ne.s32.totalorder %s286, %s287
      %p296 = scmp.eq.s32.totalorder %s82, 0
      %p297 = por %p295, %p296
      %p298 = scmp.ne.s32.totalorder %s286, %s287
      %p299 = scmp.eq.s32.totalorder %s83, 1
      %p300 = por %p298, %p299
      %p302 = scmp.ne.s32.totalorder %s287, %s301
      %p303 = scmp.eq.s32.totalorder %s83, 0
      %p304 = por %p302, %p303
      %s306 = sadd.s32 %s305, 1
      %p309 = scmp.eq.s32.totalorder %s77, 1
      %p310 = scmp.ne.s32.totalorder %s305, %s307
      %p311 = scmp.eq.s32.totalorder %s77, 0
      %p312 = por %p310, %p311
      %p313 = scmp.ne.s32.totalorder %s305, %s307
      %p314 = scmp.eq.s32.totalorder %s82, 1
      %p315 = por %p313, %p314
      %p316 = scmp.ne.s32.totalorder %s307, %s308
      %p317 = scmp.eq.s32.totalorder %s82, 0
      %p318 = por %p316, %p317
      %p319 = scmp.ne.s32.totalorder %s307, %s308
      %p320 = scmp.eq.s32.totalorder %s83, 1
      %p321 = por %p319, %p320
      %p323 = scmp.ne.s32.totalorder %s308, %s322
      %p324 = scmp.eq.s32.totalorder %s83, 0
      %p325 = por %p323, %p324
      %s327 = sadd.s32 %s326, 1
      %p330 = scmp.eq.s32.totalorder %s77, 1
      %p331 = scmp.ne.s32.totalorder %s326, %s328
      %p332 = scmp.eq.s32.totalorder %s77, 0
      %p333 = por %p331, %p332
      %p334 = scmp.ne.s32.totalorder %s326, %s328
      %p335 = scmp.eq.s32.totalorder %s82, 1
      %p336 = por %p334, %p335
      %p337 = scmp.ne.s32.totalorder %s328, %s329
      %p338 = scmp.eq.s32.totalorder %s82, 0
      %p339 = por %p337, %p338
      %p340 = scmp.ne.s32.totalorder %s328, %s329
      %p341 = scmp.eq.s32.totalorder %s83, 1
      %p342 = por %p340, %p341
      %p344 = scmp.ne.s32.totalorder %s329, %s343
      %p345 = scmp.eq.s32.totalorder %s83, 0
      %p346 = por %p344, %p345
      %s348 = sadd.s32 %s347, 1
      %p351 = scmp.eq.s32.totalorder %s77, 1
      %p352 = scmp.ne.s32.totalorder %s347, %s349
      %p353 = scmp.eq.s32.totalorder %s77, 0
      %p354 = por %p352, %p353
      %p355 = scmp.ne.s32.totalorder %s347, %s349
      %p356 = scmp.eq.s32.totalorder %s82, 1
      %p357 = por %p355, %p356
      %p358 = scmp.ne.s32.totalorder %s349, %s350
      %p359 = scmp.eq.s32.totalorder %s82, 0
      %p360 = por %p358, %p359
      %p361 = scmp.ne.s32.totalorder %s349, %s350
      %p362 = scmp.eq.s32.totalorder %s83, 1
      %p363 = por %p361, %p362
      %p365 = scmp.ne.s32.totalorder %s350, %s364
      %p366 = scmp.eq.s32.totalorder %s83, 0
      %p367 = por %p365, %p366
      %s369 = sadd.s32 %s368, 1
      %p372 = scmp.eq.s32.totalorder %s77, 1
      %p373 = scmp.ne.s32.totalorder %s368, %s370
      %p374 = scmp.eq.s32.totalorder %s77, 0
      %p375 = por %p373, %p374
      %p376 = scmp.ne.s32.totalorder %s368, %s370
      %p377 = scmp.eq.s32.totalorder %s82, 1
      %p378 = por %p376, %p377
      %p379 = scmp.ne.s32.totalorder %s370, %s371
      %p380 = scmp.eq.s32.totalorder %s82, 0
      %p381 = por %p379, %p380
      %p382 = scmp.ne.s32.totalorder %s370, %s371
      %p383 = scmp.eq.s32.totalorder %s83, 1
      %p384 = por %p382, %p383
      %p386 = scmp.ne.s32.totalorder %s371, %s385
      %p387 = scmp.eq.s32.totalorder %s83, 0
      %p388 = por %p386, %p387
      %s390 = sadd.s32 %s389, 1
      %p393 = scmp.eq.s32.totalorder %s77, 1
      %p394 = scmp.ne.s32.totalorder %s389, %s391
      %p395 = scmp.eq.s32.totalorder %s77, 0
      %p396 = por %p394, %p395
      %p397 = scmp.ne.s32.totalorder %s389, %s391
      %p398 = scmp.eq.s32.totalorder %s82, 1
      %p399 = por %p397, %p398
      %p400 = scmp.ne.s32.totalorder %s391, %s392
      %p401 = scmp.eq.s32.totalorder %s82, 0
      %p402 = por %p400, %p401
      %p403 = scmp.ne.s32.totalorder %s391, %s392
      %p404 = scmp.eq.s32.totalorder %s83, 1
      %p405 = por %p403, %p404
      %p407 = scmp.ne.s32.totalorder %s392, %s406
      %p408 = scmp.eq.s32.totalorder %s83, 0
      %p409 = por %p407, %p408
      %s411 = sadd.s32 %s410, 1
      %p414 = scmp.eq.s32.totalorder %s77, 1
      %p415 = scmp.ne.s32.totalorder %s410, %s412
      %p416 = scmp.eq.s32.totalorder %s77, 0
      %p417 = por %p415, %p416
      %p418 = scmp.ne.s32.totalorder %s410, %s412
      %p419 = scmp.eq.s32.totalorder %s82, 1
      %p420 = por %p418, %p419
      %p421 = scmp.ne.s32.totalorder %s412, %s413
      %p422 = scmp.eq.s32.totalorder %s82, 0
      %p423 = por %p421, %p422
      %p424 = scmp.ne.s32.totalorder %s412, %s413
      %p425 = scmp.eq.s32.totalorder %s83, 1
      %p426 = por %p424, %p425
      %p428 = scmp.ne.s32.totalorder %s413, %s427
      %p429 = scmp.eq.s32.totalorder %s83, 0
      %p430 = por %p428, %p429
      %s432 = sadd.s32 %s431, 1
      %p435 = scmp.eq.s32.totalorder %s77, 1
      %p436 = scmp.ne.s32.totalorder %s431, %s433
      %p437 = scmp.eq.s32.totalorder %s77, 0
      %p438 = por %p436, %p437
      %p439 = scmp.ne.s32.totalorder %s431, %s433
      %p440 = scmp.eq.s32.totalorder %s82, 1
      %p441 = por %p439, %p440
      %p442 = scmp.ne.s32.totalorder %s433, %s434
      %p443 = scmp.eq.s32.totalorder %s82, 0
      %p444 = por %p442, %p443
      %p445 = scmp.ne.s32.totalorder %s433, %s434
      %p446 = scmp.eq.s32.totalorder %s83, 1
      %p447 = por %p445, %p446
      %p449 = scmp.ne.s32.totalorder %s434, %s448
      %p450 = scmp.eq.s32.totalorder %s83, 0
      %p451 = por %p449, %p450
      %s453 = sadd.s32 %s452, 1
      %p456 = scmp.eq.s32.totalorder %s77, 1
      %p457 = scmp.ne.s32.totalorder %s452, %s454
      %p458 = scmp.eq.s32.totalorder %s77, 0
      %p459 = por %p457, %p458
      %p460 = scmp.ne.s32.totalorder %s452, %s454
      %p461 = scmp.eq.s32.totalorder %s82, 1
      %p462 = por %p460, %p461
      %p463 = scmp.ne.s32.totalorder %s454, %s455
      %p464 = scmp.eq.s32.totalorder %s82, 0
      %p465 = por %p463, %p464
      %p466 = scmp.ne.s32.totalorder %s454, %s455
      %p467 = scmp.eq.s32.totalorder %s83, 1
      %p468 = por %p466, %p467
      %p470 = scmp.ne.s32.totalorder %s455, %s469
      %p471 = scmp.eq.s32.totalorder %s83, 0
      %p472 = por %p470, %p471
      %s474 = sadd.s32 %s473, 1
      %p477 = scmp.eq.s32.totalorder %s77, 1
      %p478 = scmp.ne.s32.totalorder %s473, %s475
      %p479 = scmp.eq.s32.totalorder %s77, 0
      %p480 = por %p478, %p479
      %p481 = scmp.ne.s32.totalorder %s473, %s475
      %p482 = scmp.eq.s32.totalorder %s82, 1
      %p483 = por %p481, %p482
      %p484 = scmp.ne.s32.totalorder %s475, %s476
      %p485 = scmp.eq.s32.totalorder %s82, 0
      %p486 = por %p484, %p485
      %p487 = scmp.ne.s32.totalorder %s475, %s476
      %p488 = scmp.eq.s32.totalorder %s83, 1
      %p489 = por %p487, %p488
      %p491 = scmp.ne.s32.totalorder %s476, %s490
      %p492 = scmp.eq.s32.totalorder %s83, 0
      %p493 = por %p491, %p492
      %s495 = sadd.s32 %s494, 1
      %p498 = scmp.eq.s32.totalorder %s77, 1
      %p499 = scmp.ne.s32.totalorder %s494, %s496
      %p500 = scmp.eq.s32.totalorder %s77, 0
      %p501 = por %p499, %p500
      %p502 = scmp.ne.s32.totalorder %s494, %s496
      %p503 = scmp.eq.s32.totalorder %s82, 1
      %p504 = por %p502, %p503
      %p505 = scmp.ne.s32.totalorder %s496, %s497
      %p506 = scmp.eq.s32.totalorder %s82, 0
      %p507 = por %p505, %p506
      %p508 = scmp.ne.s32.totalorder %s496, %s497
      %p509 = scmp.eq.s32.totalorder %s83, 1
      %p510 = por %p508, %p509
      %p512 = scmp.ne.s32.totalorder %s497, %s511
      %p513 = scmp.eq.s32.totalorder %s83, 0
      %p514 = por %p512, %p513
      %s516 = sadd.s32 %s515, 1
      %p519 = scmp.eq.s32.totalorder %s77, 1
      %p520 = scmp.ne.s32.totalorder %s515, %s517
      %p521 = scmp.eq.s32.totalorder %s77, 0
      %p522 = por %p520, %p521
      %p523 = scmp.ne.s32.totalorder %s515, %s517
      %p524 = scmp.eq.s32.totalorder %s82, 1
      %p525 = por %p523, %p524
      %p526 = scmp.ne.s32.totalorder %s517, %s518
      %p527 = scmp.eq.s32.totalorder %s82, 0
      %p528 = por %p526, %p527
      %p529 = scmp.ne.s32.totalorder %s517, %s518
      %p530 = scmp.eq.s32.totalorder %s83, 1
      %p531 = por %p529, %p530
      %p533 = scmp.ne.s32.totalorder %s518, %s532
      %p534 = scmp.eq.s32.totalorder %s83, 0
      %p535 = por %p533, %p534
      %s537 = sadd.s32 %s536, 1
      %p540 = scmp.eq.s32.totalorder %s77, 1
      %p541 = scmp.ne.s32.totalorder %s536, %s538
      %p542 = scmp.eq.s32.totalorder %s77, 0
      %p543 = por %p541, %p542
      %p544 = scmp.ne.s32.totalorder %s536, %s538
      %p545 = scmp.eq.s32.totalorder %s82, 1
      %p546 = por %p544, %p545
      %p547 = scmp.ne.s32.totalorder %s538, %s539
      %p548 = scmp.eq.s32.totalorder %s82, 0
      %p549 = por %p547, %p548
      %p550 = scmp.ne.s32.totalorder %s538, %s539
      %p551 = scmp.eq.s32.totalorder %s83, 1
      %p552 = por %p550, %p551
      %p554 = scmp.ne.s32.totalorder %s539, %s553
      %p555 = scmp.eq.s32.totalorder %s83, 0
      %p556 = por %p554, %p555
      %s558 = sadd.s32 %s557, 1
      %p561 = scmp.eq.s32.totalorder %s77, 1
      %p562 = scmp.ne.s32.totalorder %s557, %s559
      %p563 = scmp.eq.s32.totalorder %s77, 0
      %p564 = por %p562, %p563
      %p565 = scmp.ne.s32.totalorder %s557, %s559
      %p566 = scmp.eq.s32.totalorder %s82, 1
      %p567 = por %p565, %p566
      %p568 = scmp.ne.s32.totalorder %s559, %s560
      %p569 = scmp.eq.s32.totalorder %s82, 0
      %p570 = por %p568, %p569
      %p571 = scmp.ne.s32.totalorder %s559, %s560
      %p572 = scmp.eq.s32.totalorder %s83, 1
      %p573 = por %p571, %p572
      %p575 = scmp.ne.s32.totalorder %s560, %s574
      %p576 = scmp.eq.s32.totalorder %s83, 0
      %p577 = por %p575, %p576
      %s579 = sadd.s32 %s578, 1
      %p582 = scmp.eq.s32.totalorder %s77, 1
      %p583 = scmp.ne.s32.totalorder %s578, %s580
      %p584 = scmp.eq.s32.totalorder %s77, 0
      %p585 = por %p583, %p584
      %p586 = scmp.ne.s32.totalorder %s578, %s580
      %p587 = scmp.eq.s32.totalorder %s82, 1
      %p588 = por %p586, %p587
      %p589 = scmp.ne.s32.totalorder %s580, %s581
      %p590 = scmp.eq.s32.totalorder %s82, 0
      %p591 = por %p589, %p590
      %p592 = scmp.ne.s32.totalorder %s580, %s581
      %p593 = scmp.eq.s32.totalorder %s83, 1
      %p594 = por %p592, %p593
      %p596 = scmp.ne.s32.totalorder %s581, %s595
      %p597 = scmp.eq.s32.totalorder %s83, 0
      %p598 = por %p596, %p597
      %s600 = sadd.s32 %s599, 1
      %p603 = scmp.eq.s32.totalorder %s77, 1
      %p604 = scmp.ne.s32.totalorder %s599, %s601
      %p605 = scmp.eq.s32.totalorder %s77, 0
      %p606 = por %p604, %p605
      %p607 = scmp.ne.s32.totalorder %s599, %s601
      %p608 = scmp.eq.s32.totalorder %s82, 1
      %p609 = por %p607, %p608
      %p610 = scmp.ne.s32.totalorder %s601, %s602
      %p611 = scmp.eq.s32.totalorder %s82, 0
      %p612 = por %p610, %p611
      %p613 = scmp.ne.s32.totalorder %s601, %s602
      %p614 = scmp.eq.s32.totalorder %s83, 1
      %p615 = por %p613, %p614
      %p617 = scmp.ne.s32.totalorder %s602, %s616
      %p618 = scmp.eq.s32.totalorder %s83, 0
      %p619 = por %p617, %p618
      %s621 = sadd.s32 %s620, 1
      %p624 = scmp.eq.s32.totalorder %s77, 1
      %p625 = scmp.ne.s32.totalorder %s620, %s622
      %p626 = scmp.eq.s32.totalorder %s77, 0
      %p627 = por %p625, %p626
      %p628 = scmp.ne.s32.totalorder %s620, %s622
      %p629 = scmp.eq.s32.totalorder %s82, 1
      %p630 = por %p628, %p629
      %p631 = scmp.ne.s32.totalorder %s622, %s623
      %p632 = scmp.eq.s32.totalorder %s82, 0
      %p633 = por %p631, %p632
      %p634 = scmp.ne.s32.totalorder %s622, %s623
      %p635 = scmp.eq.s32.totalorder %s83, 1
      %p636 = por %p634, %p635
      %p638 = scmp.ne.s32.totalorder %s623, %s637
      %p639 = scmp.eq.s32.totalorder %s83, 0
      %p640 = por %p638, %p639
      %s642 = sadd.s32 %s641, 1
      %p645 = scmp.eq.s32.totalorder %s77, 1
      %p646 = scmp.ne.s32.totalorder %s641, %s643
      %p647 = scmp.eq.s32.totalorder %s77, 0
      %p648 = por %p646, %p647
      %p649 = scmp.ne.s32.totalorder %s641, %s643
      %p650 = scmp.eq.s32.totalorder %s82, 1
      %p651 = por %p649, %p650
      %p652 = scmp.ne.s32.totalorder %s643, %s644
      %p653 = scmp.eq.s32.totalorder %s82, 0
      %p654 = por %p652, %p653
      %p655 = scmp.ne.s32.totalorder %s643, %s644
      %p656 = scmp.eq.s32.totalorder %s83, 1
      %p657 = por %p655, %p656
      %p659 = scmp.ne.s32.totalorder %s644, %s658
      %p660 = scmp.eq.s32.totalorder %s83, 0
      %p661 = por %p659, %p660
      %s663 = sadd.s32 %s662, 1
      %p666 = scmp.eq.s32.totalorder %s77, 1
      %p667 = scmp.ne.s32.totalorder %s662, %s664
      %p668 = scmp.eq.s32.totalorder %s77, 0
      %p669 = por %p667, %p668
      %p670 = scmp.ne.s32.totalorder %s662, %s664
      %p671 = scmp.eq.s32.totalorder %s82, 1
      %p672 = por %p670, %p671
      %p673 = scmp.ne.s32.totalorder %s664, %s665
      %p674 = scmp.eq.s32.totalorder %s82, 0
      %p675 = por %p673, %p674
      %p676 = scmp.ne.s32.totalorder %s664, %s665
      %p677 = scmp.eq.s32.totalorder %s83, 1
      %p678 = por %p676, %p677
      %p680 = scmp.ne.s32.totalorder %s665, %s679
      %p681 = scmp.eq.s32.totalorder %s83, 0
      %p682 = por %p680, %p681
      %s684 = sadd.s32 %s683, 1
      %p687 = scmp.eq.s32.totalorder %s77, 1
      %p688 = scmp.ne.s32.totalorder %s683, %s685
      %p689 = scmp.eq.s32.totalorder %s77, 0
      %p690 = por %p688, %p689
      %p691 = scmp.ne.s32.totalorder %s683, %s685
      %p692 = scmp.eq.s32.totalorder %s82, 1
      %p693 = por %p691, %p692
      %p694 = scmp.ne.s32.totalorder %s685, %s686
      %p695 = scmp.eq.s32.totalorder %s82, 0
      %p696 = por %p694, %p695
      %p697 = scmp.ne.s32.totalorder %s685, %s686
      %p698 = scmp.eq.s32.totalorder %s83, 1
      %p699 = por %p697, %p698
      %p701 = scmp.ne.s32.totalorder %s686, %s700
      %p702 = scmp.eq.s32.totalorder %s83, 0
      %p703 = por %p701, %p702
      %s704 = ssub.s32 %s77, %s84
      %p705 = scmp.eq.s32.totalorder %s704, 0
      %s707 = sadd.s32 %s706, 1
      %s708 = scalar_select %p705, %s706, %s707
      %p711 = pneg %p705
      %p712 = scmp.eq.s32.totalorder %s77, 1
      %p713 = por %p711, %p712
      %p714 = scmp.ne.s32.totalorder %s706, %s709
      %p715 = scmp.eq.s32.totalorder %s77, 0
      %p716 = por %p714, %p715
      %p717 = scmp.ne.s32.totalorder %s706, %s709
      %p718 = scmp.eq.s32.totalorder %s82, 1
      %p719 = por %p717, %p718
      %p720 = scmp.ne.s32.totalorder %s709, %s710
      %p721 = scmp.eq.s32.totalorder %s82, 0
      %p722 = por %p720, %p721
      %p723 = scmp.ne.s32.totalorder %s709, %s710
      %p724 = scmp.eq.s32.totalorder %s83, 1
      %p725 = por %p723, %p724
      %p727 = scmp.ne.s32.totalorder %s710, %s726
      %p728 = scmp.eq.s32.totalorder %s83, 0
      %p729 = por %p727, %p728
      %p730 = scmp.le.s32.totalorder 1, %s77
      %p731 = scmp.lt.s32.totalorder %s77, 3
      %p732 = pnand %p730, %p731
      %p733 = pneg %p732
      // Predicated region
      $region9: #{tpu_custom_call.1} parent=5 // pred_check
        _
      $region10: #{tpu_custom_call.1} parent=5 // pred_check_branch
        %735 = sbr.rel (%p732) target = $region12
      $region11: #{tpu_custom_call.1} parent=5 // pred_region
        %s736 = ssub.s32 %s77, 1
        // Predicated region
        $region13: #{tpu_custom_call.1} parent=11 // pred_check
          %p737 = pneg %p150
        $region14: #{tpu_custom_call.1} parent=11 // pred_check_branch
          %739 = sbr.rel (%p737) target = $region16
        $region15: #{tpu_custom_call.1} parent=11 // pred_region
          %741 = vsyncadd [#allocation3], 0
          %s743 = sshll.u32 %s5, 4
          %s744 = int_to_ptr.hbm [resolvable:$true] %s743
          %s745 = sshll.u32 [#allocation2], 4
          %s746 = int_to_ptr.vmem [resolvable:$true] %s745
          %748 = dma.hbm_to_vmem [thread:$0]  %s744, 128, %s746, [#allocation3]
        $region16: #{tpu_custom_call.1} parent=11 // pred_fallthru
          _
        // Predicated region
        $region17: #{tpu_custom_call.1} parent=11 // pred_check
          %p749 = pneg %p171
        $region18: #{tpu_custom_call.1} parent=11 // pred_check_branch
          %751 = sbr.rel (%p749) target = $region20
        $region19: #{tpu_custom_call.1} parent=11 // pred_region
          %753 = vsyncadd [#allocation6], 0
          %s754 = sshll.u32 %s7, 4
          %s755 = int_to_ptr.hbm [resolvable:$true] %s754
          %s756 = sshll.u32 [#allocation5], 4
          %s757 = int_to_ptr.vmem [resolvable:$true] %s756
          %762 = dma.hbm_to_vmem [thread:$0]  %s755, 256, %s757, [#allocation6], 64, 64, 4
        $region20: #{tpu_custom_call.1} parent=11 // pred_fallthru
          _
        // Predicated region
        $region21: #{tpu_custom_call.1} parent=11 // pred_check
          %p763 = pneg %p192
        $region22: #{tpu_custom_call.1} parent=11 // pred_check_branch
          %765 = sbr.rel (%p763) target = $region24
        $region23: #{tpu_custom_call.1} parent=11 // pred_region
          %767 = vsyncadd [#allocation6], 0
          %s769 = sshll.u32 %s9, 4
          %s770 = int_to_ptr.hbm [resolvable:$true] %s769
          %s771 = sshll.u32 [#allocation7], 4
          %s772 = int_to_ptr.vmem [resolvable:$true] %s771
          %774 = dma.hbm_to_vmem [thread:$0]  %s770, 16, %s772, [#allocation6]
        $region24: #{tpu_custom_call.1} parent=11 // pred_fallthru
          _
        // Predicated region
        $region25: #{tpu_custom_call.1} parent=11 // pred_check
          %p775 = pneg %p213
        $region26: #{tpu_custom_call.1} parent=11 // pred_check_branch
          %777 = sbr.rel (%p775) target = $region28
        $region27: #{tpu_custom_call.1} parent=11 // pred_region
          %779 = vsyncadd [#allocation9], 0
          %s780 = sshll.u32 %s11, 4
          %s781 = int_to_ptr.hbm [resolvable:$true] %s780
          %s782 = sshll.u32 [#allocation8], 4
          %s783 = int_to_ptr.vmem [resolvable:$true] %s782
          %788 = dma.hbm_to_vmem [thread:$0]  %s781, 256, %s783, [#allocation9], 64, 64, 4
        $region28: #{tpu_custom_call.1} parent=11 // pred_fallthru
          _
        // Predicated region
        $region29: #{tpu_custom_call.1} parent=11 // pred_check
          %p789 = pneg %p234
        $region30: #{tpu_custom_call.1} parent=11 // pred_check_branch
          %791 = sbr.rel (%p789) target = $region32
        $region31: #{tpu_custom_call.1} parent=11 // pred_region
          %793 = vsyncadd [#allocation9], 0
          %s795 = sshll.u32 %s13, 4
          %s796 = int_to_ptr.hbm [resolvable:$true] %s795
          %s797 = sshll.u32 [#allocation10], 4
          %s798 = int_to_ptr.vmem [resolvable:$true] %s797
          %800 = dma.hbm_to_vmem [thread:$0]  %s796, 16, %s798, [#allocation9]
        $region32: #{tpu_custom_call.1} parent=11 // pred_fallthru
          _
        // Predicated region
        $region33: #{tpu_custom_call.1} parent=11 // pred_check
          %p801 = pneg %p255
        $region34: #{tpu_custom_call.1} parent=11 // pred_check_branch
          %803 = sbr.rel (%p801) target = $region36
        $region35: #{tpu_custom_call.1} parent=11 // pred_region
          %805 = vsyncadd [#allocation12], 0
          %s806 = sshll.u32 %s15, 4
          %s807 = int_to_ptr.hbm [resolvable:$true] %s806
          %s808 = sshll.u32 [#allocation11], 4
          %s809 = int_to_ptr.vmem [resolvable:$true] %s808
          %814 = dma.hbm_to_vmem [thread:$0]  %s807, 256, %s809, [#allocation12], 64, 64, 4
        $region36: #{tpu_custom_call.1} parent=11 // pred_fallthru
          _
        // Predicated region
        $region37: #{tpu_custom_call.1} parent=11 // pred_check
          %p815 = pneg %p276
        $region38: #{tpu_custom_call.1} parent=11 // pred_check_branch
          %817 = sbr.rel (%p815) target = $region40
        $region39: #{tpu_custom_call.1} parent=11 // pred_region
          %819 = vsyncadd [#allocation12], 0
          %s821 = sshll.u32 %s17, 4
          %s822 = int_to_ptr.hbm [resolvable:$true] %s821
          %s823 = sshll.u32 [#allocation13], 4
          %s824 = int_to_ptr.vmem [resolvable:$true] %s823
          %826 = dma.hbm_to_vmem [thread:$0]  %s822, 16, %s824, [#allocation12]
        $region40: #{tpu_custom_call.1} parent=11 // pred_fallthru
          _
        // Predicated region
        $region41: #{tpu_custom_call.1} parent=11 // pred_check
          %p827 = pneg %p297
        $region42: #{tpu_custom_call.1} parent=11 // pred_check_branch
          %829 = sbr.rel (%p827) target = $region44
        $region43: #{tpu_custom_call.1} parent=11 // pred_region
          %831 = vsyncadd [#allocation15], 0
          %s832 = sshll.u32 %s19, 4
          %s833 = int_to_ptr.hbm [resolvable:$true] %s832
          %s834 = sshll.u32 [#allocation14], 4
          %s835 = int_to_ptr.vmem [resolvable:$true] %s834
          %840 = dma.hbm_to_vmem [thread:$0]  %s833, 256, %s835, [#allocation15], 64, 64, 4
        $region44: #{tpu_custom_call.1} parent=11 // pred_fallthru
          _
        // Predicated region
        $region45: #{tpu_custom_call.1} parent=11 // pred_check
          %p841 = pneg %p318
        $region46: #{tpu_custom_call.1} parent=11 // pred_check_branch
          %843 = sbr.rel (%p841) target = $region48
        $region47: #{tpu_custom_call.1} parent=11 // pred_region
          %845 = vsyncadd [#allocation15], 0
          %s847 = sshll.u32 %s21, 4
          %s848 = int_to_ptr.hbm [resolvable:$true] %s847
          %s849 = sshll.u32 [#allocation16], 4
          %s850 = int_to_ptr.vmem [resolvable:$true] %s849
          %852 = dma.hbm_to_vmem [thread:$0]  %s848, 16, %s850, [#allocation15]
        $region48: #{tpu_custom_call.1} parent=11 // pred_fallthru
          _
        // Predicated region
        $region49: #{tpu_custom_call.1} parent=11 // pred_check
          %p853 = pneg %p339
        $region50: #{tpu_custom_call.1} parent=11 // pred_check_branch
          %855 = sbr.rel (%p853) target = $region52
        $region51: #{tpu_custom_call.1} parent=11 // pred_region
          %857 = vsyncadd [#allocation18], 0
          %s859 = sshll.u32 %s23, 4
          %s860 = int_to_ptr.hbm [resolvable:$true] %s859
          %s861 = sshll.u32 [#allocation17], 4
          %s862 = int_to_ptr.vmem [resolvable:$true] %s861
          %864 = dma.hbm_to_vmem [thread:$0]  %s860, 16, %s862, [#allocation18]
        $region52: #{tpu_custom_call.1} parent=11 // pred_fallthru
          _
        // Predicated region
        $region53: #{tpu_custom_call.1} parent=11 // pred_check
          %p865 = pneg %p360
        $region54: #{tpu_custom_call.1} parent=11 // pred_check_branch
          %867 = sbr.rel (%p865) target = $region56
        $region55: #{tpu_custom_call.1} parent=11 // pred_region
          %869 = vsyncadd [#allocation18], 0
          %s871 = sshll.u32 %s25, 4
          %s872 = int_to_ptr.hbm [resolvable:$true] %s871
          %s873 = sshll.u32 [#allocation19], 4
          %s874 = int_to_ptr.vmem [resolvable:$true] %s873
          %876 = dma.hbm_to_vmem [thread:$0]  %s872, 16, %s874, [#allocation18]
        $region56: #{tpu_custom_call.1} parent=11 // pred_fallthru
          _
        // Predicated region
        $region57: #{tpu_custom_call.1} parent=11 // pred_check
          %p877 = pneg %p381
        $region58: #{tpu_custom_call.1} parent=11 // pred_check_branch
          %879 = sbr.rel (%p877) target = $region60
        $region59: #{tpu_custom_call.1} parent=11 // pred_region
          %881 = vsyncadd [#allocation21], 0
          %s882 = sshll.u32 %s27, 4
          %s883 = int_to_ptr.hbm [resolvable:$true] %s882
          %s884 = sshll.u32 [#allocation20], 4
          %s885 = int_to_ptr.vmem [resolvable:$true] %s884
          %890 = dma.hbm_to_vmem [thread:$0]  %s883, 256, %s885, [#allocation21], 64, 64, 4
        $region60: #{tpu_custom_call.1} parent=11 // pred_fallthru
          _
        // Predicated region
        $region61: #{tpu_custom_call.1} parent=11 // pred_check
          %p891 = pneg %p402
        $region62: #{tpu_custom_call.1} parent=11 // pred_check_branch
          %893 = sbr.rel (%p891) target = $region64
        $region63: #{tpu_custom_call.1} parent=11 // pred_region
          %895 = vsyncadd [#allocation21], 0
          %s897 = sshll.u32 %s29, 4
          %s898 = int_to_ptr.hbm [resolvable:$true] %s897
          %s899 = sshll.u32 [#allocation22], 4
          %s900 = int_to_ptr.vmem [resolvable:$true] %s899
          %902 = dma.hbm_to_vmem [thread:$0]  %s898, 16, %s900, [#allocation21]
        $region64: #{tpu_custom_call.1} parent=11 // pred_fallthru
          _
        // Predicated region
        $region65: #{tpu_custom_call.1} parent=11 // pred_check
          %p903 = pneg %p423
        $region66: #{tpu_custom_call.1} parent=11 // pred_check_branch
          %905 = sbr.rel (%p903) target = $region68
        $region67: #{tpu_custom_call.1} parent=11 // pred_region
          %907 = vsyncadd [#allocation24], 0
          %s908 = sshll.u32 %s31, 4
          %s909 = int_to_ptr.hbm [resolvable:$true] %s908
          %s910 = sshll.u32 [#allocation23], 4
          %s911 = int_to_ptr.vmem [resolvable:$true] %s910
          %916 = dma.hbm_to_vmem [thread:$0]  %s909, 256, %s911, [#allocation24], 64, 64, 4
        $region68: #{tpu_custom_call.1} parent=11 // pred_fallthru
          _
        // Predicated region
        $region69: #{tpu_custom_call.1} parent=11 // pred_check
          %p917 = pneg %p444
        $region70: #{tpu_custom_call.1} parent=11 // pred_check_branch
          %919 = sbr.rel (%p917) target = $region72
        $region71: #{tpu_custom_call.1} parent=11 // pred_region
          %921 = vsyncadd [#allocation24], 0
          %s923 = sshll.u32 %s33, 4
          %s924 = int_to_ptr.hbm [resolvable:$true] %s923
          %s925 = sshll.u32 [#allocation25], 4
          %s926 = int_to_ptr.vmem [resolvable:$true] %s925
          %928 = dma.hbm_to_vmem [thread:$0]  %s924, 16, %s926, [#allocation24]
        $region72: #{tpu_custom_call.1} parent=11 // pred_fallthru
          _
        // Predicated region
        $region73: #{tpu_custom_call.1} parent=11 // pred_check
          %p929 = pneg %p465
        $region74: #{tpu_custom_call.1} parent=11 // pred_check_branch
          %931 = sbr.rel (%p929) target = $region76
        $region75: #{tpu_custom_call.1} parent=11 // pred_region
          _
        $region76: #{tpu_custom_call.1} parent=11 // pred_fallthru
          _
        // Predicated region
        $region77: #{tpu_custom_call.1} parent=11 // pred_check
          %p932 = pneg %p486
        $region78: #{tpu_custom_call.1} parent=11 // pred_check_branch
          %934 = sbr.rel (%p932) target = $region80
        $region79: #{tpu_custom_call.1} parent=11 // pred_region
          _
        $region80: #{tpu_custom_call.1} parent=11 // pred_fallthru
          _
        // Predicated region
        $region81: #{tpu_custom_call.1} parent=11 // pred_check
          %p935 = pneg %p507
        $region82: #{tpu_custom_call.1} parent=11 // pred_check_branch
          %937 = sbr.rel (%p935) target = $region84
        $region83: #{tpu_custom_call.1} parent=11 // pred_region
          %939 = vsyncadd [#allocation27], 0
          %s940 = sshll.u32 %s39, 4
          %s941 = int_to_ptr.hbm [resolvable:$true] %s940
          %s942 = sshll.u32 [#allocation26], 4
          %s943 = int_to_ptr.vmem [resolvable:$true] %s942
          %948 = dma.hbm_to_vmem [thread:$0]  %s941, 256, %s943, [#allocation27], 64, 64, 4
        $region84: #{tpu_custom_call.1} parent=11 // pred_fallthru
          _
        // Predicated region
        $region85: #{tpu_custom_call.1} parent=11 // pred_check
          %p949 = pneg %p528
        $region86: #{tpu_custom_call.1} parent=11 // pred_check_branch
          %951 = sbr.rel (%p949) target = $region88
        $region87: #{tpu_custom_call.1} parent=11 // pred_region
          _
        $region88: #{tpu_custom_call.1} parent=11 // pred_fallthru
          _
        // Predicated region
        $region89: #{tpu_custom_call.1} parent=11 // pred_check
          %p952 = pneg %p549
        $region90: #{tpu_custom_call.1} parent=11 // pred_check_branch
          %954 = sbr.rel (%p952) target = $region92
        $region91: #{tpu_custom_call.1} parent=11 // pred_region
          _
        $region92: #{tpu_custom_call.1} parent=11 // pred_fallthru
          _
        // Predicated region
        $region93: #{tpu_custom_call.1} parent=11 // pred_check
          %p955 = pneg %p570
        $region94: #{tpu_custom_call.1} parent=11 // pred_check_branch
          %957 = sbr.rel (%p955) target = $region96
        $region95: #{tpu_custom_call.1} parent=11 // pred_region
          _
        $region96: #{tpu_custom_call.1} parent=11 // pred_fallthru
          _
        // Predicated region
        $region97: #{tpu_custom_call.1} parent=11 // pred_check
          %p958 = pneg %p591
        $region98: #{tpu_custom_call.1} parent=11 // pred_check_branch
          %960 = sbr.rel (%p958) target = $region100
        $region99: #{tpu_custom_call.1} parent=11 // pred_region
          %962 = vsyncadd [#allocation27], 0
          %s963 = sshll.u32 %s47, 4
          %s964 = int_to_ptr.hbm [resolvable:$true] %s963
          %s965 = sshll.u32 [#allocation28], 4
          %s966 = int_to_ptr.vmem [resolvable:$true] %s965
          %971 = dma.hbm_to_vmem [thread:$0]  %s964, 256, %s966, [#allocation27], 64, 64, 4
        $region100: #{tpu_custom_call.1} parent=11 // pred_fallthru
          _
        // Predicated region
        $region101: #{tpu_custom_call.1} parent=11 // pred_check
          %p972 = pneg %p612
        $region102: #{tpu_custom_call.1} parent=11 // pred_check_branch
          %974 = sbr.rel (%p972) target = $region104
        $region103: #{tpu_custom_call.1} parent=11 // pred_region
          _
        $region104: #{tpu_custom_call.1} parent=11 // pred_fallthru
          _
        // Predicated region
        $region105: #{tpu_custom_call.1} parent=11 // pred_check
          %p975 = pneg %p633
        $region106: #{tpu_custom_call.1} parent=11 // pred_check_branch
          %977 = sbr.rel (%p975) target = $region108
        $region107: #{tpu_custom_call.1} parent=11 // pred_region
          _
        $region108: #{tpu_custom_call.1} parent=11 // pred_fallthru
          _
        // Predicated region
        $region109: #{tpu_custom_call.1} parent=11 // pred_check
          %p978 = pneg %p654
        $region110: #{tpu_custom_call.1} parent=11 // pred_check_branch
          %980 = sbr.rel (%p978) target = $region112
        $region111: #{tpu_custom_call.1} parent=11 // pred_region
          _
        $region112: #{tpu_custom_call.1} parent=11 // pred_fallthru
          _
        // Predicated region
        $region113: #{tpu_custom_call.1} parent=11 // pred_check
          %p981 = pneg %p675
        $region114: #{tpu_custom_call.1} parent=11 // pred_check_branch
          %983 = sbr.rel (%p981) target = $region116
        $region115: #{tpu_custom_call.1} parent=11 // pred_region
          _
        $region116: #{tpu_custom_call.1} parent=11 // pred_fallthru
          _
        // Predicated region
        $region117: #{tpu_custom_call.1} parent=11 // pred_check
          %p984 = pneg %p696
        $region118: #{tpu_custom_call.1} parent=11 // pred_check_branch
          %986 = sbr.rel (%p984) target = $region120
        $region119: #{tpu_custom_call.1} parent=11 // pred_region
          _
        $region120: #{tpu_custom_call.1} parent=11 // pred_fallthru
          _
      $region12: #{tpu_custom_call.1} parent=5 // pred_fallthru
        _
      %p987 = scmp.lt.s32.totalorder %s77, 2
      // Predicated region
      $region121: #{tpu_custom_call.1} parent=5 // pred_check
        %p988 = pneg %p987
      $region122: #{tpu_custom_call.1} parent=5 // pred_check_branch
        %990 = sbr.rel (%p988) target = $region124
      $region123: #{tpu_custom_call.1} parent=5 // pred_region
        // Predicated region
        $region125: #{tpu_custom_call.1} parent=123 // pred_check
          %p991 = pneg %p97
        $region126: #{tpu_custom_call.1} parent=123 // pred_check_branch
          %993 = sbr.rel (%p991) target = $region128
        $region127: #{tpu_custom_call.1} parent=123 // pred_region
          %p994 = scmp.lt.s32.totalorder %s77, 1
          %s995 = scalar_select %p994, %s77, 1
          %s996 = smul.addr %s995, 8
          %s997 = scalar_lea.vmem %s1, %s996
        $region128: #{tpu_custom_call.1} parent=123 // pred_fallthru
          _
        // Predicated region
        $region129: #{tpu_custom_call.1} parent=123 // pred_check
          %p998 = pneg %p123
        $region130: #{tpu_custom_call.1} parent=123 // pred_check_branch
          %1000 = sbr.rel (%p998) target = $region132
        $region131: #{tpu_custom_call.1} parent=123 // pred_region
          %p1001 = scmp.lt.s32.totalorder %s77, 1
          %s1002 = scalar_select %p1001, %s77, 1
          %s1003 = smul.addr %s1002, 2
          %s1004 = smul.addr %s1003, 8
          %s1005 = scalar_lea.vmem %s3, %s1004
        $region132: #{tpu_custom_call.1} parent=123 // pred_fallthru
          _
      $region124: #{tpu_custom_call.1} parent=5 // pred_fallthru
        _
      %p1006 = scmp.le.s32.totalorder 1, %s77
      %p1007 = scmp.lt.s32.totalorder %s77, 3
      %p1008 = pnand %p1006, %p1007
      %p1009 = pneg %p1008
      // Predicated region
      $region133: #{tpu_custom_call.1} parent=5 // pred_check
        _
      $region134: #{tpu_custom_call.1} parent=5 // pred_check_branch
        %1011 = sbr.rel (%p1008) target = $region136
      $region135: #{tpu_custom_call.1} parent=5 // pred_region
        %s1012 = ssub.s32 %s77, 1
        // Predicated region
        $region137: #{tpu_custom_call.1} parent=135 // pred_check
          %p1013 = pneg %p150
        $region138: #{tpu_custom_call.1} parent=135 // pred_check_branch
          %1015 = sbr.rel (%p1013) target = $region140
        $region139: #{tpu_custom_call.1} parent=135 // pred_region
          %1017 = dma.done [#allocation3], 128
        $region140: #{tpu_custom_call.1} parent=135 // pred_fallthru
          _
        // Predicated region
        $region141: #{tpu_custom_call.1} parent=135 // pred_check
          %p1018 = pneg %p171
        $region142: #{tpu_custom_call.1} parent=135 // pred_check_branch
          %1020 = sbr.rel (%p1018) target = $region144
        $region143: #{tpu_custom_call.1} parent=135 // pred_region
          %1022 = dma.done [#allocation6], 256
        $region144: #{tpu_custom_call.1} parent=135 // pred_fallthru
          _
        // Predicated region
        $region145: #{tpu_custom_call.1} parent=135 // pred_check
          %p1023 = pneg %p192
        $region146: #{tpu_custom_call.1} parent=135 // pred_check_branch
          %1025 = sbr.rel (%p1023) target = $region148
        $region147: #{tpu_custom_call.1} parent=135 // pred_region
          %1027 = dma.done [#allocation6], 16
        $region148: #{tpu_custom_call.1} parent=135 // pred_fallthru
          _
        // Predicated region
        $region149: #{tpu_custom_call.1} parent=135 // pred_check
          %p1028 = pneg %p213
        $region150: #{tpu_custom_call.1} parent=135 // pred_check_branch
          %1030 = sbr.rel (%p1028) target = $region152
        $region151: #{tpu_custom_call.1} parent=135 // pred_region
          %1032 = dma.done [#allocation9], 256
        $region152: #{tpu_custom_call.1} parent=135 // pred_fallthru
          _
        // Predicated region
        $region153: #{tpu_custom_call.1} parent=135 // pred_check
          %p1033 = pneg %p234
        $region154: #{tpu_custom_call.1} parent=135 // pred_check_branch
          %1035 = sbr.rel (%p1033) target = $region156
        $region155: #{tpu_custom_call.1} parent=135 // pred_region
          %1037 = dma.done [#allocation9], 16
        $region156: #{tpu_custom_call.1} parent=135 // pred_fallthru
          _
        // Predicated region
        $region157: #{tpu_custom_call.1} parent=135 // pred_check
          %p1038 = pneg %p255
        $region158: #{tpu_custom_call.1} parent=135 // pred_check_branch
          %1040 = sbr.rel (%p1038) target = $region160
        $region159: #{tpu_custom_call.1} parent=135 // pred_region
          %1042 = dma.done [#allocation12], 256
        $region160: #{tpu_custom_call.1} parent=135 // pred_fallthru
          _
        // Predicated region
        $region161: #{tpu_custom_call.1} parent=135 // pred_check
          %p1043 = pneg %p276
        $region162: #{tpu_custom_call.1} parent=135 // pred_check_branch
          %1045 = sbr.rel (%p1043) target = $region164
        $region163: #{tpu_custom_call.1} parent=135 // pred_region
          %1047 = dma.done [#allocation12], 16
        $region164: #{tpu_custom_call.1} parent=135 // pred_fallthru
          _
        // Predicated region
        $region165: #{tpu_custom_call.1} parent=135 // pred_check
          %p1048 = pneg %p297
        $region166: #{tpu_custom_call.1} parent=135 // pred_check_branch
          %1050 = sbr.rel (%p1048) target = $region168
        $region167: #{tpu_custom_call.1} parent=135 // pred_region
          %1052 = dma.done [#allocation15], 256
        $region168: #{tpu_custom_call.1} parent=135 // pred_fallthru
          _
        // Predicated region
        $region169: #{tpu_custom_call.1} parent=135 // pred_check
          %p1053 = pneg %p318
        $region170: #{tpu_custom_call.1} parent=135 // pred_check_branch
          %1055 = sbr.rel (%p1053) target = $region172
        $region171: #{tpu_custom_call.1} parent=135 // pred_region
          %1057 = dma.done [#allocation15], 16
        $region172: #{tpu_custom_call.1} parent=135 // pred_fallthru
          _
        // Predicated region
        $region173: #{tpu_custom_call.1} parent=135 // pred_check
          %p1058 = pneg %p339
        $region174: #{tpu_custom_call.1} parent=135 // pred_check_branch
          %1060 = sbr.rel (%p1058) target = $region176
        $region175: #{tpu_custom_call.1} parent=135 // pred_region
          %1062 = dma.done [#allocation18], 16
        $region176: #{tpu_custom_call.1} parent=135 // pred_fallthru
          _
        // Predicated region
        $region177: #{tpu_custom_call.1} parent=135 // pred_check
          %p1063 = pneg %p360
        $region178: #{tpu_custom_call.1} parent=135 // pred_check_branch
          %1065 = sbr.rel (%p1063) target = $region180
        $region179: #{tpu_custom_call.1} parent=135 // pred_region
          %1067 = dma.done [#allocation18], 16
        $region180: #{tpu_custom_call.1} parent=135 // pred_fallthru
          _
        // Predicated region
        $region181: #{tpu_custom_call.1} parent=135 // pred_check
          %p1068 = pneg %p381
        $region182: #{tpu_custom_call.1} parent=135 // pred_check_branch
          %1070 = sbr.rel (%p1068) target = $region184
        $region183: #{tpu_custom_call.1} parent=135 // pred_region
          %1072 = dma.done [#allocation21], 256
        $region184: #{tpu_custom_call.1} parent=135 // pred_fallthru
          _
        // Predicated region
        $region185: #{tpu_custom_call.1} parent=135 // pred_check
          %p1073 = pneg %p402
        $region186: #{tpu_custom_call.1} parent=135 // pred_check_branch
          %1075 = sbr.rel (%p1073) target = $region188
        $region187: #{tpu_custom_call.1} parent=135 // pred_region
          %1077 = dma.done [#allocation21], 16
        $region188: #{tpu_custom_call.1} parent=135 // pred_fallthru
          _
        // Predicated region
        $region189: #{tpu_custom_call.1} parent=135 // pred_check
          %p1078 = pneg %p423
        $region190: #{tpu_custom_call.1} parent=135 // pred_check_branch
          %1080 = sbr.rel (%p1078) target = $region192
        $region191: #{tpu_custom_call.1} parent=135 // pred_region
          %1082 = dma.done [#allocation24], 256
        $region192: #{tpu_custom_call.1} parent=135 // pred_fallthru
          _
        // Predicated region
        $region193: #{tpu_custom_call.1} parent=135 // pred_check
          %p1083 = pneg %p444
        $region194: #{tpu_custom_call.1} parent=135 // pred_check_branch
          %1085 = sbr.rel (%p1083) target = $region196
        $region195: #{tpu_custom_call.1} parent=135 // pred_region
          %1087 = dma.done [#allocation24], 16
        $region196: #{tpu_custom_call.1} parent=135 // pred_fallthru
          _
        // Predicated region
        $region197: #{tpu_custom_call.1} parent=135 // pred_check
          %p1088 = pneg %p507
        $region198: #{tpu_custom_call.1} parent=135 // pred_check_branch
          %1090 = sbr.rel (%p1088) target = $region200
        $region199: #{tpu_custom_call.1} parent=135 // pred_region
          %1092 = dma.done [#allocation27], 256
        $region200: #{tpu_custom_call.1} parent=135 // pred_fallthru
          _
        // Predicated region
        $region201: #{tpu_custom_call.1} parent=135 // pred_check
          %p1093 = pneg %p591
        $region202: #{tpu_custom_call.1} parent=135 // pred_check_branch
          %1095 = sbr.rel (%p1093) target = $region204
        $region203: #{tpu_custom_call.1} parent=135 // pred_region
          %1097 = dma.done [#allocation27], 256
        $region204: #{tpu_custom_call.1} parent=135 // pred_fallthru
          _
        %p1098 = scmp.lt.s32.totalorder %s82, 1
        %s1099 = scalar_select %p1098, %s82, 1
        %s1100 = smul.addr %s1099, 8
        %s1101 = scalar_lea.vmem %s1, %s1100
        %p1102 = pneg %p103
        %p1103 = pneg %p100
        %p1104 = scmp.lt.s32.totalorder %s82, 1
        %s1105 = scalar_select %p1104, %s82, 1
        %s1106 = smul.addr %s1105, 2
        %s1107 = smul.addr %s1106, 8
        %s1108 = scalar_lea.vmem %s3, %s1107
        %p1109 = pneg %p129
        %p1110 = pneg %p126
        %p1111 = pneg %p150
        %p1112 = pneg %p147
        %p1113 = pneg %p171
        %p1114 = pneg %p168
        %p1115 = pneg %p192
        %p1116 = pneg %p189
        %p1117 = pneg %p213
        %p1118 = pneg %p210
        %p1119 = pneg %p234
        %p1120 = pneg %p231
        %p1121 = pneg %p255
        %p1122 = pneg %p252
        %p1123 = pneg %p276
        %p1124 = pneg %p273
        %p1125 = pneg %p297
        %p1126 = pneg %p294
        %p1127 = pneg %p318
        %p1128 = pneg %p315
        %p1129 = pneg %p339
        %p1130 = pneg %p336
        %p1131 = pneg %p360
        %p1132 = pneg %p357
        %p1133 = pneg %p381
        %p1134 = pneg %p378
        %p1135 = pneg %p402
        %p1136 = pneg %p399
        %p1137 = pneg %p423
        %p1138 = pneg %p420
        %p1139 = pneg %p444
        %p1140 = pneg %p441
        %p1141 = pneg %p465
        %p1142 = pneg %p462
        %p1143 = pneg %p486
        %p1144 = pneg %p483
        %p1145 = pneg %p507
        %p1146 = pneg %p504
        %p1147 = pneg %p528
        %p1148 = pneg %p525
        %p1149 = pneg %p549
        %p1150 = pneg %p546
        %p1151 = pneg %p570
        %p1152 = pneg %p567
        %p1153 = pneg %p591
        %p1154 = pneg %p588
        %p1155 = pneg %p612
        %p1156 = pneg %p609
        %p1157 = pneg %p633
        %p1158 = pneg %p630
        %p1159 = pneg %p654
        %p1160 = pneg %p651
        %p1161 = pneg %p675
        %p1162 = pneg %p672
        %p1163 = pneg %p696
        %p1164 = pneg %p693
        %p1165 = pneg %p722
        %p1166 = pneg %p719
        %s1167 = sand.u32 %s709, 1
        %s1168 = scalar_lea.sflag [#allocation4], %s1167
        %s1169 = sand.u32 %s709, 1
        %s1170 = smul.addr %s1169, 8
        %s1171 = scalar_lea.vmem [#allocation29], %s1170
        %p1172 = scmp.lt.s32.totalorder %s82, 1
        %s1173 = scalar_select %p1172, %s82, 1
        %s1174 = smul.addr %s1173, 8
        %s1175 = scalar_lea.vmem %s1, %s1174
        %p1176 = scmp.lt.s32.totalorder %s82, 1
        %s1177 = scalar_select %p1176, %s82, 1
        %s1178 = smul.addr %s1177, 2
        %s1179 = smul.addr %s1178, 8
        %s1180 = scalar_lea.vmem %s3, %s1179
        %v1182 = vld [vmem:[%s1175] sm:$0xff]
        %v1183 = vld [vmem:[%s1180] sm:$0xff]
        %v1184 = vld [vmem:[%s1180 + $0x8] sm:$0xff]
        %v1185 = vld [vmem:[#allocation2] sm:$0xff]
        %v1186 = vld [vmem:[#allocation5] sm:$0xf]
        %v1187 = vld [vmem:[#allocation5 + $0x4] sm:$0xf]
        %v1188 = vld [vmem:[#allocation5 + $0x8] sm:$0xf]
        %v1189 = vld [vmem:[#allocation5 + $0xc] sm:$0xf]
        %v1190 = vld [vmem:[#allocation7] sm:$0x1]
        %v1191 = vld [vmem:[#allocation8] sm:$0xf]
        %v1192 = vld [vmem:[#allocation8 + $0x4] sm:$0xf]
        %v1193 = vld [vmem:[#allocation8 + $0x8] sm:$0xf]
        %v1194 = vld [vmem:[#allocation8 + $0xc] sm:$0xf]
        %v1195 = vld [vmem:[#allocation10] sm:$0x1]
        %v1196 = vld [vmem:[#allocation11] sm:$0xf]
        %v1197 = vld [vmem:[#allocation11 + $0x4] sm:$0xf]
        %v1198 = vld [vmem:[#allocation11 + $0x8] sm:$0xf]
        %v1199 = vld [vmem:[#allocation11 + $0xc] sm:$0xf]
        %v1200 = vld [vmem:[#allocation13] sm:$0x1]
        %v1201 = vld [vmem:[#allocation14] sm:$0xf]
        %v1202 = vld [vmem:[#allocation14 + $0x4] sm:$0xf]
        %v1203 = vld [vmem:[#allocation14 + $0x8] sm:$0xf]
        %v1204 = vld [vmem:[#allocation14 + $0xc] sm:$0xf]
        %v1205 = vld [vmem:[#allocation16] sm:$0x1]
        %v1206 = vpack.c.bf16 %v1182, %v1182
        %v1208 = vperm.slane %v1190, 0
        %v1214 = vunpack.c.l.b16 %v1186
        %v1215 = vunpack.c.l.b16 %v1187
        %v1216 = vunpack.c.l.b16 %v1188
        %v1217 = vunpack.c.l.b16 %v1189
        %v1218 = vpack.c.b16 %v1215, %v1214
        %v1219 = vpack.c.b16 %v1217, %v1216
        %vm1222 = vcmask 261120
        %v1224 = vsel %vm1222, %v1206, 0
        %1226 = vmatpush.bf16.msra.mxu0 0
        %1227 = vmatpush.bf16.msra.mxu0 0
        %1228 = vmatpush.bf16.msra.mxu0 0
        %1229 = vmatpush.bf16.msra.mxu0 0
        %1230 = vmatpush.bf16.msra.mxu0 0
        %1231 = vmatpush.bf16.msra.mxu0 0
        %1232 = vmatpush.bf16.msra.mxu0 %v1219
        %1233 = vmatpush.bf16.msra.mxu0 %v1218
        %1234 = vmatmul.bf16.gmra.mxu0 %v1224
        %v1235 = vpop.f32.mrf.mxu0
        %v1236 = vadd.f32 %v1208, %v1235
        %v1237 = vpop.f32.mrf.mxu0
        %1238 = vdwg.mxu0
        %v1240 = vperm.slane %v1195, 0
        %v1246 = vunpack.c.l.b16 %v1191
        %v1247 = vunpack.c.l.b16 %v1192
        %v1248 = vunpack.c.l.b16 %v1193
        %v1249 = vunpack.c.l.b16 %v1194
        %v1250 = vpack.c.b16 %v1247, %v1246
        %v1251 = vpack.c.b16 %v1249, %v1248
        %1254 = vmatpush.bf16.msra.mxu0 0
        %1255 = vmatpush.bf16.msra.mxu0 0
        %1256 = vmatpush.bf16.msra.mxu0 0
        %1257 = vmatpush.bf16.msra.mxu0 0
        %1258 = vmatpush.bf16.msra.mxu0 0
        %1259 = vmatpush.bf16.msra.mxu0 0
        %1260 = vmatpush.bf16.msra.mxu0 %v1251
        %1261 = vmatpush.bf16.msra.mxu0 %v1250
        %1262 = vmatmul.bf16.gmra.mxu0 %v1224
        %v1263 = vpop.f32.mrf.mxu0
        %v1264 = vadd.f32 %v1240, %v1263
        %v1265 = vpop.f32.mrf.mxu0
        %1266 = vdwg.mxu0
        %v1268 = vperm.slane %v1200, 0
        %v1274 = vunpack.c.l.b16 %v1196
        %v1275 = vunpack.c.l.b16 %v1197
        %v1276 = vunpack.c.l.b16 %v1198
        %v1277 = vunpack.c.l.b16 %v1199
        %v1278 = vpack.c.b16 %v1275, %v1274
        %v1279 = vpack.c.b16 %v1277, %v1276
        %1282 = vmatpush.bf16.msra.mxu0 0
        %1283 = vmatpush.bf16.msra.mxu0 0
        %1284 = vmatpush.bf16.msra.mxu0 0
        %1285 = vmatpush.bf16.msra.mxu0 0
        %1286 = vmatpush.bf16.msra.mxu0 0
        %1287 = vmatpush.bf16.msra.mxu0 0
        %1288 = vmatpush.bf16.msra.mxu0 %v1279
        %1289 = vmatpush.bf16.msra.mxu0 %v1278
        %1290 = vmatmul.bf16.gmra.mxu0 %v1224
        %v1291 = vpop.f32.mrf.mxu0
        %v1292 = vadd.f32 %v1268, %v1291
        %v1293 = vpop.f32.mrf.mxu0
        %1294 = vdwg.mxu0
        %vm1295 = vcmask 64512
        %v1297 = vsel %vm1295, %v1236, 0
        %v1300 = vsel %vm1295, %v1264, 0
        %1302 = vmatpush.xpose.msra.mxu0 0.0
        %1303 = vmatpush.xpose.msra.mxu0 0.0
        %1304 = vmatpush.xpose.msra.mxu0 0.0
        %1305 = vmatpush.xpose.msra.mxu0 0.0
        %1306 = vmatpush.xpose.msra.mxu0 0.0
        %1307 = vmatpush.xpose.msra.mxu0 0.0
        %1308 = vmatpush.xpose.msra.mxu0 0.0
        %1309 = vmatpush.xpose.msra.mxu0 0.0
        %1310 = vmatpush.xpose.msra.mxu0 0.0
        %1311 = vmatpush.xpose.msra.mxu0 0.0
        %1312 = vmatpush.xpose.msra.mxu0 0.0
        %1313 = vmatpush.xpose.msra.mxu0 0.0
        %1314 = vmatpush.xpose.msra.mxu0 0.0
        %1315 = vmatpush.xpose.msra.mxu0 0.0
        %1316 = vmatpush.xpose.msra.mxu0 0.0
        %1317 = vmatpush.xpose.msra.mxu0 %v1300
        %1318 = vmatmul.f32.gmra.mxu0 %v1297
        %v1319 = vpop.f32.mrf.mxu0
        %v1320 = vadd.f32 0.0, %v1319
        %1321 = vdwg.mxu0
        %v1322 = vmul.f32 %v1320, 0.35355338
        %v1323 = vadd.f32 %v1322, %v1185
        %v1324 = vsel %vm1295, %v1323, -inf
        %1325 = vmax.xlane.f32.xlu0 %v1324
        %v1326 = vpop.xlane.xlu0 %1325
        %v1327 = vsub.f32 %v1323, %v1326
        %v1328 = vmul.f32 %v1327, 1.442695
        %v1329 = vpow.pop %v1328
        %v1330 = vsel %vm1295, %v1329, 0.0
        %1331 = vadd.xlane.f32.xlu0 %v1330
        %v1332 = vpop.xlane.xlu0 %1331
        %v1333 = vrcp.pop %v1332
        %v1334 = vmul.f32 %v1329, %v1333
        %v1336 = vsel %vm1295, %v1334, 0
        %1338 = vmatpush.msra.mxu0 0.0
        %1339 = vmatpush.msra.mxu0 0.0
        %1340 = vmatpush.msra.mxu0 0.0
        %1341 = vmatpush.msra.mxu0 0.0
        %1342 = vmatpush.msra.mxu0 0.0
        %1343 = vmatpush.msra.mxu0 0.0
        %1344 = vmatpush.msra.mxu0 0.0
        %1345 = vmatpush.msra.mxu0 0.0
        %1346 = vmatpush.msra.mxu0 0.0
        %1347 = vmatpush.msra.mxu0 0.0
        %1348 = vmatpush.msra.mxu0 0.0
        %1349 = vmatpush.msra.mxu0 0.0
        %1350 = vmatpush.msra.mxu0 0.0
        %1351 = vmatpush.msra.mxu0 0.0
        %1352 = vmatpush.msra.mxu0 0.0
        %1353 = vmatpush.msra.mxu0 %v1292
        %1354 = vmatmul.f32.gmra.mxu0 %v1336
        %v1355 = vpop.f32.mrf.mxu0
        %v1356 = vadd.f32 0.0, %v1355
        %1357 = vdwg.mxu0
        %1358 = vrot.lane.b32.xlu0 %v1236, 120
        %v1359 = vpop.permute.xlu0 %1358
        %1360 = vrot.lane.b32.xlu0 %v1264, 120
        %v1361 = vpop.permute.xlu0 %1360
        %v1362 = vsel %vm1295, %v1359, 0
        %v1364 = vsel %vm1295, %v1361, 0
        %1366 = vmatpush.xpose.msra.mxu0 0.0
        %1367 = vmatpush.xpose.msra.mxu0 0.0
        %1368 = vmatpush.xpose.msra.mxu0 0.0
        %1369 = vmatpush.xpose.msra.mxu0 0.0
        %1370 = vmatpush.xpose.msra.mxu0 0.0
        %1371 = vmatpush.xpose.msra.mxu0 0.0
        %1372 = vmatpush.xpose.msra.mxu0 0.0
        %1373 = vmatpush.xpose.msra.mxu0 0.0
        %1374 = vmatpush.xpose.msra.mxu0 0.0
        %1375 = vmatpush.xpose.msra.mxu0 0.0
        %1376 = vmatpush.xpose.msra.mxu0 0.0
        %1377 = vmatpush.xpose.msra.mxu0 0.0
        %1378 = vmatpush.xpose.msra.mxu0 0.0
        %1379 = vmatpush.xpose.msra.mxu0 0.0
        %1380 = vmatpush.xpose.msra.mxu0 0.0
        %1381 = vmatpush.xpose.msra.mxu0 %v1364
        %1382 = vmatmul.f32.gmra.mxu0 %v1362
        %v1383 = vpop.f32.mrf.mxu0
        %v1384 = vadd.f32 0.0, %v1383
        %1385 = vdwg.mxu0
        %v1386 = vmul.f32 %v1384, 0.35355338
        %v1387 = vadd.f32 %v1386, %v1185
        %v1388 = vsel %vm1295, %v1387, -inf
        %1389 = vmax.xlane.f32.xlu0 %v1388
        %v1390 = vpop.xlane.xlu0 %1389
        %v1391 = vsub.f32 %v1387, %v1390
        %v1392 = vmul.f32 %v1391, 1.442695
        %v1393 = vpow.pop %v1392
        %v1394 = vsel %vm1295, %v1393, 0.0
        %1395 = vadd.xlane.f32.xlu0 %v1394
        %v1396 = vpop.xlane.xlu0 %1395
        %v1397 = vrcp.pop %v1396
        %v1398 = vmul.f32 %v1393, %v1397
        %1400 = vrot.lane.b32.xlu0 %v1292, 120
        %v1401 = vpop.permute.xlu0 %1400
        %v1404 = vsel %vm1295, %v1398, 0
        %1406 = vmatpush.msra.mxu0 0.0
        %1407 = vmatpush.msra.mxu0 0.0
        %1408 = vmatpush.msra.mxu0 0.0
        %1409 = vmatpush.msra.mxu0 0.0
        %1410 = vmatpush.msra.mxu0 0.0
        %1411 = vmatpush.msra.mxu0 0.0
        %1412 = vmatpush.msra.mxu0 0.0
        %1413 = vmatpush.msra.mxu0 0.0
        %1414 = vmatpush.msra.mxu0 0.0
        %1415 = vmatpush.msra.mxu0 0.0
        %1416 = vmatpush.msra.mxu0 0.0
        %1417 = vmatpush.msra.mxu0 0.0
        %1418 = vmatpush.msra.mxu0 0.0
        %1419 = vmatpush.msra.mxu0 0.0
        %1420 = vmatpush.msra.mxu0 0.0
        %1421 = vmatpush.msra.mxu0 %v1401
        %1422 = vmatmul.f32.gmra.mxu0 %v1404
        %v1423 = vpop.f32.mrf.mxu0
        %v1424 = vadd.f32 0.0, %v1423
        %1425 = vdwg.mxu0
        %1426 = vrot.lane.b32.xlu0 %v1236, 112
        %v1427 = vpop.permute.xlu0 %1426
        %1428 = vrot.lane.b32.xlu0 %v1264, 112
        %v1429 = vpop.permute.xlu0 %1428
        %v1430 = vsel %vm1295, %v1427, 0
        %v1432 = vsel %vm1295, %v1429, 0
        %1434 = vmatpush.xpose.msra.mxu0 0.0
        %1435 = vmatpush.xpose.msra.mxu0 0.0
        %1436 = vmatpush.xpose.msra.mxu0 0.0
        %1437 = vmatpush.xpose.msra.mxu0 0.0
        %1438 = vmatpush.xpose.msra.mxu0 0.0
        %1439 = vmatpush.xpose.msra.mxu0 0.0
        %1440 = vmatpush.xpose.msra.mxu0 0.0
        %1441 = vmatpush.xpose.msra.mxu0 0.0
        %1442 = vmatpush.xpose.msra.mxu0 0.0
        %1443 = vmatpush.xpose.msra.mxu0 0.0
        %1444 = vmatpush.xpose.msra.mxu0 0.0
        %1445 = vmatpush.xpose.msra.mxu0 0.0
        %1446 = vmatpush.xpose.msra.mxu0 0.0
        %1447 = vmatpush.xpose.msra.mxu0 0.0
        %1448 = vmatpush.xpose.msra.mxu0 0.0
        %1449 = vmatpush.xpose.msra.mxu0 %v1432
        %1450 = vmatmul.f32.gmra.mxu0 %v1430
        %v1451 = vpop.f32.mrf.mxu0
        %v1452 = vadd.f32 0.0, %v1451
        %1453 = vdwg.mxu0
        %v1454 = vmul.f32 %v1452, 0.35355338
        %v1455 = vadd.f32 %v1454, %v1185
        %v1456 = vsel %vm1295, %v1455, -inf
        %1457 = vmax.xlane.f32.xlu0 %v1456
        %v1458 = vpop.xlane.xlu0 %1457
        %v1459 = vsub.f32 %v1455, %v1458
        %v1460 = vmul.f32 %v1459, 1.442695
        %v1461 = vpow.pop %v1460
        %v1462 = vsel %vm1295, %v1461, 0.0
        %1463 = vadd.xlane.f32.xlu0 %v1462
        %v1464 = vpop.xlane.xlu0 %1463
        %v1465 = vrcp.pop %v1464
        %v1466 = vmul.f32 %v1461, %v1465
        %1467 = vrot.lane.b32.xlu0 %v1292, 112
        %v1468 = vpop.permute.xlu0 %1467
        %v1471 = vsel %vm1295, %v1466, 0
        %1473 = vmatpush.msra.mxu0 0.0
        %1474 = vmatpush.msra.mxu0 0.0
        %1475 = vmatpush.msra.mxu0 0.0
        %1476 = vmatpush.msra.mxu0 0.0
        %1477 = vmatpush.msra.mxu0 0.0
        %1478 = vmatpush.msra.mxu0 0.0
        %1479 = vmatpush.msra.mxu0 0.0
        %1480 = vmatpush.msra.mxu0 0.0
        %1481 = vmatpush.msra.mxu0 0.0
        %1482 = vmatpush.msra.mxu0 0.0
        %1483 = vmatpush.msra.mxu0 0.0
        %1484 = vmatpush.msra.mxu0 0.0
        %1485 = vmatpush.msra.mxu0 0.0
        %1486 = vmatpush.msra.mxu0 0.0
        %1487 = vmatpush.msra.mxu0 0.0
        %1488 = vmatpush.msra.mxu0 %v1468
        %1489 = vmatmul.f32.gmra.mxu0 %v1471
        %v1490 = vpop.f32.mrf.mxu0
        %v1491 = vadd.f32 0.0, %v1490
        %1492 = vdwg.mxu0
        %1493 = vrot.lane.b32.xlu0 %v1236, 104
        %v1494 = vpop.permute.xlu0 %1493
        %1495 = vrot.lane.b32.xlu0 %v1264, 104
        %v1496 = vpop.permute.xlu0 %1495
        %v1497 = vsel %vm1295, %v1494, 0
        %v1499 = vsel %vm1295, %v1496, 0
        %1501 = vmatpush.xpose.msra.mxu0 0.0
        %1502 = vmatpush.xpose.msra.mxu0 0.0
        %1503 = vmatpush.xpose.msra.mxu0 0.0
        %1504 = vmatpush.xpose.msra.mxu0 0.0
        %1505 = vmatpush.xpose.msra.mxu0 0.0
        %1506 = vmatpush.xpose.msra.mxu0 0.0
        %1507 = vmatpush.xpose.msra.mxu0 0.0
        %1508 = vmatpush.xpose.msra.mxu0 0.0
        %1509 = vmatpush.xpose.msra.mxu0 0.0
        %1510 = vmatpush.xpose.msra.mxu0 0.0
        %1511 = vmatpush.xpose.msra.mxu0 0.0
        %1512 = vmatpush.xpose.msra.mxu0 0.0
        %1513 = vmatpush.xpose.msra.mxu0 0.0
        %1514 = vmatpush.xpose.msra.mxu0 0.0
        %1515 = vmatpush.xpose.msra.mxu0 0.0
        %1516 = vmatpush.xpose.msra.mxu0 %v1499
        %1517 = vmatmul.f32.gmra.mxu0 %v1497
        %v1518 = vpop.f32.mrf.mxu0
        %v1519 = vadd.f32 0.0, %v1518
        %1520 = vdwg.mxu0
        %v1521 = vmul.f32 %v1519, 0.35355338
        %v1522 = vadd.f32 %v1521, %v1185
        %v1523 = vsel %vm1295, %v1522, -inf
        %1524 = vmax.xlane.f32.xlu0 %v1523
        %v1525 = vpop.xlane.xlu0 %1524
        %v1526 = vsub.f32 %v1522, %v1525
        %v1527 = vmul.f32 %v1526, 1.442695
        %v1528 = vpow.pop %v1527
        %v1529 = vsel %vm1295, %v1528, 0.0
        %1530 = vadd.xlane.f32.xlu0 %v1529
        %v1531 = vpop.xlane.xlu0 %1530
        %v1532 = vrcp.pop %v1531
        %v1533 = vmul.f32 %v1528, %v1532
        %1534 = vrot.lane.b32.xlu0 %v1292, 104
        %v1535 = vpop.permute.xlu0 %1534
        %v1538 = vsel %vm1295, %v1533, 0
        %1540 = vmatpush.msra.mxu0 0.0
        %1541 = vmatpush.msra.mxu0 0.0
        %1542 = vmatpush.msra.mxu0 0.0
        %1543 = vmatpush.msra.mxu0 0.0
        %1544 = vmatpush.msra.mxu0 0.0
        %1545 = vmatpush.msra.mxu0 0.0
        %1546 = vmatpush.msra.mxu0 0.0
        %1547 = vmatpush.msra.mxu0 0.0
        %1548 = vmatpush.msra.mxu0 0.0
        %1549 = vmatpush.msra.mxu0 0.0
        %1550 = vmatpush.msra.mxu0 0.0
        %1551 = vmatpush.msra.mxu0 0.0
        %1552 = vmatpush.msra.mxu0 0.0
        %1553 = vmatpush.msra.mxu0 0.0
        %1554 = vmatpush.msra.mxu0 0.0
        %1555 = vmatpush.msra.mxu0 %v1535
        %1556 = vmatmul.f32.gmra.mxu0 %v1538
        %v1557 = vpop.f32.mrf.mxu0
        %v1558 = vadd.f32 0.0, %v1557
        %1559 = vdwg.mxu0
        %1561 = vrot.lane.b32.xlu0 %v1424, 8
        %v1562 = vpop.permute.xlu0 %1561
        %1565 = vrot.lane.b32.xlu0 %v1491, 16
        %v1566 = vpop.permute.xlu0 %1565
        %1569 = vrot.lane.b32.xlu0 %v1558, 24
        %v1570 = vpop.permute.xlu0 %1569
        %v1572 = vsel %vm1295, %v1356, %v1562
        %vm1573 = vcmask 130048
        %v1574 = vsel %vm1573, %v1572, %v1566
        %vm1575 = vcmask 195584
        %v1576 = vsel %vm1575, %v1574, %v1570
        %v1577 = vpack.c.bf16 %v1576, %v1576
        %v1579 = vperm.slane %v1205, 0
        %v1585 = vunpack.c.l.b16 %v1201
        %v1586 = vunpack.c.l.b16 %v1202
        %v1587 = vunpack.c.l.b16 %v1203
        %v1588 = vunpack.c.l.b16 %v1204
        %v1589 = vpack.c.b16 %v1586, %v1585
        %v1590 = vpack.c.b16 %v1588, %v1587
        %v1594 = vsel %vm1222, %v1577, 0
        %1596 = vmatpush.bf16.msra.mxu0 0
        %1597 = vmatpush.bf16.msra.mxu0 0
        %1598 = vmatpush.bf16.msra.mxu0 0
        %1599 = vmatpush.bf16.msra.mxu0 0
        %1600 = vmatpush.bf16.msra.mxu0 0
        %1601 = vmatpush.bf16.msra.mxu0 0
        %1602 = vmatpush.bf16.msra.mxu0 %v1590
        %1603 = vmatpush.bf16.msra.mxu0 %v1589
        %1604 = vmatmul.bf16.gmra.mxu0 %v1594
        %v1605 = vpop.f32.mrf.mxu0
        %v1606 = vadd.f32 %v1579, %v1605
        %v1607 = vpop.f32.mrf.mxu0
        %1608 = vdwg.mxu0
        %v1609 = vld [vmem:[#allocation17] sm:$0x1]
        %v1610 = vld [vmem:[#allocation19] sm:$0x1]
        %v1611 = vadd.f32 %v1182, %v1606
        %v1612 = vsel %vm1222, %v1611, 0.0
        %1613 = vadd.xlane.f32.xlu0 %v1612
        %v1614 = vpop.xlane.xlu0 %1613
        %v1615 = vrcp.pop 32.0
        %v1616 = vmul.f32 32.0, %v1615
        %v1617 = vsub.f32 1.0, %v1616
        %v1618 = vmul.f32 %v1615, %v1617
        %v1619 = vadd.f32 %v1615, %v1618
        %vm1620 = vweird.f32 %v1615
        %v1621 = vsel %vm1620, %v1615, %v1619
        %v1622 = vmul.f32 %v1614, %v1621
        %v1623 = vsub.f32 %v1611, %v1622
        %v1624 = vmul.f32 %v1623, %v1623
        %v1625 = vsel %vm1222, %v1624, 0.0
        %1626 = vadd.xlane.f32.xlu0 %v1625
        %v1627 = vpop.xlane.xlu0 %1626
        %v1628 = vmul.f32 %v1627, %v1621
        %v1629 = vadd.f32 %v1628, 1e-05
        %v1630 = vrsqrt.pop %v1629
        %v1631 = vmul.f32 %v1630, %v1629
        %v1632 = vmul.f32 %v1631, %v1630
        %v1633 = vmul.f32 0.5, %v1632
        %v1634 = vsub.f32 1.5, %v1633
        %v1635 = vmul.f32 %v1630, %v1634
        %vm1636 = vweird.f32 %v1629
        %vm1637 = vweird.f32 %v1630
        %vm1638 = vmor %vm1636, %vm1637
        %v1639 = vsel %vm1638, %v1630, %v1635
        %v1640 = vmul.f32 %v1623, %v1639
        %v1642 = vperm.slane %v1609, 0
        %v1644 = vmul.f32 %v1640, %v1642
        %v1646 = vperm.slane %v1610, 0
        %v1648 = vadd.f32 %v1644, %v1646
        %v1649 = vld [vmem:[#allocation20] sm:$0xf]
        %v1650 = vld [vmem:[#allocation20 + $0x4] sm:$0xf]
        %v1651 = vld [vmem:[#allocation20 + $0x8] sm:$0xf]
        %v1652 = vld [vmem:[#allocation20 + $0xc] sm:$0xf]
        %v1653 = vld [vmem:[#allocation22] sm:$0x1]
        %v1654 = vld [vmem:[#allocation23] sm:$0xf]
        %v1655 = vld [vmem:[#allocation23 + $0x4] sm:$0xf]
        %v1656 = vld [vmem:[#allocation23 + $0x8] sm:$0xf]
        %v1657 = vld [vmem:[#allocation23 + $0xc] sm:$0xf]
        %v1658 = vld [vmem:[#allocation25] sm:$0x1]
        %v1659 = vld [vmem:[%s35] sm:$0xf]
        %v1660 = vld [vmem:[%s35 + $0x4] sm:$0xf]
        %v1661 = vld [vmem:[%s35 + $0x8] sm:$0xf]
        %v1662 = vld [vmem:[%s35 + $0xc] sm:$0xf]
        %v1663 = vld [vmem:[%s37] sm:$0x1]
        %v1664 = vld [vmem:[#allocation26] sm:$0xf]
        %v1665 = vld [vmem:[#allocation26 + $0x4] sm:$0xf]
        %v1666 = vld [vmem:[#allocation26 + $0x8] sm:$0xf]
        %v1667 = vld [vmem:[#allocation26 + $0xc] sm:$0xf]
        %v1668 = vld [vmem:[%s41] sm:$0x1]
        %v1669 = vpack.c.bf16 %v1648, %v1648
        %v1671 = vperm.slane %v1653, 0
        %v1677 = vunpack.c.l.b16 %v1649
        %v1678 = vunpack.c.l.b16 %v1650
        %v1679 = vunpack.c.l.b16 %v1651
        %v1680 = vunpack.c.l.b16 %v1652
        %v1681 = vpack.c.b16 %v1678, %v1677
        %v1682 = vpack.c.b16 %v1680, %v1679
        %v1686 = vsel %vm1222, %v1669, 0
        %1688 = vmatpush.bf16.msra.mxu0 0
        %1689 = vmatpush.bf16.msra.mxu0 0
        %1690 = vmatpush.bf16.msra.mxu0 0
        %1691 = vmatpush.bf16.msra.mxu0 0
        %1692 = vmatpush.bf16.msra.mxu0 0
        %1693 = vmatpush.bf16.msra.mxu0 0
        %1694 = vmatpush.bf16.msra.mxu0 %v1682
        %1695 = vmatpush.bf16.msra.mxu0 %v1681
        %1696 = vmatmul.bf16.gmra.mxu0 %v1686
        %v1697 = vpop.f32.mrf.mxu0
        %v1698 = vadd.f32 %v1671, %v1697
        %v1699 = vpop.f32.mrf.mxu0
        %1700 = vdwg.mxu0
        %v1701 = vpack.c.bf16 %v1184, %v1183
        %v1703 = vperm.slane %v1658, 0
        %v1709 = vunpack.c.l.b16 %v1654
        %v1710 = vunpack.c.l.b16 %v1655
        %v1711 = vunpack.c.l.b16 %v1656
        %v1712 = vunpack.c.l.b16 %v1657
        %v1713 = vpack.c.b16 %v1710, %v1709
        %v1714 = vpack.c.b16 %v1712, %v1711
        %v1718 = vsel %vm1222, %v1701, 0
        %1720 = vmatpush.bf16.msra.mxu0 0
        %1721 = vmatpush.bf16.msra.mxu0 0
        %1722 = vmatpush.bf16.msra.mxu0 0
        %1723 = vmatpush.bf16.msra.mxu0 0
        %1724 = vmatpush.bf16.msra.mxu0 0
        %1725 = vmatpush.bf16.msra.mxu0 0
        %1726 = vmatpush.bf16.msra.mxu0 %v1714
        %1727 = vmatpush.bf16.msra.mxu0 %v1713
        %1728 = vmatmul.bf16.gmra.mxu0 %v1718
        %v1729 = vpop.f32.mrf.mxu0
        %v1730 = vadd.f32 %v1703, %v1729
        %v1731 = vpop.f32.mrf.mxu0
        %v1732 = vadd.f32 %v1703, %v1731
        %1733 = vdwg.mxu0
        %v1735 = vperm.slane %v1663, 0
        %v1741 = vunpack.c.l.b16 %v1659
        %v1742 = vunpack.c.l.b16 %v1660
        %v1743 = vunpack.c.l.b16 %v1661
        %v1744 = vunpack.c.l.b16 %v1662
        %v1745 = vpack.c.b16 %v1742, %v1741
        %v1746 = vpack.c.b16 %v1744, %v1743
        %1749 = vmatpush.bf16.msra.mxu0 0
        %1750 = vmatpush.bf16.msra.mxu0 0
        %1751 = vmatpush.bf16.msra.mxu0 0
        %1752 = vmatpush.bf16.msra.mxu0 0
        %1753 = vmatpush.bf16.msra.mxu0 0
        %1754 = vmatpush.bf16.msra.mxu0 0
        %1755 = vmatpush.bf16.msra.mxu0 %v1746
        %1756 = vmatpush.bf16.msra.mxu0 %v1745
        %1757 = vmatmul.bf16.gmra.mxu0 %v1718
        %v1758 = vpop.f32.mrf.mxu0
        %v1759 = vadd.f32 %v1735, %v1758
        %v1760 = vpop.f32.mrf.mxu0
        %v1761 = vadd.f32 %v1735, %v1760
        %1762 = vdwg.mxu0
        %v1764 = vsel %vm1295, %v1698, 0
        %v1767 = vsel %vm1295, %v1730, 0
        %v1770 = vsel %vm1295, %v1732, 0
        %1772 = vmatpush.xpose.msra.mxu0 0.0
        %1773 = vmatpush.xpose.msra.mxu0 0.0
        %1774 = vmatpush.xpose.msra.mxu0 0.0
        %1775 = vmatpush.xpose.msra.mxu0 0.0
        %1776 = vmatpush.xpose.msra.mxu0 0.0
        %1777 = vmatpush.xpose.msra.mxu0 0.0
        %1778 = vmatpush.xpose.msra.mxu0 0.0
        %1779 = vmatpush.xpose.msra.mxu0 0.0
        %1780 = vmatpush.xpose.msra.mxu0 0.0
        %1781 = vmatpush.xpose.msra.mxu0 0.0
        %1782 = vmatpush.xpose.msra.mxu0 0.0
        %1783 = vmatpush.xpose.msra.mxu0 0.0
        %1784 = vmatpush.xpose.msra.mxu0 0.0
        %1785 = vmatpush.xpose.msra.mxu0 0.0
        %1786 = vmatpush.xpose.msra.mxu0 %v1770
        %1787 = vmatpush.xpose.msra.mxu0 %v1767
        %1788 = vmatmul.f32.gmra.mxu0 %v1764
        %v1789 = vpop.f32.mrf.mxu0
        %v1790 = vadd.f32 0.0, %v1789
        %1791 = vdwg.mxu0
        %v1792 = vmul.f32 %v1790, 0.35355338
        %v1793 = vsel %vm1573, %v1792, -inf
        %1794 = vmax.xlane.f32.xlu0 %v1793
        %v1795 = vpop.xlane.xlu0 %1794
        %v1796 = vsub.f32 %v1792, %v1795
        %v1797 = vmul.f32 %v1796, 1.442695
        %v1798 = vpow.pop %v1797
        %v1799 = vsel %vm1573, %v1798, 0.0
        %1800 = vadd.xlane.f32.xlu0 %v1799
        %v1801 = vpop.xlane.xlu0 %1800
        %v1802 = vrcp.pop %v1801
        %v1803 = vmul.f32 %v1798, %v1802
        %v1805 = vsel %vm1573, %v1803, 0
        %1807 = vmatpush.msra.mxu0 0.0
        %1808 = vmatpush.msra.mxu0 0.0
        %1809 = vmatpush.msra.mxu0 0.0
        %1810 = vmatpush.msra.mxu0 0.0
        %1811 = vmatpush.msra.mxu0 0.0
        %1812 = vmatpush.msra.mxu0 0.0
        %1813 = vmatpush.msra.mxu0 0.0
        %1814 = vmatpush.msra.mxu0 0.0
        %1815 = vmatpush.msra.mxu0 0.0
        %1816 = vmatpush.msra.mxu0 0.0
        %1817 = vmatpush.msra.mxu0 0.0
        %1818 = vmatpush.msra.mxu0 0.0
        %1819 = vmatpush.msra.mxu0 0.0
        %1820 = vmatpush.msra.mxu0 0.0
        %1821 = vmatpush.msra.mxu0 %v1761
        %1822 = vmatpush.msra.mxu0 %v1759
        %1823 = vmatmul.f32.gmra.mxu0 %v1805
        %v1824 = vpop.f32.mrf.mxu0
        %v1825 = vadd.f32 0.0, %v1824
        %1826 = vdwg.mxu0
        %1827 = vrot.lane.b32.xlu0 %v1698, 120
        %v1828 = vpop.permute.xlu0 %1827
        %1829 = vrot.lane.b32.xlu0 %v1730, 120
        %v1830 = vpop.permute.xlu0 %1829
        %1831 = vrot.lane.b32.xlu0 %v1732, 120
        %v1832 = vpop.permute.xlu0 %1831
        %v1833 = vsel %vm1295, %v1828, 0
        %v1835 = vsel %vm1295, %v1830, 0
        %v1837 = vsel %vm1295, %v1832, 0
        %1839 = vmatpush.xpose.msra.mxu0 0.0
        %1840 = vmatpush.xpose.msra.mxu0 0.0
        %1841 = vmatpush.xpose.msra.mxu0 0.0
        %1842 = vmatpush.xpose.msra.mxu0 0.0
        %1843 = vmatpush.xpose.msra.mxu0 0.0
        %1844 = vmatpush.xpose.msra.mxu0 0.0
        %1845 = vmatpush.xpose.msra.mxu0 0.0
        %1846 = vmatpush.xpose.msra.mxu0 0.0
        %1847 = vmatpush.xpose.msra.mxu0 0.0
        %1848 = vmatpush.xpose.msra.mxu0 0.0
        %1849 = vmatpush.xpose.msra.mxu0 0.0
        %1850 = vmatpush.xpose.msra.mxu0 0.0
        %1851 = vmatpush.xpose.msra.mxu0 0.0
        %1852 = vmatpush.xpose.msra.mxu0 0.0
        %1853 = vmatpush.xpose.msra.mxu0 %v1837
        %1854 = vmatpush.xpose.msra.mxu0 %v1835
        %1855 = vmatmul.f32.gmra.mxu0 %v1833
        %v1856 = vpop.f32.mrf.mxu0
        %v1857 = vadd.f32 0.0, %v1856
        %1858 = vdwg.mxu0
        %v1859 = vmul.f32 %v1857, 0.35355338
        %v1860 = vsel %vm1573, %v1859, -inf
        %1861 = vmax.xlane.f32.xlu0 %v1860
        %v1862 = vpop.xlane.xlu0 %1861
        %v1863 = vsub.f32 %v1859, %v1862
        %v1864 = vmul.f32 %v1863, 1.442695
        %v1865 = vpow.pop %v1864
        %v1866 = vsel %vm1573, %v1865, 0.0
        %1867 = vadd.xlane.f32.xlu0 %v1866
        %v1868 = vpop.xlane.xlu0 %1867
        %v1869 = vrcp.pop %v1868
        %v1870 = vmul.f32 %v1865, %v1869
        %1873 = vrot.lane.b32.xlu0 %v1759, 120
        %v1874 = vpop.permute.xlu0 %1873
        %1875 = vrot.lane.b32.xlu0 %v1761, 120
        %v1876 = vpop.permute.xlu0 %1875
        %v1880 = vsel %vm1573, %v1870, 0
        %1882 = vmatpush.msra.mxu0 0.0
        %1883 = vmatpush.msra.mxu0 0.0
        %1884 = vmatpush.msra.mxu0 0.0
        %1885 = vmatpush.msra.mxu0 0.0
        %1886 = vmatpush.msra.mxu0 0.0
        %1887 = vmatpush.msra.mxu0 0.0
        %1888 = vmatpush.msra.mxu0 0.0
        %1889 = vmatpush.msra.mxu0 0.0
        %1890 = vmatpush.msra.mxu0 0.0
        %1891 = vmatpush.msra.mxu0 0.0
        %1892 = vmatpush.msra.mxu0 0.0
        %1893 = vmatpush.msra.mxu0 0.0
        %1894 = vmatpush.msra.mxu0 0.0
        %1895 = vmatpush.msra.mxu0 0.0
        %1896 = vmatpush.msra.mxu0 %v1876
        %1897 = vmatpush.msra.mxu0 %v1874
        %1898 = vmatmul.f32.gmra.mxu0 %v1880
        %v1899 = vpop.f32.mrf.mxu0
        %v1900 = vadd.f32 0.0, %v1899
        %1901 = vdwg.mxu0
        %1902 = vrot.lane.b32.xlu0 %v1698, 112
        %v1903 = vpop.permute.xlu0 %1902
        %1904 = vrot.lane.b32.xlu0 %v1730, 112
        %v1905 = vpop.permute.xlu0 %1904
        %1906 = vrot.lane.b32.xlu0 %v1732, 112
        %v1907 = vpop.permute.xlu0 %1906
        %v1908 = vsel %vm1295, %v1903, 0
        %v1910 = vsel %vm1295, %v1905, 0
        %v1912 = vsel %vm1295, %v1907, 0
        %1914 = vmatpush.xpose.msra.mxu0 0.0
        %1915 = vmatpush.xpose.msra.mxu0 0.0
        %1916 = vmatpush.xpose.msra.mxu0 0.0
        %1917 = vmatpush.xpose.msra.mxu0 0.0
        %1918 = vmatpush.xpose.msra.mxu0 0.0
        %1919 = vmatpush.xpose.msra.mxu0 0.0
        %1920 = vmatpush.xpose.msra.mxu0 0.0
        %1921 = vmatpush.xpose.msra.mxu0 0.0
        %1922 = vmatpush.xpose.msra.mxu0 0.0
        %1923 = vmatpush.xpose.msra.mxu0 0.0
        %1924 = vmatpush.xpose.msra.mxu0 0.0
        %1925 = vmatpush.xpose.msra.mxu0 0.0
        %1926 = vmatpush.xpose.msra.mxu0 0.0
        %1927 = vmatpush.xpose.msra.mxu0 0.0
        %1928 = vmatpush.xpose.msra.mxu0 %v1912
        %1929 = vmatpush.xpose.msra.mxu0 %v1910
        %1930 = vmatmul.f32.gmra.mxu0 %v1908
        %v1931 = vpop.f32.mrf.mxu0
        %v1932 = vadd.f32 0.0, %v1931
        %1933 = vdwg.mxu0
        %v1934 = vmul.f32 %v1932, 0.35355338
        %v1935 = vsel %vm1573, %v1934, -inf
        %1936 = vmax.xlane.f32.xlu0 %v1935
        %v1937 = vpop.xlane.xlu0 %1936
        %v1938 = vsub.f32 %v1934, %v1937
        %v1939 = vmul.f32 %v1938, 1.442695
        %v1940 = vpow.pop %v1939
        %v1941 = vsel %vm1573, %v1940, 0.0
        %1942 = vadd.xlane.f32.xlu0 %v1941
        %v1943 = vpop.xlane.xlu0 %1942
        %v1944 = vrcp.pop %v1943
        %v1945 = vmul.f32 %v1940, %v1944
        %1946 = vrot.lane.b32.xlu0 %v1759, 112
        %v1947 = vpop.permute.xlu0 %1946
        %1948 = vrot.lane.b32.xlu0 %v1761, 112
        %v1949 = vpop.permute.xlu0 %1948
        %v1953 = vsel %vm1573, %v1945, 0
        %1955 = vmatpush.msra.mxu0 0.0
        %1956 = vmatpush.msra.mxu0 0.0
        %1957 = vmatpush.msra.mxu0 0.0
        %1958 = vmatpush.msra.mxu0 0.0
        %1959 = vmatpush.msra.mxu0 0.0
        %1960 = vmatpush.msra.mxu0 0.0
        %1961 = vmatpush.msra.mxu0 0.0
        %1962 = vmatpush.msra.mxu0 0.0
        %1963 = vmatpush.msra.mxu0 0.0
        %1964 = vmatpush.msra.mxu0 0.0
        %1965 = vmatpush.msra.mxu0 0.0
        %1966 = vmatpush.msra.mxu0 0.0
        %1967 = vmatpush.msra.mxu0 0.0
        %1968 = vmatpush.msra.mxu0 0.0
        %1969 = vmatpush.msra.mxu0 %v1949
        %1970 = vmatpush.msra.mxu0 %v1947
        %1971 = vmatmul.f32.gmra.mxu0 %v1953
        %v1972 = vpop.f32.mrf.mxu0
        %v1973 = vadd.f32 0.0, %v1972
        %1974 = vdwg.mxu0
        %1975 = vrot.lane.b32.xlu0 %v1698, 104
        %v1976 = vpop.permute.xlu0 %1975
        %1977 = vrot.lane.b32.xlu0 %v1730, 104
        %v1978 = vpop.permute.xlu0 %1977
        %1979 = vrot.lane.b32.xlu0 %v1732, 104
        %v1980 = vpop.permute.xlu0 %1979
        %v1981 = vsel %vm1295, %v1976, 0
        %v1983 = vsel %vm1295, %v1978, 0
        %v1985 = vsel %vm1295, %v1980, 0
        %1987 = vmatpush.xpose.msra.mxu0 0.0
        %1988 = vmatpush.xpose.msra.mxu0 0.0
        %1989 = vmatpush.xpose.msra.mxu0 0.0
        %1990 = vmatpush.xpose.msra.mxu0 0.0
        %1991 = vmatpush.xpose.msra.mxu0 0.0
        %1992 = vmatpush.xpose.msra.mxu0 0.0
        %1993 = vmatpush.xpose.msra.mxu0 0.0
        %1994 = vmatpush.xpose.msra.mxu0 0.0
        %1995 = vmatpush.xpose.msra.mxu0 0.0
        %1996 = vmatpush.xpose.msra.mxu0 0.0
        %1997 = vmatpush.xpose.msra.mxu0 0.0
        %1998 = vmatpush.xpose.msra.mxu0 0.0
        %1999 = vmatpush.xpose.msra.mxu0 0.0
        %2000 = vmatpush.xpose.msra.mxu0 0.0
        %2001 = vmatpush.xpose.msra.mxu0 %v1985
        %2002 = vmatpush.xpose.msra.mxu0 %v1983
        %2003 = vmatmul.f32.gmra.mxu0 %v1981
        %v2004 = vpop.f32.mrf.mxu0
        %v2005 = vadd.f32 0.0, %v2004
        %2006 = vdwg.mxu0
        %v2007 = vmul.f32 %v2005, 0.35355338
        %v2008 = vsel %vm1573, %v2007, -inf
        %2009 = vmax.xlane.f32.xlu0 %v2008
        %v2010 = vpop.xlane.xlu0 %2009
        %v2011 = vsub.f32 %v2007, %v2010
        %v2012 = vmul.f32 %v2011, 1.442695
        %v2013 = vpow.pop %v2012
        %v2014 = vsel %vm1573, %v2013, 0.0
        %2015 = vadd.xlane.f32.xlu0 %v2014
        %v2016 = vpop.xlane.xlu0 %2015
        %v2017 = vrcp.pop %v2016
        %v2018 = vmul.f32 %v2013, %v2017
        %2019 = vrot.lane.b32.xlu0 %v1759, 104
        %v2020 = vpop.permute.xlu0 %2019
        %2021 = vrot.lane.b32.xlu0 %v1761, 104
        %v2022 = vpop.permute.xlu0 %2021
        %v2026 = vsel %vm1573, %v2018, 0
        %2028 = vmatpush.msra.mxu0 0.0
        %2029 = vmatpush.msra.mxu0 0.0
        %2030 = vmatpush.msra.mxu0 0.0
        %2031 = vmatpush.msra.mxu0 0.0
        %2032 = vmatpush.msra.mxu0 0.0
        %2033 = vmatpush.msra.mxu0 0.0
        %2034 = vmatpush.msra.mxu0 0.0
        %2035 = vmatpush.msra.mxu0 0.0
        %2036 = vmatpush.msra.mxu0 0.0
        %2037 = vmatpush.msra.mxu0 0.0
        %2038 = vmatpush.msra.mxu0 0.0
        %2039 = vmatpush.msra.mxu0 0.0
        %2040 = vmatpush.msra.mxu0 0.0
        %2041 = vmatpush.msra.mxu0 0.0
        %2042 = vmatpush.msra.mxu0 %v2022
        %2043 = vmatpush.msra.mxu0 %v2020
        %2044 = vmatmul.f32.gmra.mxu0 %v2026
        %v2045 = vpop.f32.mrf.mxu0
        %v2046 = vadd.f32 0.0, %v2045
        %2047 = vdwg.mxu0
        %2049 = vrot.lane.b32.xlu0 %v1900, 8
        %v2050 = vpop.permute.xlu0 %2049
        %2053 = vrot.lane.b32.xlu0 %v1973, 16
        %v2054 = vpop.permute.xlu0 %2053
        %2057 = vrot.lane.b32.xlu0 %v2046, 24
        %v2058 = vpop.permute.xlu0 %2057
        %v2060 = vsel %vm1295, %v1825, %v2050
        %v2061 = vsel %vm1573, %v2060, %v2054
        %v2062 = vsel %vm1575, %v2061, %v2058
        %v2063 = vpack.c.bf16 %v2062, %v2062
        %v2065 = vperm.slane %v1668, 0
        %v2071 = vunpack.c.l.b16 %v1664
        %v2072 = vunpack.c.l.b16 %v1665
        %v2073 = vunpack.c.l.b16 %v1666
        %v2074 = vunpack.c.l.b16 %v1667
        %v2075 = vpack.c.b16 %v2072, %v2071
        %v2076 = vpack.c.b16 %v2074, %v2073
        %v2080 = vsel %vm1222, %v2063, 0
        %2082 = vmatpush.bf16.msra.mxu0 0
        %2083 = vmatpush.bf16.msra.mxu0 0
        %2084 = vmatpush.bf16.msra.mxu0 0
        %2085 = vmatpush.bf16.msra.mxu0 0
        %2086 = vmatpush.bf16.msra.mxu0 0
        %2087 = vmatpush.bf16.msra.mxu0 0
        %2088 = vmatpush.bf16.msra.mxu0 %v2076
        %2089 = vmatpush.bf16.msra.mxu0 %v2075
        %2090 = vmatmul.bf16.gmra.mxu0 %v2080
        %v2091 = vpop.f32.mrf.mxu0
        %v2092 = vadd.f32 %v2065, %v2091
        %v2093 = vpop.f32.mrf.mxu0
        %2094 = vdwg.mxu0
        %v2095 = vld [vmem:[%s43] sm:$0x1]
        %v2096 = vld [vmem:[%s45] sm:$0x1]
        %v2097 = vadd.f32 %v1648, %v2092
        %v2098 = vsel %vm1222, %v2097, 0.0
        %2099 = vadd.xlane.f32.xlu0 %v2098
        %v2100 = vpop.xlane.xlu0 %2099
        %v2101 = vmul.f32 %v2100, %v1621
        %v2102 = vsub.f32 %v2097, %v2101
        %v2103 = vmul.f32 %v2102, %v2102
        %v2104 = vsel %vm1222, %v2103, 0.0
        %2105 = vadd.xlane.f32.xlu0 %v2104
        %v2106 = vpop.xlane.xlu0 %2105
        %v2107 = vmul.f32 %v2106, %v1621
        %v2108 = vadd.f32 %v2107, 1e-05
        %v2109 = vrsqrt.pop %v2108
        %v2110 = vmul.f32 %v2109, %v2108
        %v2111 = vmul.f32 %v2110, %v2109
        %v2112 = vmul.f32 0.5, %v2111
        %v2113 = vsub.f32 1.5, %v2112
        %v2114 = vmul.f32 %v2109, %v2113
        %vm2115 = vweird.f32 %v2108
        %vm2116 = vweird.f32 %v2109
        %vm2117 = vmor %vm2115, %vm2116
        %v2118 = vsel %vm2117, %v2109, %v2114
        %v2119 = vmul.f32 %v2102, %v2118
        %v2121 = vperm.slane %v2095, 0
        %v2123 = vmul.f32 %v2119, %v2121
        %v2125 = vperm.slane %v2096, 0
        %v2127 = vadd.f32 %v2123, %v2125
        %v2128 = vpack.c.bf16 %v2127, %v2127
        %v2129 = vld [vmem:[#allocation28] sm:$0xf]
        %v2130 = vld [vmem:[#allocation28 + $0x4] sm:$0xf]
        %v2131 = vld [vmem:[#allocation28 + $0x8] sm:$0xf]
        %v2132 = vld [vmem:[#allocation28 + $0xc] sm:$0xf]
        %v2133 = vld [vmem:[%s49] sm:$0x1]
        %v2135 = vperm.slane %v2133, 0
        %v2141 = vunpack.c.l.b16 %v2129
        %v2142 = vunpack.c.l.b16 %v2130
        %v2143 = vunpack.c.l.b16 %v2131
        %v2144 = vunpack.c.l.b16 %v2132
        %v2145 = vpack.c.b16 %v2142, %v2141
        %v2146 = vpack.c.b16 %v2144, %v2143
        %v2150 = vsel %vm1222, %v2128, 0
        %2152 = vmatpush.bf16.msra.mxu0 0
        %2153 = vmatpush.bf16.msra.mxu0 0
        %2154 = vmatpush.bf16.msra.mxu0 0
        %2155 = vmatpush.bf16.msra.mxu0 0
        %2156 = vmatpush.bf16.msra.mxu0 0
        %2157 = vmatpush.bf16.msra.mxu0 0
        %2158 = vmatpush.bf16.msra.mxu0 %v2146
        %2159 = vmatpush.bf16.msra.mxu0 %v2145
        %2160 = vmatmul.bf16.gmra.mxu0 %v2150
        %v2161 = vpop.f32.mrf.mxu0
        %v2162 = vadd.f32 %v2135, %v2161
        %v2163 = vpop.f32.mrf.mxu0
        %2164 = vdwg.mxu0
        %v2165 = vmax.f32 %v2162, 0.0
        %v2166 = vpack.c.bf16 %v2165, %v2165
        %v2167 = vld [vmem:[%s51] sm:$0xf]
        %v2168 = vld [vmem:[%s51 + $0x4] sm:$0xf]
        %v2169 = vld [vmem:[%s51 + $0x8] sm:$0xf]
        %v2170 = vld [vmem:[%s51 + $0xc] sm:$0xf]
        %v2171 = vld [vmem:[%s51 + $0x10] sm:$0xf]
        %v2172 = vld [vmem:[%s51 + $0x14] sm:$0xf]
        %v2173 = vld [vmem:[%s51 + $0x18] sm:$0xf]
        %v2174 = vld [vmem:[%s51 + $0x1c] sm:$0xf]
        %v2175 = vld [vmem:[%s53] sm:$0x1]
        %v2177 = vperm.slane %v2175, 0
        %v2187 = vunpack.c.l.b16 %v2167
        %v2188 = vunpack.c.l.b16 %v2168
        %v2189 = vunpack.c.l.b16 %v2169
        %v2190 = vunpack.c.l.b16 %v2170
        %v2191 = vunpack.c.l.b16 %v2171
        %v2192 = vunpack.c.l.b16 %v2172
        %v2193 = vunpack.c.l.b16 %v2173
        %v2194 = vunpack.c.l.b16 %v2174
        %v2195 = vpack.c.b16 %v2188, %v2187
        %v2196 = vpack.c.b16 %v2190, %v2189
        %v2197 = vpack.c.b16 %v2192, %v2191
        %v2198 = vpack.c.b16 %v2194, %v2193
        %vm2203 = vcmask 523264
        %v2205 = vsel %vm2203, %v2166, 0
        %2207 = vmatpush.bf16.msra.mxu0 0
        %2208 = vmatpush.bf16.msra.mxu0 0
        %2209 = vmatpush.bf16.msra.mxu0 0
        %2210 = vmatpush.bf16.msra.mxu0 0
        %2211 = vmatpush.bf16.msra.mxu0 %v2198
        %2212 = vmatpush.bf16.msra.mxu0 %v2197
        %2213 = vmatpush.bf16.msra.mxu0 %v2196
        %2214 = vmatpush.bf16.msra.mxu0 %v2195
        %2215 = vmatmul.bf16.gmra.mxu0 %v2205
        %v2216 = vpop.f32.mrf.mxu0
        %v2217 = vadd.f32 %v2177, %v2216
        %v2218 = vpop.f32.mrf.mxu0
        %2219 = vdwg.mxu0
        %v2220 = vld [vmem:[%s55] sm:$0x1]
        %v2221 = vld [vmem:[%s57] sm:$0x1]
        %v2222 = vadd.f32 %v2127, %v2217
        %v2223 = vsel %vm1222, %v2222, 0.0
        %2224 = vadd.xlane.f32.xlu0 %v2223
        %v2225 = vpop.xlane.xlu0 %2224
        %v2226 = vmul.f32 %v2225, %v1621
        %v2227 = vsub.f32 %v2222, %v2226
        %v2228 = vmul.f32 %v2227, %v2227
        %v2229 = vsel %vm1222, %v2228, 0.0
        %2230 = vadd.xlane.f32.xlu0 %v2229
        %v2231 = vpop.xlane.xlu0 %2230
        %v2232 = vmul.f32 %v2231, %v1621
        %v2233 = vadd.f32 %v2232, 1e-05
        %v2234 = vrsqrt.pop %v2233
        %v2235 = vmul.f32 %v2234, %v2233
        %v2236 = vmul.f32 %v2235, %v2234
        %v2237 = vmul.f32 0.5, %v2236
        %v2238 = vsub.f32 1.5, %v2237
        %v2239 = vmul.f32 %v2234, %v2238
        %vm2240 = vweird.f32 %v2233
        %vm2241 = vweird.f32 %v2234
        %vm2242 = vmor %vm2240, %vm2241
        %v2243 = vsel %vm2242, %v2234, %v2239
        %v2244 = vmul.f32 %v2227, %v2243
        %v2246 = vperm.slane %v2220, 0
        %v2248 = vmul.f32 %v2244, %v2246
        %v2250 = vperm.slane %v2221, 0
        %v2252 = vadd.f32 %v2248, %v2250
        %2253 = vst.msk [vmem:[%s1171] sm:$0xff] %vm1222, %v2252
        %s2254 = sand.u32 %s709, 1
        %s2255 = scalar_lea.sflag [#allocation4], %s2254
        %s2256 = sand.u32 %s709, 1
        %s2257 = smul.addr %s2256, 8
        %s2258 = scalar_lea.vmem [#allocation29], %s2257
        // Predicated region
        $region205: #{tpu_custom_call.1} parent=135 // pred_check
          %p2259 = pneg %p719
        $region206: #{tpu_custom_call.1} parent=135 // pred_check_branch
          %2261 = sbr.rel (%p2259) target = $region208
        $region207: #{tpu_custom_call.1} parent=135 // pred_region
          %2263 = vsyncadd %s2255, 0
          %s2264 = smul.addr %s82, 8
          %s2265 = scalar_lea.hbm %s59, %s2264
          %s2267 = sshll.u32 %s2258, 4
          %s2268 = int_to_ptr.vmem [resolvable:$true] %s2267
          %s2269 = sshll.u32 %s2265, 4
          %s2270 = int_to_ptr.hbm [resolvable:$true] %s2269
          %2272 = dma.vmem_to_hbm [thread:$0]  %s2268, 128, %s2270, %s2255
        $region208: #{tpu_custom_call.1} parent=135 // pred_fallthru
          _
      $region136: #{tpu_custom_call.1} parent=5 // pred_fallthru
        _
      %p2273 = scmp.le.s32.totalorder 2, %s77
      // Predicated region
      $region209: #{tpu_custom_call.1} parent=5 // pred_check
        %p2274 = pneg %p2273
      $region210: #{tpu_custom_call.1} parent=5 // pred_check_branch
        %2276 = sbr.rel (%p2274) target = $region212
      $region211: #{tpu_custom_call.1} parent=5 // pred_region
        %s2277 = ssub.s32 %s77, 2
        // Predicated region
        $region213: #{tpu_custom_call.1} parent=211 // pred_check
          %p2278 = pneg %p725
        $region214: #{tpu_custom_call.1} parent=211 // pred_check_branch
          %2280 = sbr.rel (%p2278) target = $region216
        $region215: #{tpu_custom_call.1} parent=211 // pred_region
          %s2281 = sand.u32 %s710, 1
          %s2282 = scalar_lea.sflag [#allocation4], %s2281
          %s2283 = sand.u32 %s710, 1
          %s2284 = smul.addr %s2283, 8
          %s2285 = scalar_lea.vmem [#allocation29], %s2284
          %2287 = dma.done %s2282, 128
        $region216: #{tpu_custom_call.1} parent=211 // pred_fallthru
          _
      $region212: #{tpu_custom_call.1} parent=5 // pred_fallthru
        _
    $region6: #{tpu_custom_call.1} parent=1 // loop_footer
      %s81 = sadd.s32 1, %s77
    $region7: #{tpu_custom_call.1} parent=1 // loop_footer_branch
      %76 = sbr.rel target = $region3
    $region8: #{tpu_custom_call.1} parent=1 // loop_exit
      _
    %2288 = vsyncpa [#allocation3], 1
    %s2289 = scalar_lea.sflag [#allocation3], 1
    %2290 = vsyncpa %s2289, 1
    %2291 = vsyncpa [#allocation6], 1
    %2292 = vsyncpa [#allocation9], 1
    %2293 = vsyncpa [#allocation12], 1
    %2294 = vsyncpa [#allocation15], 1
    %2295 = vsyncpa [#allocation18], 1
    %2296 = vsyncpa [#allocation21], 1
    %2297 = vsyncpa [#allocation24], 1
    %2298 = vsyncpa [#allocation27], 1
    %2299 = vsyncpa [#allocation4], 1
    %s2300 = scalar_lea.sflag [#allocation4], 1
    %2301 = vsyncpa %s2300, 1

</llo_original>
